<compile_context>
chip_gen: v6e
topology: v6e:2x2x1
jax: 0.10.0
libtpu: 0.0.40
codegen_flags: <defaults>
</compile_context>

<pallas_src>
import functools

import jax
import jax.numpy as jnp
from jax.experimental import pallas as pl
from jax.experimental.pallas import tpu as pltpu


# ----------------------------- Fused Pallas kernel -------------------------- #

def _apt_lstm_fused_kernel(x_ref, w1x_ref, w1h_ref, b1_ref,
                           w2x_ref, w2h_ref, b2_ref,
                           wfc_ref, bfc_ref, out_ref, *, T, B, H):
    """Fused 2-layer LSTM + FC on last timestep.

    x_ref:   (T*B, D) bf16  time-major input, flattened (whole sequence in VMEM)
    w1x_ref: (D, 4H)  bf16  layer-1 input->gates weight (transposed, i,f,o,g order)
    w1h_ref: (H, 4H)  bf16  layer-1 hidden->gates weight (transposed, i,f,o,g order)
    b1_ref:  (1, 4H)  f32   layer-1 combined bias (b_ih + b_hh)
    w2x_ref: (H, 4H)  bf16  layer-2 input->gates weight (transposed)
    w2h_ref: (H, 4H)  bf16  layer-2 hidden->gates weight (transposed)
    b2_ref:  (1, 4H)  f32   layer-2 combined bias
    wfc_ref: (H, O)   bf16  FC weight (transposed)
    bfc_ref: (1, O)   f32   FC bias
    out_ref: (B, O)   f32   final output
    """
    f32 = jnp.float32
    bf16 = jnp.bfloat16

    # Load recurrent weights once (bf16, MXU-native on all generations).
    w1h = w1h_ref[...]
    w2x = w2x_ref[...]
    w2h = w2h_ref[...]
    b2 = b2_ref[...]                                              # (1, 4H) f32

    # (1) Hoisted layer-1 input projection + bias: no recurrent dependency, so it
    # runs as one batched matmul off the critical path.  (T*B, 4H) f32.
    xproj = (jnp.dot(x_ref[...], w1x_ref[...], preferred_element_type=f32)
             + b1_ref[...])

    def lstm_gates(gates, c_prev):
        # (4) Gate order was permuted at param-prep time to (i, f, o, g):
        # one sigmoid over a contiguous 3H slab, one tanh over the last H lanes.
        sg = jax.nn.sigmoid(gates[:, :3 * H])
        g_g = jnp.tanh(gates[:, 3 * H:])
        i_g = sg[:, :H]
        f_g = sg[:, H:2 * H]
        o_g = sg[:, 2 * H:3 * H]
        c_new = f_g * c_prev + i_g * g_g
        h_new = o_g * jnp.tanh(c_new)
        return h_new, c_new

    zeros = jnp.zeros((B, H), f32)
    h1, c1, h2, c2 = zeros, zeros, zeros, zeros

    # (6) Static unroll over time (T=8): all slices below are static.
    for t in range(T):
        # (2) Layer-2 recurrent partial: depends only on previous-step h2, so the
        # MXU op can overlap layer-1's sigmoid/tanh work.
        g2_part = jnp.dot(h2.astype(bf16), w2h, preferred_element_type=f32) + b2
        # Layer 1: hoisted input projection + recurrent dot (bias already folded).
        g1 = xproj[t * B:(t + 1) * B, :] + jnp.dot(
            h1.astype(bf16), w1h, preferred_element_type=f32)
        h1, c1 = lstm_gates(g1, c1)
        # TODO(synk): dropout(0.3) on h1 between layers skipped (eval semantics).
        # Layer 2: add the h1-dependent half once h1 is ready.
        g2 = g2_part + jnp.dot(h1.astype(bf16), w2x, preferred_element_type=f32)
        h2, c2 = lstm_gates(g2, c2)

    # Final Linear on last-timestep h2, fused; single (B, O) store.
    out_ref[...] = (jnp.dot(h2.astype(bf16), wfc_ref[...],
                            preferred_element_type=f32)
                    + bfc_ref[...]).astype(out_ref.dtype)


# ------------------------------ Wrappers ------------------------------------ #

def apt_lstm_pallas(x, params):
    """x: (B, T, D) batch_first f32 -> (B, O) f32."""
    B, T, D = x.shape
    H = params["w1h_t"].shape[0]
    O = params["wfc_t"].shape[1]

    # Tiny one-off layout op in the wrapper: (B,T,D) -> time-major, flattened,
    # bf16 matmul operand (kernel accumulates in f32).
    x2d = jnp.transpose(x, (1, 0, 2)).reshape(T * B, D).astype(jnp.bfloat16)

    kernel = functools.partial(_apt_lstm_fused_kernel, T=T, B=B, H=H)
    vmem = lambda: pl.BlockSpec(memory_space=pltpu.MemorySpace.VMEM)
    return pl.pallas_call(
        kernel,
        out_shape=jax.ShapeDtypeStruct((B, O), jnp.float32),
        in_specs=[vmem() for _ in range(9)],
        out_specs=vmem(),
    )(x2d,
      params["w1x_t"], params["w1h_t"], params["b1"],
      params["w2x_t"], params["w2h_t"], params["b2"],
      params["wfc_t"], params["bfc"])


@jax.jit
def apt_lstm_forward(x, params):
    """x: (B, T, input_dim) — PyTorch batch_first convention."""
    return apt_lstm_pallas(x, params)


# --------------------------- Parameter creation ------------------------------ #

def _ifgo_to_ifog(w, axis):
    """Permute the 4H gate axis from PyTorch (i,f,g,o) to kernel (i,f,o,g)."""
    i, f, g, o = jnp.split(w, 4, axis=axis)
    return jnp.concatenate([i, f, o, g], axis=axis)


def init_params(key, input_dim, hidden_dim=128, output_dim=5):
    """PyTorch-style uniform init; returns (kernel_params, raw PyTorch-layout weights)."""
    H = hidden_dim
    bound = float(hidden_dim) ** -0.5
    bf16 = jnp.bfloat16

    key, k1, k2, k3, k4 = jax.random.split(key, 5)
    w_ih1 = jax.random.uniform(k1, (4 * H, input_dim), jnp.float32, -bound, bound)
    w_hh1 = jax.random.uniform(k2, (4 * H, H), jnp.float32, -bound, bound)
    b_ih1 = jax.random.uniform(k3, (4 * H,), jnp.float32, -bound, bound)
    b_hh1 = jax.random.uniform(k4, (4 * H,), jnp.float32, -bound, bound)

    key, k1, k2, k3, k4 = jax.random.split(key, 5)
    w_ih2 = jax.random.uniform(k1, (4 * H, H), jnp.float32, -bound, bound)
    w_hh2 = jax.random.uniform(k2, (4 * H, H), jnp.float32, -bound, bound)
    b_ih2 = jax.random.uniform(k3, (4 * H,), jnp.float32, -bound, bound)
    b_hh2 = jax.random.uniform(k4, (4 * H,), jnp.float32, -bound, bound)

    key, k1, k2 = jax.random.split(key, 3)
    w_fc = jax.random.uniform(k1, (output_dim, H), jnp.float32, -bound, bound)
    b_fc = jax.random.uniform(k2, (output_dim,), jnp.float32, -bound, bound)

    raw = dict(w_ih1=w_ih1, w_hh1=w_hh1, b_ih1=b_ih1, b_hh1=b_hh1,
               w_ih2=w_ih2, w_hh2=w_hh2, b_ih2=b_ih2, b_hh2=b_hh2,
               w_fc=w_fc, b_fc=b_fc)

    kernel_params = {
        # Transposed, gate-permuted (i,f,o,g), bf16 matmul operands.
        "w1x_t": _ifgo_to_ifog(w_ih1.T, axis=1).astype(bf16),     # (D, 4H)
        "w1h_t": _ifgo_to_ifog(w_hh1.T, axis=1).astype(bf16),     # (H, 4H)
        "b1": _ifgo_to_ifog(b_ih1 + b_hh1, axis=0)[None, :],      # (1, 4H) f32
        "w2x_t": _ifgo_to_ifog(w_ih2.T, axis=1).astype(bf16),     # (H, 4H)
        "w2h_t": _ifgo_to_ifog(w_hh2.T, axis=1).astype(bf16),     # (H, 4H)
        "b2": _ifgo_to_ifog(b_ih2 + b_hh2, axis=0)[None, :],      # (1, 4H) f32
        "wfc_t": w_fc.T.astype(bf16),                             # (H, O)
        "bfc": b_fc[None, :],                                     # (1, O) f32
    }
    return kernel_params, raw


# --------------------------- Pure-JAX reference ------------------------------ #

def ref_forward(x, raw):
    """Reference built directly from RAW PyTorch-layout weights (i,f,g,o order),
    with matmul operands cast to bf16 exactly where the kernel does."""
    B, T, _ = x.shape
    H = raw["w_hh1"].shape[1]
    f32, bf16 = jnp.float32, jnp.bfloat16

    def cell(x_t, h, c, w_ih, w_hh, b_ih, b_hh):
        gates = (jnp.dot(x_t.astype(bf16), w_ih.T.astype(bf16),
                         preferred_element_type=f32)
                 + jnp.dot(h.astype(bf16), w_hh.T.astype(bf16),
                           preferred_element_type=f32)
                 + b_ih + b_hh)
        i = jax.nn.sigmoid(gates[:, 0 * H:1 * H])
        f = jax.nn.sigmoid(gates[:, 1 * H:2 * H])
        g = jnp.tanh(gates[:, 2 * H:3 * H])
        o = jax.nn.sigmoid(gates[:, 3 * H:4 * H])
        c = f * c + i * g
        return o * jnp.tanh(c), c

    h1 = c1 = h2 = c2 = jnp.zeros((B, H), f32)
    for t in range(T):
        x_t = x[:, t, :].astype(f32)
        h1, c1 = cell(x_t, h1, c1, raw["w_ih1"], raw["w_hh1"],
                      raw["b_ih1"], raw["b_hh1"])
        # dropout between layers skipped (eval semantics)
        h2, c2 = cell(h1, h2, c2, raw["w_ih2"], raw["w_hh2"],
                      raw["b_ih2"], raw["b_hh2"])
    return (jnp.dot(h2.astype(bf16), raw["w_fc"].T.astype(bf16),
                    preferred_element_type=f32) + raw["b_fc"])


# ---------------------------------- Main ------------------------------------- #

if __name__ == "__main__":
    B, T, INPUT_DIM = 2, 8, 16          # scaler.n_features_in_ -> synthetic 16
    HIDDEN, OUT = 128, 5

    key = jax.random.PRNGKey(0)
    key, kx, kp = jax.random.split(key, 3)
    x = jax.random.normal(kx, (B, T, INPUT_DIM), jnp.float32)
    params, raw = init_params(kp, INPUT_DIM, HIDDEN, OUT)

    out = apt_lstm_forward(x, params)
    out = jax.block_until_ready(out)

    ref = ref_forward(x, raw)
    assert out.shape == (B, OUT), out.shape
    assert jnp.allclose(out, ref, rtol=2e-3, atol=2e-3), (out, ref)

    print("KERNEL_OK")
</pallas_src>

<mosaic_0001>
module attributes {stable_mosaic.version = 11 : i64} {
  func.func @_apt_lstm_fused_kernel(%arg0: memref<16x16xbf16, #tpu.memory_space<vmem>>, %arg1: memref<16x512xbf16, #tpu.memory_space<vmem>>, %arg2: memref<128x512xbf16, #tpu.memory_space<vmem>>, %arg3: memref<1x512xf32, #tpu.memory_space<vmem>>, %arg4: memref<128x512xbf16, #tpu.memory_space<vmem>>, %arg5: memref<128x512xbf16, #tpu.memory_space<vmem>>, %arg6: memref<1x512xf32, #tpu.memory_space<vmem>>, %arg7: memref<128x5xbf16, #tpu.memory_space<vmem>>, %arg8: memref<1x5xf32, #tpu.memory_space<vmem>>, %arg9: memref<2x5xf32, #tpu.memory_space<vmem>>) attributes {dimension_semantics = [], scalar_prefetch = 0 : i64, scratch_operands = 0 : i64, tpu.core_type = #tpu.core_type<tc>} {
    %c0 = arith.constant 0 : index
    %c0_0 = arith.constant 0 : index
    %0 = vector.load %arg2[%c0, %c0_0] : memref<128x512xbf16, #tpu.memory_space<vmem>>, vector<128x512xbf16>
    %c0_1 = arith.constant 0 : index
    %c0_2 = arith.constant 0 : index
    %1 = vector.load %arg4[%c0_1, %c0_2] : memref<128x512xbf16, #tpu.memory_space<vmem>>, vector<128x512xbf16>
    %c0_3 = arith.constant 0 : index
    %c0_4 = arith.constant 0 : index
    %2 = vector.load %arg5[%c0_3, %c0_4] : memref<128x512xbf16, #tpu.memory_space<vmem>>, vector<128x512xbf16>
    %c0_5 = arith.constant 0 : index
    %c0_6 = arith.constant 0 : index
    %3 = vector.load %arg6[%c0_5, %c0_6] : memref<1x512xf32, #tpu.memory_space<vmem>>, vector<1x512xf32>
    %c0_7 = arith.constant 0 : index
    %c0_8 = arith.constant 0 : index
    %4 = vector.load %arg0[%c0_7, %c0_8] : memref<16x16xbf16, #tpu.memory_space<vmem>>, vector<16x16xbf16>
    %c0_9 = arith.constant 0 : index
    %c0_10 = arith.constant 0 : index
    %5 = vector.load %arg1[%c0_9, %c0_10] : memref<16x512xbf16, #tpu.memory_space<vmem>>, vector<16x512xbf16>
    %cst = arith.constant dense<0.000000e+00> : vector<16x512xf32>
    %6 = tpu.matmul %4, %5, %cst {dimension_numbers = #tpu.dot_dimension_numbers<[1], [0], [0], [1], [0, 0, 1, 1], [], []>} : vector<16x16xbf16>, vector<16x512xbf16>, vector<16x512xf32> -> vector<16x512xf32>
    %c0_11 = arith.constant 0 : index
    %c0_12 = arith.constant 0 : index
    %7 = vector.load %arg3[%c0_11, %c0_12] : memref<1x512xf32, #tpu.memory_space<vmem>>, vector<1x512xf32>
    %8 = vector.broadcast %7 : vector<1x512xf32> to vector<16x512xf32>
    %9 = arith.addf %6, %8 : vector<16x512xf32>
    %cst_13 = arith.constant 0.000000e+00 : f32
    %10 = vector.broadcast %cst_13 : f32 to vector<2x128xf32>
    %11 = arith.truncf %10 : vector<2x128xf32> to vector<2x128xbf16>
    %cst_14 = arith.constant dense<0.000000e+00> : vector<2x512xf32>
    %12 = tpu.matmul %11, %2, %cst_14 {dimension_numbers = #tpu.dot_dimension_numbers<[1], [0], [0], [1], [0, 0, 1, 1], [], []>} : vector<2x128xbf16>, vector<128x512xbf16>, vector<2x512xf32> -> vector<2x512xf32>
    %13 = vector.broadcast %3 : vector<1x512xf32> to vector<2x512xf32>
    %14 = arith.addf %12, %13 : vector<2x512xf32>
    %15 = vector.extract_strided_slice %9 {offsets = [0, 0], sizes = [2, 512], strides = [1, 1]} : vector<16x512xf32> to vector<2x512xf32>
    %16 = arith.truncf %10 : vector<2x128xf32> to vector<2x128xbf16>
    %cst_15 = arith.constant dense<0.000000e+00> : vector<2x512xf32>
    %17 = tpu.matmul %16, %0, %cst_15 {dimension_numbers = #tpu.dot_dimension_numbers<[1], [0], [0], [1], [0, 0, 1, 1], [], []>} : vector<2x128xbf16>, vector<128x512xbf16>, vector<2x512xf32> -> vector<2x512xf32>
    %18 = arith.addf %15, %17 : vector<2x512xf32>
    %19 = vector.extract_strided_slice %18 {offsets = [0, 0], sizes = [2, 384], strides = [1, 1]} : vector<2x512xf32> to vector<2x384xf32>
    %20 = arith.negf %19 : vector<2x384xf32>
    %21 = math.exp %20 : vector<2x384xf32>
    %cst_16 = arith.constant 1.000000e+00 : f32
    %22 = vector.broadcast %cst_16 : f32 to vector<2x384xf32>
    %23 = arith.addf %22, %21 : vector<2x384xf32>
    %24 = arith.divf %22, %23 : vector<2x384xf32>
    %25 = vector.extract_strided_slice %18 {offsets = [0, 384], sizes = [2, 128], strides = [1, 1]} : vector<2x512xf32> to vector<2x128xf32>
    %26 = math.tanh %25 : vector<2x128xf32>
    %27 = vector.extract_strided_slice %24 {offsets = [0, 0], sizes = [2, 128], strides = [1, 1]} : vector<2x384xf32> to vector<2x128xf32>
    %28 = vector.extract_strided_slice %24 {offsets = [0, 128], sizes = [2, 128], strides = [1, 1]} : vector<2x384xf32> to vector<2x128xf32>
    %29 = vector.extract_strided_slice %24 {offsets = [0, 256], sizes = [2, 128], strides = [1, 1]} : vector<2x384xf32> to vector<2x128xf32>
    %30 = arith.mulf %28, %10 : vector<2x128xf32>
    %31 = arith.mulf %27, %26 : vector<2x128xf32>
    %32 = arith.addf %30, %31 : vector<2x128xf32>
    %33 = math.tanh %32 : vector<2x128xf32>
    %34 = arith.mulf %29, %33 : vector<2x128xf32>
    %35 = arith.truncf %34 : vector<2x128xf32> to vector<2x128xbf16>
    %cst_17 = arith.constant dense<0.000000e+00> : vector<2x512xf32>
    %36 = tpu.matmul %35, %1, %cst_17 {dimension_numbers = #tpu.dot_dimension_numbers<[1], [0], [0], [1], [0, 0, 1, 1], [], []>} : vector<2x128xbf16>, vector<128x512xbf16>, vector<2x512xf32> -> vector<2x512xf32>
    %37 = arith.addf %14, %36 : vector<2x512xf32>
    %38 = vector.extract_strided_slice %37 {offsets = [0, 0], sizes = [2, 384], strides = [1, 1]} : vector<2x512xf32> to vector<2x384xf32>
    %39 = arith.negf %38 : vector<2x384xf32>
    %40 = math.exp %39 : vector<2x384xf32>
    %cst_18 = arith.constant 1.000000e+00 : f32
    %41 = vector.broadcast %cst_18 : f32 to vector<2x384xf32>
    %42 = arith.addf %41, %40 : vector<2x384xf32>
    %43 = arith.divf %41, %42 : vector<2x384xf32>
    %44 = vector.extract_strided_slice %37 {offsets = [0, 384], sizes = [2, 128], strides = [1, 1]} : vector<2x512xf32> to vector<2x128xf32>
    %45 = math.tanh %44 : vector<2x128xf32>
    %46 = vector.extract_strided_slice %43 {offsets = [0, 0], sizes = [2, 128], strides = [1, 1]} : vector<2x384xf32> to vector<2x128xf32>
    %47 = vector.extract_strided_slice %43 {offsets = [0, 128], sizes = [2, 128], strides = [1, 1]} : vector<2x384xf32> to vector<2x128xf32>
    %48 = vector.extract_strided_slice %43 {offsets = [0, 256], sizes = [2, 128], strides = [1, 1]} : vector<2x384xf32> to vector<2x128xf32>
    %49 = arith.mulf %47, %10 : vector<2x128xf32>
    %50 = arith.mulf %46, %45 : vector<2x128xf32>
    %51 = arith.addf %49, %50 : vector<2x128xf32>
    %52 = math.tanh %51 : vector<2x128xf32>
    %53 = arith.mulf %48, %52 : vector<2x128xf32>
    %54 = arith.truncf %53 : vector<2x128xf32> to vector<2x128xbf16>
    %cst_19 = arith.constant dense<0.000000e+00> : vector<2x512xf32>
    %55 = tpu.matmul %54, %2, %cst_19 {dimension_numbers = #tpu.dot_dimension_numbers<[1], [0], [0], [1], [0, 0, 1, 1], [], []>} : vector<2x128xbf16>, vector<128x512xbf16>, vector<2x512xf32> -> vector<2x512xf32>
    %56 = vector.broadcast %3 : vector<1x512xf32> to vector<2x512xf32>
    %57 = arith.addf %55, %56 : vector<2x512xf32>
    %58 = vector.extract_strided_slice %9 {offsets = [2, 0], sizes = [2, 512], strides = [1, 1]} : vector<16x512xf32> to vector<2x512xf32>
    %59 = arith.truncf %34 : vector<2x128xf32> to vector<2x128xbf16>
    %cst_20 = arith.constant dense<0.000000e+00> : vector<2x512xf32>
    %60 = tpu.matmul %59, %0, %cst_20 {dimension_numbers = #tpu.dot_dimension_numbers<[1], [0], [0], [1], [0, 0, 1, 1], [], []>} : vector<2x128xbf16>, vector<128x512xbf16>, vector<2x512xf32> -> vector<2x512xf32>
    %61 = arith.addf %58, %60 : vector<2x512xf32>
    %62 = vector.extract_strided_slice %61 {offsets = [0, 0], sizes = [2, 384], strides = [1, 1]} : vector<2x512xf32> to vector<2x384xf32>
    %63 = arith.negf %62 : vector<2x384xf32>
    %64 = math.exp %63 : vector<2x384xf32>
    %cst_21 = arith.constant 1.000000e+00 : f32
    %65 = vector.broadcast %cst_21 : f32 to vector<2x384xf32>
    %66 = arith.addf %65, %64 : vector<2x384xf32>
    %67 = arith.divf %65, %66 : vector<2x384xf32>
    %68 = vector.extract_strided_slice %61 {offsets = [0, 384], sizes = [2, 128], strides = [1, 1]} : vector<2x512xf32> to vector<2x128xf32>
    %69 = math.tanh %68 : vector<2x128xf32>
    %70 = vector.extract_strided_slice %67 {offsets = [0, 0], sizes = [2, 128], strides = [1, 1]} : vector<2x384xf32> to vector<2x128xf32>
    %71 = vector.extract_strided_slice %67 {offsets = [0, 128], sizes = [2, 128], strides = [1, 1]} : vector<2x384xf32> to vector<2x128xf32>
    %72 = vector.extract_strided_slice %67 {offsets = [0, 256], sizes = [2, 128], strides = [1, 1]} : vector<2x384xf32> to vector<2x128xf32>
    %73 = arith.mulf %71, %32 : vector<2x128xf32>
    %74 = arith.mulf %70, %69 : vector<2x128xf32>
    %75 = arith.addf %73, %74 : vector<2x128xf32>
    %76 = math.tanh %75 : vector<2x128xf32>
    %77 = arith.mulf %72, %76 : vector<2x128xf32>
    %78 = arith.truncf %77 : vector<2x128xf32> to vector<2x128xbf16>
    %cst_22 = arith.constant dense<0.000000e+00> : vector<2x512xf32>
    %79 = tpu.matmul %78, %1, %cst_22 {dimension_numbers = #tpu.dot_dimension_numbers<[1], [0], [0], [1], [0, 0, 1, 1], [], []>} : vector<2x128xbf16>, vector<128x512xbf16>, vector<2x512xf32> -> vector<2x512xf32>
    %80 = arith.addf %57, %79 : vector<2x512xf32>
    %81 = vector.extract_strided_slice %80 {offsets = [0, 0], sizes = [2, 384], strides = [1, 1]} : vector<2x512xf32> to vector<2x384xf32>
    %82 = arith.negf %81 : vector<2x384xf32>
    %83 = math.exp %82 : vector<2x384xf32>
    %cst_23 = arith.constant 1.000000e+00 : f32
    %84 = vector.broadcast %cst_23 : f32 to vector<2x384xf32>
    %85 = arith.addf %84, %83 : vector<2x384xf32>
    %86 = arith.divf %84, %85 : vector<2x384xf32>
    %87 = vector.extract_strided_slice %80 {offsets = [0, 384], sizes = [2, 128], strides = [1, 1]} : vector<2x512xf32> to vector<2x128xf32>
    %88 = math.tanh %87 : vector<2x128xf32>
    %89 = vector.extract_strided_slice %86 {offsets = [0, 0], sizes = [2, 128], strides = [1, 1]} : vector<2x384xf32> to vector<2x128xf32>
    %90 = vector.extract_strided_slice %86 {offsets = [0, 128], sizes = [2, 128], strides = [1, 1]} : vector<2x384xf32> to vector<2x128xf32>
    %91 = vector.extract_strided_slice %86 {offsets = [0, 256], sizes = [2, 128], strides = [1, 1]} : vector<2x384xf32> to vector<2x128xf32>
    %92 = arith.mulf %90, %51 : vector<2x128xf32>
    %93 = arith.mulf %89, %88 : vector<2x128xf32>
    %94 = arith.addf %92, %93 : vector<2x128xf32>
    %95 = math.tanh %94 : vector<2x128xf32>
    %96 = arith.mulf %91, %95 : vector<2x128xf32>
    %97 = arith.truncf %96 : vector<2x128xf32> to vector<2x128xbf16>
    %cst_24 = arith.constant dense<0.000000e+00> : vector<2x512xf32>
    %98 = tpu.matmul %97, %2, %cst_24 {dimension_numbers = #tpu.dot_dimension_numbers<[1], [0], [0], [1], [0, 0, 1, 1], [], []>} : vector<2x128xbf16>, vector<128x512xbf16>, vector<2x512xf32> -> vector<2x512xf32>
    %99 = vector.broadcast %3 : vector<1x512xf32> to vector<2x512xf32>
    %100 = arith.addf %98, %99 : vector<2x512xf32>
    %101 = vector.extract_strided_slice %9 {offsets = [4, 0], sizes = [2, 512], strides = [1, 1]} : vector<16x512xf32> to vector<2x512xf32>
    %102 = arith.truncf %77 : vector<2x128xf32> to vector<2x128xbf16>
    %cst_25 = arith.constant dense<0.000000e+00> : vector<2x512xf32>
    %103 = tpu.matmul %102, %0, %cst_25 {dimension_numbers = #tpu.dot_dimension_numbers<[1], [0], [0], [1], [0, 0, 1, 1], [], []>} : vector<2x128xbf16>, vector<128x512xbf16>, vector<2x512xf32> -> vector<2x512xf32>
    %104 = arith.addf %101, %103 : vector<2x512xf32>
    %105 = vector.extract_strided_slice %104 {offsets = [0, 0], sizes = [2, 384], strides = [1, 1]} : vector<2x512xf32> to vector<2x384xf32>
    %106 = arith.negf %105 : vector<2x384xf32>
    %107 = math.exp %106 : vector<2x384xf32>
    %cst_26 = arith.constant 1.000000e+00 : f32
    %108 = vector.broadcast %cst_26 : f32 to vector<2x384xf32>
    %109 = arith.addf %108, %107 : vector<2x384xf32>
    %110 = arith.divf %108, %109 : vector<2x384xf32>
    %111 = vector.extract_strided_slice %104 {offsets = [0, 384], sizes = [2, 128], strides = [1, 1]} : vector<2x512xf32> to vector<2x128xf32>
    %112 = math.tanh %111 : vector<2x128xf32>
    %113 = vector.extract_strided_slice %110 {offsets = [0, 0], sizes = [2, 128], strides = [1, 1]} : vector<2x384xf32> to vector<2x128xf32>
    %114 = vector.extract_strided_slice %110 {offsets = [0, 128], sizes = [2, 128], strides = [1, 1]} : vector<2x384xf32> to vector<2x128xf32>
    %115 = vector.extract_strided_slice %110 {offsets = [0, 256], sizes = [2, 128], strides = [1, 1]} : vector<2x384xf32> to vector<2x128xf32>
    %116 = arith.mulf %114, %75 : vector<2x128xf32>
    %117 = arith.mulf %113, %112 : vector<2x128xf32>
    %118 = arith.addf %116, %117 : vector<2x128xf32>
    %119 = math.tanh %118 : vector<2x128xf32>
    %120 = arith.mulf %115, %119 : vector<2x128xf32>
    %121 = arith.truncf %120 : vector<2x128xf32> to vector<2x128xbf16>
    %cst_27 = arith.constant dense<0.000000e+00> : vector<2x512xf32>
    %122 = tpu.matmul %121, %1, %cst_27 {dimension_numbers = #tpu.dot_dimension_numbers<[1], [0], [0], [1], [0, 0, 1, 1], [], []>} : vector<2x128xbf16>, vector<128x512xbf16>, vector<2x512xf32> -> vector<2x512xf32>
    %123 = arith.addf %100, %122 : vector<2x512xf32>
    %124 = vector.extract_strided_slice %123 {offsets = [0, 0], sizes = [2, 384], strides = [1, 1]} : vector<2x512xf32> to vector<2x384xf32>
    %125 = arith.negf %124 : vector<2x384xf32>
    %126 = math.exp %125 : vector<2x384xf32>
    %cst_28 = arith.constant 1.000000e+00 : f32
    %127 = vector.broadcast %cst_28 : f32 to vector<2x384xf32>
    %128 = arith.addf %127, %126 : vector<2x384xf32>
    %129 = arith.divf %127, %128 : vector<2x384xf32>
    %130 = vector.extract_strided_slice %123 {offsets = [0, 384], sizes = [2, 128], strides = [1, 1]} : vector<2x512xf32> to vector<2x128xf32>
    %131 = math.tanh %130 : vector<2x128xf32>
    %132 = vector.extract_strided_slice %129 {offsets = [0, 0], sizes = [2, 128], strides = [1, 1]} : vector<2x384xf32> to vector<2x128xf32>
    %133 = vector.extract_strided_slice %129 {offsets = [0, 128], sizes = [2, 128], strides = [1, 1]} : vector<2x384xf32> to vector<2x128xf32>
    %134 = vector.extract_strided_slice %129 {offsets = [0, 256], sizes = [2, 128], strides = [1, 1]} : vector<2x384xf32> to vector<2x128xf32>
    %135 = arith.mulf %133, %94 : vector<2x128xf32>
    %136 = arith.mulf %132, %131 : vector<2x128xf32>
    %137 = arith.addf %135, %136 : vector<2x128xf32>
    %138 = math.tanh %137 : vector<2x128xf32>
    %139 = arith.mulf %134, %138 : vector<2x128xf32>
    %140 = arith.truncf %139 : vector<2x128xf32> to vector<2x128xbf16>
    %cst_29 = arith.constant dense<0.000000e+00> : vector<2x512xf32>
    %141 = tpu.matmul %140, %2, %cst_29 {dimension_numbers = #tpu.dot_dimension_numbers<[1], [0], [0], [1], [0, 0, 1, 1], [], []>} : vector<2x128xbf16>, vector<128x512xbf16>, vector<2x512xf32> -> vector<2x512xf32>
    %142 = vector.broadcast %3 : vector<1x512xf32> to vector<2x512xf32>
    %143 = arith.addf %141, %142 : vector<2x512xf32>
    %144 = vector.extract_strided_slice %9 {offsets = [6, 0], sizes = [2, 512], strides = [1, 1]} : vector<16x512xf32> to vector<2x512xf32>
    %145 = arith.truncf %120 : vector<2x128xf32> to vector<2x128xbf16>
    %cst_30 = arith.constant dense<0.000000e+00> : vector<2x512xf32>
    %146 = tpu.matmul %145, %0, %cst_30 {dimension_numbers = #tpu.dot_dimension_numbers<[1], [0], [0], [1], [0, 0, 1, 1], [], []>} : vector<2x128xbf16>, vector<128x512xbf16>, vector<2x512xf32> -> vector<2x512xf32>
    %147 = arith.addf %144, %146 : vector<2x512xf32>
    %148 = vector.extract_strided_slice %147 {offsets = [0, 0], sizes = [2, 384], strides = [1, 1]} : vector<2x512xf32> to vector<2x384xf32>
    %149 = arith.negf %148 : vector<2x384xf32>
    %150 = math.exp %149 : vector<2x384xf32>
    %cst_31 = arith.constant 1.000000e+00 : f32
    %151 = vector.broadcast %cst_31 : f32 to vector<2x384xf32>
    %152 = arith.addf %151, %150 : vector<2x384xf32>
    %153 = arith.divf %151, %152 : vector<2x384xf32>
    %154 = vector.extract_strided_slice %147 {offsets = [0, 384], sizes = [2, 128], strides = [1, 1]} : vector<2x512xf32> to vector<2x128xf32>
    %155 = math.tanh %154 : vector<2x128xf32>
    %156 = vector.extract_strided_slice %153 {offsets = [0, 0], sizes = [2, 128], strides = [1, 1]} : vector<2x384xf32> to vector<2x128xf32>
    %157 = vector.extract_strided_slice %153 {offsets = [0, 128], sizes = [2, 128], strides = [1, 1]} : vector<2x384xf32> to vector<2x128xf32>
    %158 = vector.extract_strided_slice %153 {offsets = [0, 256], sizes = [2, 128], strides = [1, 1]} : vector<2x384xf32> to vector<2x128xf32>
    %159 = arith.mulf %157, %118 : vector<2x128xf32>
    %160 = arith.mulf %156, %155 : vector<2x128xf32>
    %161 = arith.addf %159, %160 : vector<2x128xf32>
    %162 = math.tanh %161 : vector<2x128xf32>
    %163 = arith.mulf %158, %162 : vector<2x128xf32>
    %164 = arith.truncf %163 : vector<2x128xf32> to vector<2x128xbf16>
    %cst_32 = arith.constant dense<0.000000e+00> : vector<2x512xf32>
    %165 = tpu.matmul %164, %1, %cst_32 {dimension_numbers = #tpu.dot_dimension_numbers<[1], [0], [0], [1], [0, 0, 1, 1], [], []>} : vector<2x128xbf16>, vector<128x512xbf16>, vector<2x512xf32> -> vector<2x512xf32>
    %166 = arith.addf %143, %165 : vector<2x512xf32>
    %167 = vector.extract_strided_slice %166 {offsets = [0, 0], sizes = [2, 384], strides = [1, 1]} : vector<2x512xf32> to vector<2x384xf32>
    %168 = arith.negf %167 : vector<2x384xf32>
    %169 = math.exp %168 : vector<2x384xf32>
    %cst_33 = arith.constant 1.000000e+00 : f32
    %170 = vector.broadcast %cst_33 : f32 to vector<2x384xf32>
    %171 = arith.addf %170, %169 : vector<2x384xf32>
    %172 = arith.divf %170, %171 : vector<2x384xf32>
    %173 = vector.extract_strided_slice %166 {offsets = [0, 384], sizes = [2, 128], strides = [1, 1]} : vector<2x512xf32> to vector<2x128xf32>
    %174 = math.tanh %173 : vector<2x128xf32>
    %175 = vector.extract_strided_slice %172 {offsets = [0, 0], sizes = [2, 128], strides = [1, 1]} : vector<2x384xf32> to vector<2x128xf32>
    %176 = vector.extract_strided_slice %172 {offsets = [0, 128], sizes = [2, 128], strides = [1, 1]} : vector<2x384xf32> to vector<2x128xf32>
    %177 = vector.extract_strided_slice %172 {offsets = [0, 256], sizes = [2, 128], strides = [1, 1]} : vector<2x384xf32> to vector<2x128xf32>
    %178 = arith.mulf %176, %137 : vector<2x128xf32>
    %179 = arith.mulf %175, %174 : vector<2x128xf32>
    %180 = arith.addf %178, %179 : vector<2x128xf32>
    %181 = math.tanh %180 : vector<2x128xf32>
    %182 = arith.mulf %177, %181 : vector<2x128xf32>
    %183 = arith.truncf %182 : vector<2x128xf32> to vector<2x128xbf16>
    %cst_34 = arith.constant dense<0.000000e+00> : vector<2x512xf32>
    %184 = tpu.matmul %183, %2, %cst_34 {dimension_numbers = #tpu.dot_dimension_numbers<[1], [0], [0], [1], [0, 0, 1, 1], [], []>} : vector<2x128xbf16>, vector<128x512xbf16>, vector<2x512xf32> -> vector<2x512xf32>
    %185 = vector.broadcast %3 : vector<1x512xf32> to vector<2x512xf32>
    %186 = arith.addf %184, %185 : vector<2x512xf32>
    %187 = vector.extract_strided_slice %9 {offsets = [8, 0], sizes = [2, 512], strides = [1, 1]} : vector<16x512xf32> to vector<2x512xf32>
    %188 = arith.truncf %163 : vector<2x128xf32> to vector<2x128xbf16>
    %cst_35 = arith.constant dense<0.000000e+00> : vector<2x512xf32>
    %189 = tpu.matmul %188, %0, %cst_35 {dimension_numbers = #tpu.dot_dimension_numbers<[1], [0], [0], [1], [0, 0, 1, 1], [], []>} : vector<2x128xbf16>, vector<128x512xbf16>, vector<2x512xf32> -> vector<2x512xf32>
    %190 = arith.addf %187, %189 : vector<2x512xf32>
    %191 = vector.extract_strided_slice %190 {offsets = [0, 0], sizes = [2, 384], strides = [1, 1]} : vector<2x512xf32> to vector<2x384xf32>
    %192 = arith.negf %191 : vector<2x384xf32>
    %193 = math.exp %192 : vector<2x384xf32>
    %cst_36 = arith.constant 1.000000e+00 : f32
    %194 = vector.broadcast %cst_36 : f32 to vector<2x384xf32>
    %195 = arith.addf %194, %193 : vector<2x384xf32>
    %196 = arith.divf %194, %195 : vector<2x384xf32>
    %197 = vector.extract_strided_slice %190 {offsets = [0, 384], sizes = [2, 128], strides = [1, 1]} : vector<2x512xf32> to vector<2x128xf32>
    %198 = math.tanh %197 : vector<2x128xf32>
    %199 = vector.extract_strided_slice %196 {offsets = [0, 0], sizes = [2, 128], strides = [1, 1]} : vector<2x384xf32> to vector<2x128xf32>
    %200 = vector.extract_strided_slice %196 {offsets = [0, 128], sizes = [2, 128], strides = [1, 1]} : vector<2x384xf32> to vector<2x128xf32>
    %201 = vector.extract_strided_slice %196 {offsets = [0, 256], sizes = [2, 128], strides = [1, 1]} : vector<2x384xf32> to vector<2x128xf32>
    %202 = arith.mulf %200, %161 : vector<2x128xf32>
    %203 = arith.mulf %199, %198 : vector<2x128xf32>
    %204 = arith.addf %202, %203 : vector<2x128xf32>
    %205 = math.tanh %204 : vector<2x128xf32>
    %206 = arith.mulf %201, %205 : vector<2x128xf32>
    %207 = arith.truncf %206 : vector<2x128xf32> to vector<2x128xbf16>
    %cst_37 = arith.constant dense<0.000000e+00> : vector<2x512xf32>
    %208 = tpu.matmul %207, %1, %cst_37 {dimension_numbers = #tpu.dot_dimension_numbers<[1], [0], [0], [1], [0, 0, 1, 1], [], []>} : vector<2x128xbf16>, vector<128x512xbf16>, vector<2x512xf32> -> vector<2x512xf32>
    %209 = arith.addf %186, %208 : vector<2x512xf32>
    %210 = vector.extract_strided_slice %209 {offsets = [0, 0], sizes = [2, 384], strides = [1, 1]} : vector<2x512xf32> to vector<2x384xf32>
    %211 = arith.negf %210 : vector<2x384xf32>
    %212 = math.exp %211 : vector<2x384xf32>
    %cst_38 = arith.constant 1.000000e+00 : f32
    %213 = vector.broadcast %cst_38 : f32 to vector<2x384xf32>
    %214 = arith.addf %213, %212 : vector<2x384xf32>
    %215 = arith.divf %213, %214 : vector<2x384xf32>
    %216 = vector.extract_strided_slice %209 {offsets = [0, 384], sizes = [2, 128], strides = [1, 1]} : vector<2x512xf32> to vector<2x128xf32>
    %217 = math.tanh %216 : vector<2x128xf32>
    %218 = vector.extract_strided_slice %215 {offsets = [0, 0], sizes = [2, 128], strides = [1, 1]} : vector<2x384xf32> to vector<2x128xf32>
    %219 = vector.extract_strided_slice %215 {offsets = [0, 128], sizes = [2, 128], strides = [1, 1]} : vector<2x384xf32> to vector<2x128xf32>
    %220 = vector.extract_strided_slice %215 {offsets = [0, 256], sizes = [2, 128], strides = [1, 1]} : vector<2x384xf32> to vector<2x128xf32>
    %221 = arith.mulf %219, %180 : vector<2x128xf32>
    %222 = arith.mulf %218, %217 : vector<2x128xf32>
    %223 = arith.addf %221, %222 : vector<2x128xf32>
    %224 = math.tanh %223 : vector<2x128xf32>
    %225 = arith.mulf %220, %224 : vector<2x128xf32>
    %226 = arith.truncf %225 : vector<2x128xf32> to vector<2x128xbf16>
    %cst_39 = arith.constant dense<0.000000e+00> : vector<2x512xf32>
    %227 = tpu.matmul %226, %2, %cst_39 {dimension_numbers = #tpu.dot_dimension_numbers<[1], [0], [0], [1], [0, 0, 1, 1], [], []>} : vector<2x128xbf16>, vector<128x512xbf16>, vector<2x512xf32> -> vector<2x512xf32>
    %228 = vector.broadcast %3 : vector<1x512xf32> to vector<2x512xf32>
    %229 = arith.addf %227, %228 : vector<2x512xf32>
    %230 = vector.extract_strided_slice %9 {offsets = [10, 0], sizes = [2, 512], strides = [1, 1]} : vector<16x512xf32> to vector<2x512xf32>
    %231 = arith.truncf %206 : vector<2x128xf32> to vector<2x128xbf16>
    %cst_40 = arith.constant dense<0.000000e+00> : vector<2x512xf32>
    %232 = tpu.matmul %231, %0, %cst_40 {dimension_numbers = #tpu.dot_dimension_numbers<[1], [0], [0], [1], [0, 0, 1, 1], [], []>} : vector<2x128xbf16>, vector<128x512xbf16>, vector<2x512xf32> -> vector<2x512xf32>
    %233 = arith.addf %230, %232 : vector<2x512xf32>
    %234 = vector.extract_strided_slice %233 {offsets = [0, 0], sizes = [2, 384], strides = [1, 1]} : vector<2x512xf32> to vector<2x384xf32>
    %235 = arith.negf %234 : vector<2x384xf32>
    %236 = math.exp %235 : vector<2x384xf32>
    %cst_41 = arith.constant 1.000000e+00 : f32
    %237 = vector.broadcast %cst_41 : f32 to vector<2x384xf32>
    %238 = arith.addf %237, %236 : vector<2x384xf32>
    %239 = arith.divf %237, %238 : vector<2x384xf32>
    %240 = vector.extract_strided_slice %233 {offsets = [0, 384], sizes = [2, 128], strides = [1, 1]} : vector<2x512xf32> to vector<2x128xf32>
    %241 = math.tanh %240 : vector<2x128xf32>
    %242 = vector.extract_strided_slice %239 {offsets = [0, 0], sizes = [2, 128], strides = [1, 1]} : vector<2x384xf32> to vector<2x128xf32>
    %243 = vector.extract_strided_slice %239 {offsets = [0, 128], sizes = [2, 128], strides = [1, 1]} : vector<2x384xf32> to vector<2x128xf32>
    %244 = vector.extract_strided_slice %239 {offsets = [0, 256], sizes = [2, 128], strides = [1, 1]} : vector<2x384xf32> to vector<2x128xf32>
    %245 = arith.mulf %243, %204 : vector<2x128xf32>
    %246 = arith.mulf %242, %241 : vector<2x128xf32>
    %247 = arith.addf %245, %246 : vector<2x128xf32>
    %248 = math.tanh %247 : vector<2x128xf32>
    %249 = arith.mulf %244, %248 : vector<2x128xf32>
    %250 = arith.truncf %249 : vector<2x128xf32> to vector<2x128xbf16>
    %cst_42 = arith.constant dense<0.000000e+00> : vector<2x512xf32>
    %251 = tpu.matmul %250, %1, %cst_42 {dimension_numbers = #tpu.dot_dimension_numbers<[1], [0], [0], [1], [0, 0, 1, 1], [], []>} : vector<2x128xbf16>, vector<128x512xbf16>, vector<2x512xf32> -> vector<2x512xf32>
    %252 = arith.addf %229, %251 : vector<2x512xf32>
    %253 = vector.extract_strided_slice %252 {offsets = [0, 0], sizes = [2, 384], strides = [1, 1]} : vector<2x512xf32> to vector<2x384xf32>
    %254 = arith.negf %253 : vector<2x384xf32>
    %255 = math.exp %254 : vector<2x384xf32>
    %cst_43 = arith.constant 1.000000e+00 : f32
    %256 = vector.broadcast %cst_43 : f32 to vector<2x384xf32>
    %257 = arith.addf %256, %255 : vector<2x384xf32>
    %258 = arith.divf %256, %257 : vector<2x384xf32>
    %259 = vector.extract_strided_slice %252 {offsets = [0, 384], sizes = [2, 128], strides = [1, 1]} : vector<2x512xf32> to vector<2x128xf32>
    %260 = math.tanh %259 : vector<2x128xf32>
    %261 = vector.extract_strided_slice %258 {offsets = [0, 0], sizes = [2, 128], strides = [1, 1]} : vector<2x384xf32> to vector<2x128xf32>
    %262 = vector.extract_strided_slice %258 {offsets = [0, 128], sizes = [2, 128], strides = [1, 1]} : vector<2x384xf32> to vector<2x128xf32>
    %263 = vector.extract_strided_slice %258 {offsets = [0, 256], sizes = [2, 128], strides = [1, 1]} : vector<2x384xf32> to vector<2x128xf32>
    %264 = arith.mulf %262, %223 : vector<2x128xf32>
    %265 = arith.mulf %261, %260 : vector<2x128xf32>
    %266 = arith.addf %264, %265 : vector<2x128xf32>
    %267 = math.tanh %266 : vector<2x128xf32>
    %268 = arith.mulf %263, %267 : vector<2x128xf32>
    %269 = arith.truncf %268 : vector<2x128xf32> to vector<2x128xbf16>
    %cst_44 = arith.constant dense<0.000000e+00> : vector<2x512xf32>
    %270 = tpu.matmul %269, %2, %cst_44 {dimension_numbers = #tpu.dot_dimension_numbers<[1], [0], [0], [1], [0, 0, 1, 1], [], []>} : vector<2x128xbf16>, vector<128x512xbf16>, vector<2x512xf32> -> vector<2x512xf32>
    %271 = vector.broadcast %3 : vector<1x512xf32> to vector<2x512xf32>
    %272 = arith.addf %270, %271 : vector<2x512xf32>
    %273 = vector.extract_strided_slice %9 {offsets = [12, 0], sizes = [2, 512], strides = [1, 1]} : vector<16x512xf32> to vector<2x512xf32>
    %274 = arith.truncf %249 : vector<2x128xf32> to vector<2x128xbf16>
    %cst_45 = arith.constant dense<0.000000e+00> : vector<2x512xf32>
    %275 = tpu.matmul %274, %0, %cst_45 {dimension_numbers = #tpu.dot_dimension_numbers<[1], [0], [0], [1], [0, 0, 1, 1], [], []>} : vector<2x128xbf16>, vector<128x512xbf16>, vector<2x512xf32> -> vector<2x512xf32>
    %276 = arith.addf %273, %275 : vector<2x512xf32>
    %277 = vector.extract_strided_slice %276 {offsets = [0, 0], sizes = [2, 384], strides = [1, 1]} : vector<2x512xf32> to vector<2x384xf32>
    %278 = arith.negf %277 : vector<2x384xf32>
    %279 = math.exp %278 : vector<2x384xf32>
    %cst_46 = arith.constant 1.000000e+00 : f32
    %280 = vector.broadcast %cst_46 : f32 to vector<2x384xf32>
    %281 = arith.addf %280, %279 : vector<2x384xf32>
    %282 = arith.divf %280, %281 : vector<2x384xf32>
    %283 = vector.extract_strided_slice %276 {offsets = [0, 384], sizes = [2, 128], strides = [1, 1]} : vector<2x512xf32> to vector<2x128xf32>
    %284 = math.tanh %283 : vector<2x128xf32>
    %285 = vector.extract_strided_slice %282 {offsets = [0, 0], sizes = [2, 128], strides = [1, 1]} : vector<2x384xf32> to vector<2x128xf32>
    %286 = vector.extract_strided_slice %282 {offsets = [0, 128], sizes = [2, 128], strides = [1, 1]} : vector<2x384xf32> to vector<2x128xf32>
    %287 = vector.extract_strided_slice %282 {offsets = [0, 256], sizes = [2, 128], strides = [1, 1]} : vector<2x384xf32> to vector<2x128xf32>
    %288 = arith.mulf %286, %247 : vector<2x128xf32>
    %289 = arith.mulf %285, %284 : vector<2x128xf32>
    %290 = arith.addf %288, %289 : vector<2x128xf32>
    %291 = math.tanh %290 : vector<2x128xf32>
    %292 = arith.mulf %287, %291 : vector<2x128xf32>
    %293 = arith.truncf %292 : vector<2x128xf32> to vector<2x128xbf16>
    %cst_47 = arith.constant dense<0.000000e+00> : vector<2x512xf32>
    %294 = tpu.matmul %293, %1, %cst_47 {dimension_numbers = #tpu.dot_dimension_numbers<[1], [0], [0], [1], [0, 0, 1, 1], [], []>} : vector<2x128xbf16>, vector<128x512xbf16>, vector<2x512xf32> -> vector<2x512xf32>
    %295 = arith.addf %272, %294 : vector<2x512xf32>
    %296 = vector.extract_strided_slice %295 {offsets = [0, 0], sizes = [2, 384], strides = [1, 1]} : vector<2x512xf32> to vector<2x384xf32>
    %297 = arith.negf %296 : vector<2x384xf32>
    %298 = math.exp %297 : vector<2x384xf32>
    %cst_48 = arith.constant 1.000000e+00 : f32
    %299 = vector.broadcast %cst_48 : f32 to vector<2x384xf32>
    %300 = arith.addf %299, %298 : vector<2x384xf32>
    %301 = arith.divf %299, %300 : vector<2x384xf32>
    %302 = vector.extract_strided_slice %295 {offsets = [0, 384], sizes = [2, 128], strides = [1, 1]} : vector<2x512xf32> to vector<2x128xf32>
    %303 = math.tanh %302 : vector<2x128xf32>
    %304 = vector.extract_strided_slice %301 {offsets = [0, 0], sizes = [2, 128], strides = [1, 1]} : vector<2x384xf32> to vector<2x128xf32>
    %305 = vector.extract_strided_slice %301 {offsets = [0, 128], sizes = [2, 128], strides = [1, 1]} : vector<2x384xf32> to vector<2x128xf32>
    %306 = vector.extract_strided_slice %301 {offsets = [0, 256], sizes = [2, 128], strides = [1, 1]} : vector<2x384xf32> to vector<2x128xf32>
    %307 = arith.mulf %305, %266 : vector<2x128xf32>
    %308 = arith.mulf %304, %303 : vector<2x128xf32>
    %309 = arith.addf %307, %308 : vector<2x128xf32>
    %310 = math.tanh %309 : vector<2x128xf32>
    %311 = arith.mulf %306, %310 : vector<2x128xf32>
    %312 = arith.truncf %311 : vector<2x128xf32> to vector<2x128xbf16>
    %cst_49 = arith.constant dense<0.000000e+00> : vector<2x512xf32>
    %313 = tpu.matmul %312, %2, %cst_49 {dimension_numbers = #tpu.dot_dimension_numbers<[1], [0], [0], [1], [0, 0, 1, 1], [], []>} : vector<2x128xbf16>, vector<128x512xbf16>, vector<2x512xf32> -> vector<2x512xf32>
    %314 = vector.broadcast %3 : vector<1x512xf32> to vector<2x512xf32>
    %315 = arith.addf %313, %314 : vector<2x512xf32>
    %316 = vector.extract_strided_slice %9 {offsets = [14, 0], sizes = [2, 512], strides = [1, 1]} : vector<16x512xf32> to vector<2x512xf32>
    %317 = arith.truncf %292 : vector<2x128xf32> to vector<2x128xbf16>
    %cst_50 = arith.constant dense<0.000000e+00> : vector<2x512xf32>
    %318 = tpu.matmul %317, %0, %cst_50 {dimension_numbers = #tpu.dot_dimension_numbers<[1], [0], [0], [1], [0, 0, 1, 1], [], []>} : vector<2x128xbf16>, vector<128x512xbf16>, vector<2x512xf32> -> vector<2x512xf32>
    %319 = arith.addf %316, %318 : vector<2x512xf32>
    %320 = vector.extract_strided_slice %319 {offsets = [0, 0], sizes = [2, 384], strides = [1, 1]} : vector<2x512xf32> to vector<2x384xf32>
    %321 = arith.negf %320 : vector<2x384xf32>
    %322 = math.exp %321 : vector<2x384xf32>
    %cst_51 = arith.constant 1.000000e+00 : f32
    %323 = vector.broadcast %cst_51 : f32 to vector<2x384xf32>
    %324 = arith.addf %323, %322 : vector<2x384xf32>
    %325 = arith.divf %323, %324 : vector<2x384xf32>
    %326 = vector.extract_strided_slice %319 {offsets = [0, 384], sizes = [2, 128], strides = [1, 1]} : vector<2x512xf32> to vector<2x128xf32>
    %327 = math.tanh %326 : vector<2x128xf32>
    %328 = vector.extract_strided_slice %325 {offsets = [0, 0], sizes = [2, 128], strides = [1, 1]} : vector<2x384xf32> to vector<2x128xf32>
    %329 = vector.extract_strided_slice %325 {offsets = [0, 128], sizes = [2, 128], strides = [1, 1]} : vector<2x384xf32> to vector<2x128xf32>
    %330 = vector.extract_strided_slice %325 {offsets = [0, 256], sizes = [2, 128], strides = [1, 1]} : vector<2x384xf32> to vector<2x128xf32>
    %331 = arith.mulf %329, %290 : vector<2x128xf32>
    %332 = arith.mulf %328, %327 : vector<2x128xf32>
    %333 = arith.addf %331, %332 : vector<2x128xf32>
    %334 = math.tanh %333 : vector<2x128xf32>
    %335 = arith.mulf %330, %334 : vector<2x128xf32>
    %336 = arith.truncf %335 : vector<2x128xf32> to vector<2x128xbf16>
    %cst_52 = arith.constant dense<0.000000e+00> : vector<2x512xf32>
    %337 = tpu.matmul %336, %1, %cst_52 {dimension_numbers = #tpu.dot_dimension_numbers<[1], [0], [0], [1], [0, 0, 1, 1], [], []>} : vector<2x128xbf16>, vector<128x512xbf16>, vector<2x512xf32> -> vector<2x512xf32>
    %338 = arith.addf %315, %337 : vector<2x512xf32>
    %339 = vector.extract_strided_slice %338 {offsets = [0, 0], sizes = [2, 384], strides = [1, 1]} : vector<2x512xf32> to vector<2x384xf32>
    %340 = arith.negf %339 : vector<2x384xf32>
    %341 = math.exp %340 : vector<2x384xf32>
    %cst_53 = arith.constant 1.000000e+00 : f32
    %342 = vector.broadcast %cst_53 : f32 to vector<2x384xf32>
    %343 = arith.addf %342, %341 : vector<2x384xf32>
    %344 = arith.divf %342, %343 : vector<2x384xf32>
    %345 = vector.extract_strided_slice %338 {offsets = [0, 384], sizes = [2, 128], strides = [1, 1]} : vector<2x512xf32> to vector<2x128xf32>
    %346 = math.tanh %345 : vector<2x128xf32>
    %347 = vector.extract_strided_slice %344 {offsets = [0, 0], sizes = [2, 128], strides = [1, 1]} : vector<2x384xf32> to vector<2x128xf32>
    %348 = vector.extract_strided_slice %344 {offsets = [0, 128], sizes = [2, 128], strides = [1, 1]} : vector<2x384xf32> to vector<2x128xf32>
    %349 = vector.extract_strided_slice %344 {offsets = [0, 256], sizes = [2, 128], strides = [1, 1]} : vector<2x384xf32> to vector<2x128xf32>
    %350 = arith.mulf %348, %309 : vector<2x128xf32>
    %351 = arith.mulf %347, %346 : vector<2x128xf32>
    %352 = arith.addf %350, %351 : vector<2x128xf32>
    %353 = math.tanh %352 : vector<2x128xf32>
    %354 = arith.mulf %349, %353 : vector<2x128xf32>
    %355 = arith.truncf %354 : vector<2x128xf32> to vector<2x128xbf16>
    %c0_54 = arith.constant 0 : index
    %c0_55 = arith.constant 0 : index
    %356 = vector.load %arg7[%c0_54, %c0_55] : memref<128x5xbf16, #tpu.memory_space<vmem>>, vector<128x5xbf16>
    %cst_56 = arith.constant dense<0.000000e+00> : vector<2x5xf32>
    %357 = tpu.matmul %355, %356, %cst_56 {dimension_numbers = #tpu.dot_dimension_numbers<[1], [0], [0], [1], [0, 0, 1, 1], [], []>} : vector<2x128xbf16>, vector<128x5xbf16>, vector<2x5xf32> -> vector<2x5xf32>
    %c0_57 = arith.constant 0 : index
    %c0_58 = arith.constant 0 : index
    %358 = vector.load %arg8[%c0_57, %c0_58] : memref<1x5xf32, #tpu.memory_space<vmem>>, vector<1x5xf32>
    %359 = vector.broadcast %358 : vector<1x5xf32> to vector<2x5xf32>
    %360 = arith.addf %357, %359 : vector<2x5xf32>
    %c0_59 = arith.constant 0 : index
    %c0_60 = arith.constant 0 : index
    %361 = vector.load %arg9[%c0_59, %c0_60] : memref<2x5xf32, #tpu.memory_space<vmem>>, vector<2x5xf32>
    tpu.vector_store %arg9[%c0_59, %c0_60], %360 {strides = array<i32>} : memref<2x5xf32, #tpu.memory_space<vmem>>, vector<2x5xf32>,
    return
  }
}

</mosaic_0001>

<llo_original>
// kernel: apt_lstm_forward.1
$region0: #{apt_lstm_forward.1}
  #allocation0 [shape = 'u32[]', space=smem, size = 0x4, offset = 0x4, fixed_abs, tag = 'smem constant byte address 0x4 - core index']
  #allocation1 [shape = 'u32[144,128]{1,0:T(1,128)}', space=vmem, size = 0x12000, scoped, tag = 'internal scratch']
  %s0 = inlined_call_operand.vmem [shape: bf16[16,16], index: 0, kind: input, shape index: {}]
  %s1 = inlined_call_operand.vmem [shape: bf16[16,512], index: 1, kind: input, shape index: {}]
  %s2 = inlined_call_operand.hbm [shape: bf16[128,512], index: 2, kind: input, shape index: {}]
  %s3 = inlined_call_operand.vmem [shape: f32[1,512], index: 3, kind: input, shape index: {}]
  %s4 = inlined_call_operand.hbm [shape: bf16[128,512], index: 4, kind: input, shape index: {}]
  %s5 = inlined_call_operand.hbm [shape: bf16[128,512], index: 5, kind: input, shape index: {}]
  %s6 = inlined_call_operand.vmem [shape: f32[1,512], index: 6, kind: input, shape index: {}]
  %s7 = inlined_call_operand.vmem [shape: bf16[128,5], index: 7, kind: input, shape index: {}]
  %s8 = inlined_call_operand.vmem [shape: f32[1,5], index: 8, kind: input, shape index: {}]
  %s9 = inlined_call_operand.hbm [shape: f32[2,5], index: 9, kind: output, shape index: {}]
  %s10 = sld [smem:[#allocation0]]
  $region58: #{apt_lstm_forward.1} parent=0
    _
  %s12 = ssub.s32 1, %s10
  %s13 = scalar_select 0, %s12, %s10
  $region1: #{apt_lstm_forward.1} parent=0
    #allocation2 [shape = 'u8[131072]{0}', space=vmem, size = 0x20000, scoped, tag = 'input window, operand 2, single buffered']
    #allocation3 [shape = 's32[1]{0}', space=sflag, size = 0x4, scoped, tag = 'scoped memory for apt_lstm_forward.1']
    #allocation4 [shape = 's32[1]{0}', space=sflag, size = 0x4, scoped, tag = 'scoped memory for apt_lstm_forward.1']
    #allocation5 [shape = 'u8[131072]{0}', space=vmem, size = 0x20000, scoped, tag = 'input window, operand 4, single buffered']
    #allocation6 [shape = 's32[1]{0}', space=sflag, size = 0x4, scoped, tag = 'scoped memory for apt_lstm_forward.1']
    #allocation7 [shape = 'u8[131072]{0}', space=vmem, size = 0x20000, scoped, tag = 'input window, operand 5, single buffered']
    #allocation8 [shape = 'u8[1024]{0}', space=vmem, size = 0x400, scoped, tag = 'output window, operand 0, single buffered']
    %14 = vsyncpa [#allocation3], 0
    %15 = vsyncpa [#allocation6], 0
    %16 = vsyncpa [#allocation4], 0
    // Predicated region
    $region2: #{apt_lstm_forward.1} parent=1 // pred_check
      _
    $region3: #{apt_lstm_forward.1} parent=1 // pred_check_branch
      %18 = sbr.rel (0) target = $region5
    $region4: #{apt_lstm_forward.1} parent=1 // pred_region
      _
    $region5: #{apt_lstm_forward.1} parent=1 // pred_fallthru
      _
    // Predicated region
    $region6: #{apt_lstm_forward.1} parent=1 // pred_check
      _
    $region7: #{apt_lstm_forward.1} parent=1 // pred_check_branch
      %20 = sbr.rel (0) target = $region9
    $region8: #{apt_lstm_forward.1} parent=1 // pred_region
      _
    $region9: #{apt_lstm_forward.1} parent=1 // pred_fallthru
      _
    // Predicated region
    $region10: #{apt_lstm_forward.1} parent=1 // pred_check
      _
    $region11: #{apt_lstm_forward.1} parent=1 // pred_check_branch
      %22 = sbr.rel (0) target = $region13
    $region12: #{apt_lstm_forward.1} parent=1 // pred_region
      %s24 = ssub.s32 4096, 4096
      %25 = vsyncadd [#allocation3], %s24
      %s26 = sshll.u32 [#allocation2], 4
      %s27 = int_to_ptr.vmem [resolvable:$true] %s26
      %32 = dma.hbm_to_vmem [thread:$0]  %s2, 4096, %s27, [#allocation3], 256, 256, 16
    $region13: #{apt_lstm_forward.1} parent=1 // pred_fallthru
      _
    // Predicated region
    $region14: #{apt_lstm_forward.1} parent=1 // pred_check
      _
    $region15: #{apt_lstm_forward.1} parent=1 // pred_check_branch
      %34 = sbr.rel (0) target = $region17
    $region16: #{apt_lstm_forward.1} parent=1 // pred_region
      _
    $region17: #{apt_lstm_forward.1} parent=1 // pred_fallthru
      _
    // Predicated region
    $region18: #{apt_lstm_forward.1} parent=1 // pred_check
      _
    $region19: #{apt_lstm_forward.1} parent=1 // pred_check_branch
      %36 = sbr.rel (0) target = $region21
    $region20: #{apt_lstm_forward.1} parent=1 // pred_region
      %s38 = ssub.s32 4096, 4096
      %39 = vsyncadd [#allocation6], %s38
      %s40 = sshll.u32 [#allocation5], 4
      %s41 = int_to_ptr.vmem [resolvable:$true] %s40
      %46 = dma.hbm_to_vmem [thread:$0]  %s4, 4096, %s41, [#allocation6], 256, 256, 16
    $region21: #{apt_lstm_forward.1} parent=1 // pred_fallthru
      _
    // Predicated region
    $region22: #{apt_lstm_forward.1} parent=1 // pred_check
      _
    $region23: #{apt_lstm_forward.1} parent=1 // pred_check_branch
      %48 = sbr.rel (0) target = $region25
    $region24: #{apt_lstm_forward.1} parent=1 // pred_region
      %s50 = ssub.s32 4096, 4096
      %51 = vsyncadd [#allocation6], %s50
      %s52 = sshll.u32 [#allocation7], 4
      %s53 = int_to_ptr.vmem [resolvable:$true] %s52
      %58 = dma.hbm_to_vmem [thread:$0]  %s5, 4096, %s53, [#allocation6], 256, 256, 16
    $region25: #{apt_lstm_forward.1} parent=1 // pred_fallthru
      _
    // Predicated region
    $region26: #{apt_lstm_forward.1} parent=1 // pred_check
      _
    $region27: #{apt_lstm_forward.1} parent=1 // pred_check_branch
      %60 = sbr.rel (0) target = $region29
    $region28: #{apt_lstm_forward.1} parent=1 // pred_region
      _
    $region29: #{apt_lstm_forward.1} parent=1 // pred_fallthru
      _
    // Predicated region
    $region30: #{apt_lstm_forward.1} parent=1 // pred_check
      _
    $region31: #{apt_lstm_forward.1} parent=1 // pred_check_branch
      %62 = sbr.rel (0) target = $region33
    $region32: #{apt_lstm_forward.1} parent=1 // pred_region
      _
    $region33: #{apt_lstm_forward.1} parent=1 // pred_fallthru
      _
    // Predicated region
    $region34: #{apt_lstm_forward.1} parent=1 // pred_check
      _
    $region35: #{apt_lstm_forward.1} parent=1 // pred_check_branch
      %64 = sbr.rel (0) target = $region37
    $region36: #{apt_lstm_forward.1} parent=1 // pred_region
      _
    $region37: #{apt_lstm_forward.1} parent=1 // pred_fallthru
      _
    // Predicated region
    $region38: #{apt_lstm_forward.1} parent=1 // pred_check
      _
    $region39: #{apt_lstm_forward.1} parent=1 // pred_check_branch
      %66 = sbr.rel (0) target = $region41
    $region40: #{apt_lstm_forward.1} parent=1 // pred_region
      %67 = dma.done [#allocation3], 4096
    $region41: #{apt_lstm_forward.1} parent=1 // pred_fallthru
      _
    // Predicated region
    $region42: #{apt_lstm_forward.1} parent=1 // pred_check
      _
    $region43: #{apt_lstm_forward.1} parent=1 // pred_check_branch
      %69 = sbr.rel (0) target = $region45
    $region44: #{apt_lstm_forward.1} parent=1 // pred_region
      %70 = dma.done [#allocation6], 4096
    $region45: #{apt_lstm_forward.1} parent=1 // pred_fallthru
      _
    // Predicated region
    $region46: #{apt_lstm_forward.1} parent=1 // pred_check
      _
    $region47: #{apt_lstm_forward.1} parent=1 // pred_check_branch
      %72 = sbr.rel (0) target = $region49
    $region48: #{apt_lstm_forward.1} parent=1 // pred_region
      %73 = dma.done [#allocation6], 4096
    $region49: #{apt_lstm_forward.1} parent=1 // pred_fallthru
      _
    %v75 = vld [vmem:[#allocation2] sm:$0xff]
    %v76 = vld [vmem:[#allocation2 + $0x8] sm:$0xff]
    %v77 = vld [vmem:[#allocation2 + $0x10] sm:$0xff]
    %v78 = vld [vmem:[#allocation2 + $0x18] sm:$0xff]
    %v79 = vld [vmem:[#allocation2 + $0x20] sm:$0xff]
    %v80 = vld [vmem:[#allocation2 + $0x28] sm:$0xff]
    %v81 = vld [vmem:[#allocation2 + $0x30] sm:$0xff]
    %v82 = vld [vmem:[#allocation2 + $0x38] sm:$0xff]
    %v83 = vld [vmem:[#allocation2 + $0x40] sm:$0xff]
    %v84 = vld [vmem:[#allocation2 + $0x48] sm:$0xff]
    %v85 = vld [vmem:[#allocation2 + $0x50] sm:$0xff]
    %v86 = vld [vmem:[#allocation2 + $0x58] sm:$0xff]
    %v87 = vld [vmem:[#allocation2 + $0x60] sm:$0xff]
    %v88 = vld [vmem:[#allocation2 + $0x68] sm:$0xff]
    %v89 = vld [vmem:[#allocation2 + $0x70] sm:$0xff]
    %v90 = vld [vmem:[#allocation2 + $0x78] sm:$0xff]
    %v91 = vld [vmem:[#allocation2 + $0x80] sm:$0xff]
    %v92 = vld [vmem:[#allocation2 + $0x88] sm:$0xff]
    %v93 = vld [vmem:[#allocation2 + $0x90] sm:$0xff]
    %v94 = vld [vmem:[#allocation2 + $0x98] sm:$0xff]
    %v95 = vld [vmem:[#allocation2 + $0xa0] sm:$0xff]
    %v96 = vld [vmem:[#allocation2 + $0xa8] sm:$0xff]
    %v97 = vld [vmem:[#allocation2 + $0xb0] sm:$0xff]
    %v98 = vld [vmem:[#allocation2 + $0xb8] sm:$0xff]
    %v99 = vld [vmem:[#allocation2 + $0xc0] sm:$0xff]
    %v100 = vld [vmem:[#allocation2 + $0xc8] sm:$0xff]
    %v101 = vld [vmem:[#allocation2 + $0xd0] sm:$0xff]
    %v102 = vld [vmem:[#allocation2 + $0xd8] sm:$0xff]
    %v103 = vld [vmem:[#allocation2 + $0xe0] sm:$0xff]
    %v104 = vld [vmem:[#allocation2 + $0xe8] sm:$0xff]
    %v105 = vld [vmem:[#allocation2 + $0xf0] sm:$0xff]
    %v106 = vld [vmem:[#allocation2 + $0xf8] sm:$0xff]
    %v107 = vld [vmem:[#allocation5] sm:$0xff]
    %v108 = vld [vmem:[#allocation5 + $0x8] sm:$0xff]
    %v109 = vld [vmem:[#allocation5 + $0x10] sm:$0xff]
    %v110 = vld [vmem:[#allocation5 + $0x18] sm:$0xff]
    %v111 = vld [vmem:[#allocation5 + $0x20] sm:$0xff]
    %v112 = vld [vmem:[#allocation5 + $0x28] sm:$0xff]
    %v113 = vld [vmem:[#allocation5 + $0x30] sm:$0xff]
    %v114 = vld [vmem:[#allocation5 + $0x38] sm:$0xff]
    %v115 = vld [vmem:[#allocation5 + $0x40] sm:$0xff]
    %v116 = vld [vmem:[#allocation5 + $0x48] sm:$0xff]
    %v117 = vld [vmem:[#allocation5 + $0x50] sm:$0xff]
    %v118 = vld [vmem:[#allocation5 + $0x58] sm:$0xff]
    %v119 = vld [vmem:[#allocation5 + $0x60] sm:$0xff]
    %v120 = vld [vmem:[#allocation5 + $0x68] sm:$0xff]
    %v121 = vld [vmem:[#allocation5 + $0x70] sm:$0xff]
    %v122 = vld [vmem:[#allocation5 + $0x78] sm:$0xff]
    %v123 = vld [vmem:[#allocation5 + $0x80] sm:$0xff]
    %v124 = vld [vmem:[#allocation5 + $0x88] sm:$0xff]
    %v125 = vld [vmem:[#allocation5 + $0x90] sm:$0xff]
    %v126 = vld [vmem:[#allocation5 + $0x98] sm:$0xff]
    %v127 = vld [vmem:[#allocation5 + $0xa0] sm:$0xff]
    %v128 = vld [vmem:[#allocation5 + $0xa8] sm:$0xff]
    %v129 = vld [vmem:[#allocation5 + $0xb0] sm:$0xff]
    %v130 = vld [vmem:[#allocation5 + $0xb8] sm:$0xff]
    %v131 = vld [vmem:[#allocation5 + $0xc0] sm:$0xff]
    %v132 = vld [vmem:[#allocation5 + $0xc8] sm:$0xff]
    %v133 = vld [vmem:[#allocation5 + $0xd0] sm:$0xff]
    %v134 = vld [vmem:[#allocation5 + $0xd8] sm:$0xff]
    %v135 = vld [vmem:[#allocation5 + $0xe0] sm:$0xff]
    %v136 = vld [vmem:[#allocation5 + $0xe8] sm:$0xff]
    %v137 = vld [vmem:[#allocation5 + $0xf0] sm:$0xff]
    %v138 = vld [vmem:[#allocation5 + $0xf8] sm:$0xff]
    %v139 = vld [vmem:[#allocation7] sm:$0xff]
    %v140 = vld [vmem:[#allocation7 + $0x8] sm:$0xff]
    %v141 = vld [vmem:[#allocation7 + $0x10] sm:$0xff]
    %v142 = vld [vmem:[#allocation7 + $0x18] sm:$0xff]
    %v143 = vld [vmem:[#allocation7 + $0x20] sm:$0xff]
    %v144 = vld [vmem:[#allocation7 + $0x28] sm:$0xff]
    %v145 = vld [vmem:[#allocation7 + $0x30] sm:$0xff]
    %v146 = vld [vmem:[#allocation7 + $0x38] sm:$0xff]
    %v147 = vld [vmem:[#allocation7 + $0x40] sm:$0xff]
    %v148 = vld [vmem:[#allocation7 + $0x48] sm:$0xff]
    %v149 = vld [vmem:[#allocation7 + $0x50] sm:$0xff]
    %v150 = vld [vmem:[#allocation7 + $0x58] sm:$0xff]
    %v151 = vld [vmem:[#allocation7 + $0x60] sm:$0xff]
    %v152 = vld [vmem:[#allocation7 + $0x68] sm:$0xff]
    %v153 = vld [vmem:[#allocation7 + $0x70] sm:$0xff]
    %v154 = vld [vmem:[#allocation7 + $0x78] sm:$0xff]
    %v155 = vld [vmem:[#allocation7 + $0x80] sm:$0xff]
    %v156 = vld [vmem:[#allocation7 + $0x88] sm:$0xff]
    %v157 = vld [vmem:[#allocation7 + $0x90] sm:$0xff]
    %v158 = vld [vmem:[#allocation7 + $0x98] sm:$0xff]
    %v159 = vld [vmem:[#allocation7 + $0xa0] sm:$0xff]
    %v160 = vld [vmem:[#allocation7 + $0xa8] sm:$0xff]
    %v161 = vld [vmem:[#allocation7 + $0xb0] sm:$0xff]
    %v162 = vld [vmem:[#allocation7 + $0xb8] sm:$0xff]
    %v163 = vld [vmem:[#allocation7 + $0xc0] sm:$0xff]
    %v164 = vld [vmem:[#allocation7 + $0xc8] sm:$0xff]
    %v165 = vld [vmem:[#allocation7 + $0xd0] sm:$0xff]
    %v166 = vld [vmem:[#allocation7 + $0xd8] sm:$0xff]
    %v167 = vld [vmem:[#allocation7 + $0xe0] sm:$0xff]
    %v168 = vld [vmem:[#allocation7 + $0xe8] sm:$0xff]
    %v169 = vld [vmem:[#allocation7 + $0xf0] sm:$0xff]
    %v170 = vld [vmem:[#allocation7 + $0xf8] sm:$0xff]
    %v171 = vld [vmem:[%s6] sm:$0xf]
    %v172 = vld [vmem:[%s0] sm:$0xf]
    %v173 = vld [vmem:[%s0 + $0x4] sm:$0xf]
    %v174 = vld [vmem:[%s1] sm:$0xff]
    %v175 = vld [vmem:[%s1 + $0x8] sm:$0xff]
    %v176 = vld [vmem:[%s1 + $0x10] sm:$0xff]
    %v177 = vld [vmem:[%s1 + $0x18] sm:$0xff]
    %v178 = vld [vmem:[%s3] sm:$0xf]
    %v180 = vlaneseq
    %v181 = vshrl.u32 %v180, 7
    %v182 = vsub.s32 0, %v181
    %v183 = vrot.slane %v178, %v182
    %v184 = vlaneseq
    %v185 = vshrl.u32 %v184, 7
    %v186 = vsub.s32 1, %v185
    %v187 = vrot.slane %v178, %v186
    %v188 = vlaneseq
    %v189 = vshrl.u32 %v188, 7
    %v190 = vsub.s32 2, %v189
    %v191 = vrot.slane %v178, %v190
    %v192 = vlaneseq
    %v193 = vshrl.u32 %v192, 7
    %v194 = vsub.s32 3, %v193
    %v195 = vrot.slane %v178, %v194
    %v202 = vunpack.c.l.b16 %v172
    %v203 = vunpack.c.l.b16 %v173
    %v204 = vpack.c.b16 %v203, %v202
    %v209 = vunpack.c.l.b16 %v174
    %v210 = vunpack.c.h.b16 %v174
    %v211 = vunpack.c.l.b16 %v175
    %v212 = vunpack.c.h.b16 %v175
    %v213 = vunpack.c.l.b16 %v176
    %v214 = vunpack.c.h.b16 %v176
    %v215 = vunpack.c.l.b16 %v177
    %v216 = vunpack.c.h.b16 %v177
    %v217 = vpack.c.b16 %v213, %v209
    %v218 = vpack.c.b16 %v214, %v210
    %v219 = vpack.c.b16 %v215, %v211
    %v220 = vpack.c.b16 %v216, %v212
    %vm225 = vcmask 130048
    %v227 = vsel %vm225, %v204, 0
    %229 = vmatprep.subr.bf16.mxu0 0
    %230 = vmatpush1.bf16.msra.mxu0 0
    %231 = vmatprep.subr.bf16.mxu0 0
    %232 = vmatpush1.bf16.msra.mxu0 0
    %233 = vmatprep.subr.bf16.mxu0 0
    %234 = vmatpush1.bf16.msra.mxu0 0
    %235 = vmatprep.subr.bf16.mxu0 0
    %236 = vmatpush1.bf16.msra.mxu0 0
    %237 = vmatprep.subr.bf16.mxu0 0
    %238 = vmatpush1.bf16.msra.mxu0 0
    %239 = vmatprep.subr.bf16.mxu0 0
    %240 = vmatpush1.bf16.msra.mxu0 0
    %241 = vmatprep.subr.bf16.mxu0 0
    %242 = vmatpush1.bf16.msra.mxu0 0
    %243 = vmatprep.subr.bf16.mxu0 %v218
    %244 = vmatpush1.bf16.msra.mxu0 %v217
    %245 = vmatprep.subr.bf16.mxu0 0
    %246 = vmatpush2.bf16.msra.mxu0 0
    %247 = vmatprep.subr.bf16.mxu0 0
    %248 = vmatpush2.bf16.msra.mxu0 0
    %249 = vmatprep.subr.bf16.mxu0 0
    %250 = vmatpush2.bf16.msra.mxu0 0
    %251 = vmatprep.subr.bf16.mxu0 0
    %252 = vmatpush2.bf16.msra.mxu0 0
    %253 = vmatprep.subr.bf16.mxu0 0
    %254 = vmatpush2.bf16.msra.mxu0 0
    %255 = vmatprep.subr.bf16.mxu0 0
    %256 = vmatpush2.bf16.msra.mxu0 0
    %257 = vmatprep.subr.bf16.mxu0 0
    %258 = vmatpush2.bf16.msra.mxu0 0
    %259 = vmatprep.subr.bf16.mxu0 0
    %260 = vmatpush2.bf16.msra.mxu0 0
    %261 = vmatprep.mubr.bf16.mxu0 0
    %262 = vmatmul.mubr.bf16.gmra.mxu0 %v227
    %v263 = vpop.f32.mrf.mxu0
    %v264 = vadd.f32 %v183, %v263
    %v265 = vpop.f32.mrf.mxu0
    %v266 = vadd.f32 %v187, %v265
    %v267 = vpop.f32.mrf.mxu0
    %v268 = vadd.f32 %v183, %v267
    %v269 = vpop.f32.mrf.mxu0
    %v270 = vadd.f32 %v187, %v269
    %271 = vdwg.mxu0
    %272 = vmatprep.subr.bf16.mxu0 0
    %273 = vmatpush1.bf16.msra.mxu0 0
    %274 = vmatprep.subr.bf16.mxu0 0
    %275 = vmatpush1.bf16.msra.mxu0 0
    %276 = vmatprep.subr.bf16.mxu0 0
    %277 = vmatpush1.bf16.msra.mxu0 0
    %278 = vmatprep.subr.bf16.mxu0 0
    %279 = vmatpush1.bf16.msra.mxu0 0
    %280 = vmatprep.subr.bf16.mxu0 0
    %281 = vmatpush1.bf16.msra.mxu0 0
    %282 = vmatprep.subr.bf16.mxu0 0
    %283 = vmatpush1.bf16.msra.mxu0 0
    %284 = vmatprep.subr.bf16.mxu0 0
    %285 = vmatpush1.bf16.msra.mxu0 0
    %286 = vmatprep.subr.bf16.mxu0 %v220
    %287 = vmatpush1.bf16.msra.mxu0 %v219
    %288 = vmatprep.subr.bf16.mxu0 0
    %289 = vmatpush2.bf16.msra.mxu0 0
    %290 = vmatprep.subr.bf16.mxu0 0
    %291 = vmatpush2.bf16.msra.mxu0 0
    %292 = vmatprep.subr.bf16.mxu0 0
    %293 = vmatpush2.bf16.msra.mxu0 0
    %294 = vmatprep.subr.bf16.mxu0 0
    %295 = vmatpush2.bf16.msra.mxu0 0
    %296 = vmatprep.subr.bf16.mxu0 0
    %297 = vmatpush2.bf16.msra.mxu0 0
    %298 = vmatprep.subr.bf16.mxu0 0
    %299 = vmatpush2.bf16.msra.mxu0 0
    %300 = vmatprep.subr.bf16.mxu0 0
    %301 = vmatpush2.bf16.msra.mxu0 0
    %302 = vmatprep.subr.bf16.mxu0 0
    %303 = vmatpush2.bf16.msra.mxu0 0
    %304 = vmatprep.mubr.bf16.mxu0 0
    %305 = vmatmul.mubr.bf16.gmra.mxu0 %v227
    %v306 = vpop.f32.mrf.mxu0
    %v307 = vadd.f32 %v191, %v306
    %v308 = vpop.f32.mrf.mxu0
    %v309 = vadd.f32 %v195, %v308
    %v310 = vpop.f32.mrf.mxu0
    %v311 = vadd.f32 %v191, %v310
    %v312 = vpop.f32.mrf.mxu0
    %v313 = vadd.f32 %v195, %v312
    %314 = vdwg.mxu0
    %v316 = vlaneseq
    %v317 = vshrl.u32 %v316, 7
    %v318 = vsub.s32 0, %v317
    %v319 = vrot.slane %v171, %v318
    %v320 = vlaneseq
    %v321 = vshrl.u32 %v320, 7
    %v322 = vsub.s32 1, %v321
    %v323 = vrot.slane %v171, %v322
    %v324 = vlaneseq
    %v325 = vshrl.u32 %v324, 7
    %v326 = vsub.s32 2, %v325
    %v327 = vrot.slane %v171, %v326
    %v328 = vlaneseq
    %v329 = vshrl.u32 %v328, 7
    %v330 = vsub.s32 3, %v329
    %v331 = vrot.slane %v171, %v330
    %v368 = vunpack.c.l.b16 %v139
    %v369 = vunpack.c.h.b16 %v139
    %v370 = vunpack.c.l.b16 %v140
    %v371 = vunpack.c.h.b16 %v140
    %v372 = vunpack.c.l.b16 %v141
    %v373 = vunpack.c.h.b16 %v141
    %v374 = vunpack.c.l.b16 %v142
    %v375 = vunpack.c.h.b16 %v142
    %v376 = vunpack.c.l.b16 %v143
    %v377 = vunpack.c.h.b16 %v143
    %v378 = vunpack.c.l.b16 %v144
    %v379 = vunpack.c.h.b16 %v144
    %v380 = vunpack.c.l.b16 %v145
    %v381 = vunpack.c.h.b16 %v145
    %v382 = vunpack.c.l.b16 %v146
    %v383 = vunpack.c.h.b16 %v146
    %v384 = vunpack.c.l.b16 %v147
    %v385 = vunpack.c.h.b16 %v147
    %v386 = vunpack.c.l.b16 %v148
    %v387 = vunpack.c.h.b16 %v148
    %v388 = vunpack.c.l.b16 %v149
    %v389 = vunpack.c.h.b16 %v149
    %v390 = vunpack.c.l.b16 %v150
    %v391 = vunpack.c.h.b16 %v150
    %v392 = vunpack.c.l.b16 %v151
    %v393 = vunpack.c.h.b16 %v151
    %v394 = vunpack.c.l.b16 %v152
    %v395 = vunpack.c.h.b16 %v152
    %v396 = vunpack.c.l.b16 %v153
    %v397 = vunpack.c.h.b16 %v153
    %v398 = vunpack.c.l.b16 %v154
    %v399 = vunpack.c.h.b16 %v154
    %v400 = vunpack.c.l.b16 %v155
    %v401 = vunpack.c.h.b16 %v155
    %v402 = vunpack.c.l.b16 %v156
    %v403 = vunpack.c.h.b16 %v156
    %v404 = vunpack.c.l.b16 %v157
    %v405 = vunpack.c.h.b16 %v157
    %v406 = vunpack.c.l.b16 %v158
    %v407 = vunpack.c.h.b16 %v158
    %v408 = vunpack.c.l.b16 %v159
    %v409 = vunpack.c.h.b16 %v159
    %v410 = vunpack.c.l.b16 %v160
    %v411 = vunpack.c.h.b16 %v160
    %v412 = vunpack.c.l.b16 %v161
    %v413 = vunpack.c.h.b16 %v161
    %v414 = vunpack.c.l.b16 %v162
    %v415 = vunpack.c.h.b16 %v162
    %v416 = vunpack.c.l.b16 %v163
    %v417 = vunpack.c.h.b16 %v163
    %v418 = vunpack.c.l.b16 %v164
    %v419 = vunpack.c.h.b16 %v164
    %v420 = vunpack.c.l.b16 %v165
    %v421 = vunpack.c.h.b16 %v165
    %v422 = vunpack.c.l.b16 %v166
    %v423 = vunpack.c.h.b16 %v166
    %v424 = vunpack.c.l.b16 %v167
    %v425 = vunpack.c.h.b16 %v167
    %v426 = vunpack.c.l.b16 %v168
    %v427 = vunpack.c.h.b16 %v168
    %v428 = vunpack.c.l.b16 %v169
    %v429 = vunpack.c.h.b16 %v169
    %v430 = vunpack.c.l.b16 %v170
    %v431 = vunpack.c.h.b16 %v170
    %v432 = vpack.c.b16 %v372, %v368
    %v433 = vpack.c.b16 %v373, %v369
    %v434 = vpack.c.b16 %v374, %v370
    %v435 = vpack.c.b16 %v375, %v371
    %v436 = vpack.c.b16 %v380, %v376
    %v437 = vpack.c.b16 %v381, %v377
    %v438 = vpack.c.b16 %v382, %v378
    %v439 = vpack.c.b16 %v383, %v379
    %v440 = vpack.c.b16 %v388, %v384
    %v441 = vpack.c.b16 %v389, %v385
    %v442 = vpack.c.b16 %v390, %v386
    %v443 = vpack.c.b16 %v391, %v387
    %v444 = vpack.c.b16 %v396, %v392
    %v445 = vpack.c.b16 %v397, %v393
    %v446 = vpack.c.b16 %v398, %v394
    %v447 = vpack.c.b16 %v399, %v395
    %v448 = vpack.c.b16 %v404, %v400
    %v449 = vpack.c.b16 %v405, %v401
    %v450 = vpack.c.b16 %v406, %v402
    %v451 = vpack.c.b16 %v407, %v403
    %v452 = vpack.c.b16 %v412, %v408
    %v453 = vpack.c.b16 %v413, %v409
    %v454 = vpack.c.b16 %v414, %v410
    %v455 = vpack.c.b16 %v415, %v411
    %v456 = vpack.c.b16 %v420, %v416
    %v457 = vpack.c.b16 %v421, %v417
    %v458 = vpack.c.b16 %v422, %v418
    %v459 = vpack.c.b16 %v423, %v419
    %v460 = vpack.c.b16 %v428, %v424
    %v461 = vpack.c.b16 %v429, %v425
    %v462 = vpack.c.b16 %v430, %v426
    %v463 = vpack.c.b16 %v431, %v427
    %496 = vmatprep.subr.bf16.mxu0 %v461
    %497 = vmatpush1.bf16.msra.mxu0 %v460
    %498 = vmatprep.subr.bf16.mxu0 %v457
    %499 = vmatpush1.bf16.msra.mxu0 %v456
    %500 = vmatprep.subr.bf16.mxu0 %v453
    %501 = vmatpush1.bf16.msra.mxu0 %v452
    %502 = vmatprep.subr.bf16.mxu0 %v449
    %503 = vmatpush1.bf16.msra.mxu0 %v448
    %504 = vmatprep.subr.bf16.mxu0 %v445
    %505 = vmatpush1.bf16.msra.mxu0 %v444
    %506 = vmatprep.subr.bf16.mxu0 %v441
    %507 = vmatpush1.bf16.msra.mxu0 %v440
    %508 = vmatprep.subr.bf16.mxu0 %v437
    %509 = vmatpush1.bf16.msra.mxu0 %v436
    %510 = vmatprep.subr.bf16.mxu0 %v433
    %511 = vmatpush1.bf16.msra.mxu0 %v432
    %512 = vmatprep.subr.bf16.mxu0 0
    %513 = vmatpush2.bf16.msra.mxu0 0
    %514 = vmatprep.subr.bf16.mxu0 0
    %515 = vmatpush2.bf16.msra.mxu0 0
    %516 = vmatprep.subr.bf16.mxu0 0
    %517 = vmatpush2.bf16.msra.mxu0 0
    %518 = vmatprep.subr.bf16.mxu0 0
    %519 = vmatpush2.bf16.msra.mxu0 0
    %520 = vmatprep.subr.bf16.mxu0 0
    %521 = vmatpush2.bf16.msra.mxu0 0
    %522 = vmatprep.subr.bf16.mxu0 0
    %523 = vmatpush2.bf16.msra.mxu0 0
    %524 = vmatprep.subr.bf16.mxu0 0
    %525 = vmatpush2.bf16.msra.mxu0 0
    %526 = vmatprep.subr.bf16.mxu0 0
    %527 = vmatpush2.bf16.msra.mxu0 0
    %528 = vmatprep.mubr.bf16.mxu0 0
    %529 = vmatmul.mubr.bf16.gmra.mxu0 0
    %v530 = vpop.f32.mrf.mxu0
    %v531 = vadd.f32 %v319, %v530
    %v532 = vpop.f32.mrf.mxu0
    %v533 = vadd.f32 %v323, %v532
    %v534 = vpop.f32.mrf.mxu0
    %v535 = vpop.f32.mrf.mxu0
    %536 = vdwg.mxu0
    %537 = vmatprep.subr.bf16.mxu0 %v463
    %538 = vmatpush1.bf16.msra.mxu0 %v462
    %539 = vmatprep.subr.bf16.mxu0 %v459
    %540 = vmatpush1.bf16.msra.mxu0 %v458
    %541 = vmatprep.subr.bf16.mxu0 %v455
    %542 = vmatpush1.bf16.msra.mxu0 %v454
    %543 = vmatprep.subr.bf16.mxu0 %v451
    %544 = vmatpush1.bf16.msra.mxu0 %v450
    %545 = vmatprep.subr.bf16.mxu0 %v447
    %546 = vmatpush1.bf16.msra.mxu0 %v446
    %547 = vmatprep.subr.bf16.mxu0 %v443
    %548 = vmatpush1.bf16.msra.mxu0 %v442
    %549 = vmatprep.subr.bf16.mxu0 %v439
    %550 = vmatpush1.bf16.msra.mxu0 %v438
    %551 = vmatprep.subr.bf16.mxu0 %v435
    %552 = vmatpush1.bf16.msra.mxu0 %v434
    %553 = vmatprep.subr.bf16.mxu0 0
    %554 = vmatpush2.bf16.msra.mxu0 0
    %555 = vmatprep.subr.bf16.mxu0 0
    %556 = vmatpush2.bf16.msra.mxu0 0
    %557 = vmatprep.subr.bf16.mxu0 0
    %558 = vmatpush2.bf16.msra.mxu0 0
    %559 = vmatprep.subr.bf16.mxu0 0
    %560 = vmatpush2.bf16.msra.mxu0 0
    %561 = vmatprep.subr.bf16.mxu0 0
    %562 = vmatpush2.bf16.msra.mxu0 0
    %563 = vmatprep.subr.bf16.mxu0 0
    %564 = vmatpush2.bf16.msra.mxu0 0
    %565 = vmatprep.subr.bf16.mxu0 0
    %566 = vmatpush2.bf16.msra.mxu0 0
    %567 = vmatprep.subr.bf16.mxu0 0
    %568 = vmatpush2.bf16.msra.mxu0 0
    %569 = vmatprep.mubr.bf16.mxu0 0
    %570 = vmatmul.mubr.bf16.gmra.mxu0 0
    %v571 = vpop.f32.mrf.mxu0
    %v572 = vadd.f32 %v327, %v571
    %v573 = vpop.f32.mrf.mxu0
    %v574 = vadd.f32 %v331, %v573
    %v575 = vpop.f32.mrf.mxu0
    %v576 = vpop.f32.mrf.mxu0
    %577 = vdwg.mxu0
    %v610 = vunpack.c.l.b16 %v75
    %v611 = vunpack.c.h.b16 %v75
    %v612 = vunpack.c.l.b16 %v76
    %v613 = vunpack.c.h.b16 %v76
    %v614 = vunpack.c.l.b16 %v77
    %v615 = vunpack.c.h.b16 %v77
    %v616 = vunpack.c.l.b16 %v78
    %v617 = vunpack.c.h.b16 %v78
    %v618 = vunpack.c.l.b16 %v79
    %v619 = vunpack.c.h.b16 %v79
    %v620 = vunpack.c.l.b16 %v80
    %v621 = vunpack.c.h.b16 %v80
    %v622 = vunpack.c.l.b16 %v81
    %v623 = vunpack.c.h.b16 %v81
    %v624 = vunpack.c.l.b16 %v82
    %v625 = vunpack.c.h.b16 %v82
    %v626 = vunpack.c.l.b16 %v83
    %v627 = vunpack.c.h.b16 %v83
    %v628 = vunpack.c.l.b16 %v84
    %v629 = vunpack.c.h.b16 %v84
    %v630 = vunpack.c.l.b16 %v85
    %v631 = vunpack.c.h.b16 %v85
    %v632 = vunpack.c.l.b16 %v86
    %v633 = vunpack.c.h.b16 %v86
    %v634 = vunpack.c.l.b16 %v87
    %v635 = vunpack.c.h.b16 %v87
    %v636 = vunpack.c.l.b16 %v88
    %v637 = vunpack.c.h.b16 %v88
    %v638 = vunpack.c.l.b16 %v89
    %v639 = vunpack.c.h.b16 %v89
    %v640 = vunpack.c.l.b16 %v90
    %v641 = vunpack.c.h.b16 %v90
    %v642 = vunpack.c.l.b16 %v91
    %v643 = vunpack.c.h.b16 %v91
    %v644 = vunpack.c.l.b16 %v92
    %v645 = vunpack.c.h.b16 %v92
    %v646 = vunpack.c.l.b16 %v93
    %v647 = vunpack.c.h.b16 %v93
    %v648 = vunpack.c.l.b16 %v94
    %v649 = vunpack.c.h.b16 %v94
    %v650 = vunpack.c.l.b16 %v95
    %v651 = vunpack.c.h.b16 %v95
    %v652 = vunpack.c.l.b16 %v96
    %v653 = vunpack.c.h.b16 %v96
    %v654 = vunpack.c.l.b16 %v97
    %v655 = vunpack.c.h.b16 %v97
    %v656 = vunpack.c.l.b16 %v98
    %v657 = vunpack.c.h.b16 %v98
    %v658 = vunpack.c.l.b16 %v99
    %v659 = vunpack.c.h.b16 %v99
    %v660 = vunpack.c.l.b16 %v100
    %v661 = vunpack.c.h.b16 %v100
    %v662 = vunpack.c.l.b16 %v101
    %v663 = vunpack.c.h.b16 %v101
    %v664 = vunpack.c.l.b16 %v102
    %v665 = vunpack.c.h.b16 %v102
    %v666 = vunpack.c.l.b16 %v103
    %v667 = vunpack.c.h.b16 %v103
    %v668 = vunpack.c.l.b16 %v104
    %v669 = vunpack.c.h.b16 %v104
    %v670 = vunpack.c.l.b16 %v105
    %v671 = vunpack.c.h.b16 %v105
    %v672 = vunpack.c.l.b16 %v106
    %v673 = vunpack.c.h.b16 %v106
    %v674 = vpack.c.b16 %v614, %v610
    %v675 = vpack.c.b16 %v615, %v611
    %v676 = vpack.c.b16 %v616, %v612
    %v677 = vpack.c.b16 %v617, %v613
    %v678 = vpack.c.b16 %v622, %v618
    %v679 = vpack.c.b16 %v623, %v619
    %v680 = vpack.c.b16 %v624, %v620
    %v681 = vpack.c.b16 %v625, %v621
    %v682 = vpack.c.b16 %v630, %v626
    %v683 = vpack.c.b16 %v631, %v627
    %v684 = vpack.c.b16 %v632, %v628
    %v685 = vpack.c.b16 %v633, %v629
    %v686 = vpack.c.b16 %v638, %v634
    %v687 = vpack.c.b16 %v639, %v635
    %v688 = vpack.c.b16 %v640, %v636
    %v689 = vpack.c.b16 %v641, %v637
    %v690 = vpack.c.b16 %v646, %v642
    %v691 = vpack.c.b16 %v647, %v643
    %v692 = vpack.c.b16 %v648, %v644
    %v693 = vpack.c.b16 %v649, %v645
    %v694 = vpack.c.b16 %v654, %v650
    %v695 = vpack.c.b16 %v655, %v651
    %v696 = vpack.c.b16 %v656, %v652
    %v697 = vpack.c.b16 %v657, %v653
    %v698 = vpack.c.b16 %v662, %v658
    %v699 = vpack.c.b16 %v663, %v659
    %v700 = vpack.c.b16 %v664, %v660
    %v701 = vpack.c.b16 %v665, %v661
    %v702 = vpack.c.b16 %v670, %v666
    %v703 = vpack.c.b16 %v671, %v667
    %v704 = vpack.c.b16 %v672, %v668
    %v705 = vpack.c.b16 %v673, %v669
    %738 = vmatprep.subr.bf16.mxu0 %v703
    %739 = vmatpush1.bf16.msra.mxu0 %v702
    %740 = vmatprep.subr.bf16.mxu0 %v699
    %741 = vmatpush1.bf16.msra.mxu0 %v698
    %742 = vmatprep.subr.bf16.mxu0 %v695
    %743 = vmatpush1.bf16.msra.mxu0 %v694
    %744 = vmatprep.subr.bf16.mxu0 %v691
    %745 = vmatpush1.bf16.msra.mxu0 %v690
    %746 = vmatprep.subr.bf16.mxu0 %v687
    %747 = vmatpush1.bf16.msra.mxu0 %v686
    %748 = vmatprep.subr.bf16.mxu0 %v683
    %749 = vmatpush1.bf16.msra.mxu0 %v682
    %750 = vmatprep.subr.bf16.mxu0 %v679
    %751 = vmatpush1.bf16.msra.mxu0 %v678
    %752 = vmatprep.subr.bf16.mxu0 %v675
    %753 = vmatpush1.bf16.msra.mxu0 %v674
    %754 = vmatprep.subr.bf16.mxu0 0
    %755 = vmatpush2.bf16.msra.mxu0 0
    %756 = vmatprep.subr.bf16.mxu0 0
    %757 = vmatpush2.bf16.msra.mxu0 0
    %758 = vmatprep.subr.bf16.mxu0 0
    %759 = vmatpush2.bf16.msra.mxu0 0
    %760 = vmatprep.subr.bf16.mxu0 0
    %761 = vmatpush2.bf16.msra.mxu0 0
    %762 = vmatprep.subr.bf16.mxu0 0
    %763 = vmatpush2.bf16.msra.mxu0 0
    %764 = vmatprep.subr.bf16.mxu0 0
    %765 = vmatpush2.bf16.msra.mxu0 0
    %766 = vmatprep.subr.bf16.mxu0 0
    %767 = vmatpush2.bf16.msra.mxu0 0
    %768 = vmatprep.subr.bf16.mxu0 0
    %769 = vmatpush2.bf16.msra.mxu0 0
    %770 = vmatprep.mubr.bf16.mxu0 0
    %771 = vmatmul.mubr.bf16.gmra.mxu0 0
    %v772 = vpop.f32.mrf.mxu0
    %v773 = vadd.f32 0.0, %v772
    %v774 = vpop.f32.mrf.mxu0
    %v775 = vadd.f32 0.0, %v774
    %v776 = vpop.f32.mrf.mxu0
    %v777 = vpop.f32.mrf.mxu0
    %778 = vdwg.mxu0
    %779 = vmatprep.subr.bf16.mxu0 %v705
    %780 = vmatpush1.bf16.msra.mxu0 %v704
    %781 = vmatprep.subr.bf16.mxu0 %v701
    %782 = vmatpush1.bf16.msra.mxu0 %v700
    %783 = vmatprep.subr.bf16.mxu0 %v697
    %784 = vmatpush1.bf16.msra.mxu0 %v696
    %785 = vmatprep.subr.bf16.mxu0 %v693
    %786 = vmatpush1.bf16.msra.mxu0 %v692
    %787 = vmatprep.subr.bf16.mxu0 %v689
    %788 = vmatpush1.bf16.msra.mxu0 %v688
    %789 = vmatprep.subr.bf16.mxu0 %v685
    %790 = vmatpush1.bf16.msra.mxu0 %v684
    %791 = vmatprep.subr.bf16.mxu0 %v681
    %792 = vmatpush1.bf16.msra.mxu0 %v680
    %793 = vmatprep.subr.bf16.mxu0 %v677
    %794 = vmatpush1.bf16.msra.mxu0 %v676
    %795 = vmatprep.subr.bf16.mxu0 0
    %796 = vmatpush2.bf16.msra.mxu0 0
    %797 = vmatprep.subr.bf16.mxu0 0
    %798 = vmatpush2.bf16.msra.mxu0 0
    %799 = vmatprep.subr.bf16.mxu0 0
    %800 = vmatpush2.bf16.msra.mxu0 0
    %801 = vmatprep.subr.bf16.mxu0 0
    %802 = vmatpush2.bf16.msra.mxu0 0
    %803 = vmatprep.subr.bf16.mxu0 0
    %804 = vmatpush2.bf16.msra.mxu0 0
    %805 = vmatprep.subr.bf16.mxu0 0
    %806 = vmatpush2.bf16.msra.mxu0 0
    %807 = vmatprep.subr.bf16.mxu0 0
    %808 = vmatpush2.bf16.msra.mxu0 0
    %809 = vmatprep.subr.bf16.mxu0 0
    %810 = vmatpush2.bf16.msra.mxu0 0
    %811 = vmatprep.mubr.bf16.mxu0 0
    %812 = vmatmul.mubr.bf16.gmra.mxu0 0
    %v813 = vpop.f32.mrf.mxu0
    %v814 = vadd.f32 0.0, %v813
    %v815 = vpop.f32.mrf.mxu0
    %v816 = vadd.f32 0.0, %v815
    %v817 = vpop.f32.mrf.mxu0
    %v818 = vpop.f32.mrf.mxu0
    %819 = vdwg.mxu0
    %v820 = vadd.f32 %v264, %v773
    %v821 = vadd.f32 %v266, %v775
    %v822 = vadd.f32 %v307, %v814
    %v823 = vadd.f32 %v309, %v816
    %v824 = vxor.u32 %v820, 2147483648
    %v825 = vxor.u32 %v821, 2147483648
    %v826 = vxor.u32 %v822, 2147483648
    %v827 = vmul.f32 %v824, 1.442695
    %v828 = vpow.pop %v827
    %v829 = vmul.f32 %v825, 1.442695
    %v830 = vpow.pop %v829
    %v831 = vmul.f32 %v826, 1.442695
    %v832 = vpow.pop %v831
    %v833 = vadd.f32 %v828, 1.0
    %v834 = vadd.f32 %v830, 1.0
    %v835 = vadd.f32 %v832, 1.0
    %v836 = vrcp.pop %v833
    %v837 = vmul.f32 1.0, %v836
    %v838 = vrcp.pop %v834
    %v839 = vmul.f32 1.0, %v838
    %v840 = vrcp.pop %v835
    %v841 = vmul.f32 1.0, %v840
    %v842 = vtanh.pop %v823
    %v843 = vmul.f32 %v839, 0.0
    %v844 = vmul.f32 %v837, %v842
    %v845 = vadd.f32 %v843, %v844
    %v846 = vtanh.pop %v845
    %v847 = vmul.f32 %v841, %v846
    %v848 = vpack.c.bf16 %v847, %v847
    %v881 = vunpack.c.l.b16 %v107
    %v882 = vunpack.c.h.b16 %v107
    %v883 = vunpack.c.l.b16 %v108
    %v884 = vunpack.c.h.b16 %v108
    %v885 = vunpack.c.l.b16 %v109
    %v886 = vunpack.c.h.b16 %v109
    %v887 = vunpack.c.l.b16 %v110
    %v888 = vunpack.c.h.b16 %v110
    %v889 = vunpack.c.l.b16 %v111
    %v890 = vunpack.c.h.b16 %v111
    %v891 = vunpack.c.l.b16 %v112
    %v892 = vunpack.c.h.b16 %v112
    %v893 = vunpack.c.l.b16 %v113
    %v894 = vunpack.c.h.b16 %v113
    %v895 = vunpack.c.l.b16 %v114
    %v896 = vunpack.c.h.b16 %v114
    %v897 = vunpack.c.l.b16 %v115
    %v898 = vunpack.c.h.b16 %v115
    %v899 = vunpack.c.l.b16 %v116
    %v900 = vunpack.c.h.b16 %v116
    %v901 = vunpack.c.l.b16 %v117
    %v902 = vunpack.c.h.b16 %v117
    %v903 = vunpack.c.l.b16 %v118
    %v904 = vunpack.c.h.b16 %v118
    %v905 = vunpack.c.l.b16 %v119
    %v906 = vunpack.c.h.b16 %v119
    %v907 = vunpack.c.l.b16 %v120
    %v908 = vunpack.c.h.b16 %v120
    %v909 = vunpack.c.l.b16 %v121
    %v910 = vunpack.c.h.b16 %v121
    %v911 = vunpack.c.l.b16 %v122
    %v912 = vunpack.c.h.b16 %v122
    %v913 = vunpack.c.l.b16 %v123
    %v914 = vunpack.c.h.b16 %v123
    %v915 = vunpack.c.l.b16 %v124
    %v916 = vunpack.c.h.b16 %v124
    %v917 = vunpack.c.l.b16 %v125
    %v918 = vunpack.c.h.b16 %v125
    %v919 = vunpack.c.l.b16 %v126
    %v920 = vunpack.c.h.b16 %v126
    %v921 = vunpack.c.l.b16 %v127
    %v922 = vunpack.c.h.b16 %v127
    %v923 = vunpack.c.l.b16 %v128
    %v924 = vunpack.c.h.b16 %v128
    %v925 = vunpack.c.l.b16 %v129
    %v926 = vunpack.c.h.b16 %v129
    %v927 = vunpack.c.l.b16 %v130
    %v928 = vunpack.c.h.b16 %v130
    %v929 = vunpack.c.l.b16 %v131
    %v930 = vunpack.c.h.b16 %v131
    %v931 = vunpack.c.l.b16 %v132
    %v932 = vunpack.c.h.b16 %v132
    %v933 = vunpack.c.l.b16 %v133
    %v934 = vunpack.c.h.b16 %v133
    %v935 = vunpack.c.l.b16 %v134
    %v936 = vunpack.c.h.b16 %v134
    %v937 = vunpack.c.l.b16 %v135
    %v938 = vunpack.c.h.b16 %v135
    %v939 = vunpack.c.l.b16 %v136
    %v940 = vunpack.c.h.b16 %v136
    %v941 = vunpack.c.l.b16 %v137
    %v942 = vunpack.c.h.b16 %v137
    %v943 = vunpack.c.l.b16 %v138
    %v944 = vunpack.c.h.b16 %v138
    %v945 = vpack.c.b16 %v885, %v881
    %v946 = vpack.c.b16 %v886, %v882
    %v947 = vpack.c.b16 %v887, %v883
    %v948 = vpack.c.b16 %v888, %v884
    %v949 = vpack.c.b16 %v893, %v889
    %v950 = vpack.c.b16 %v894, %v890
    %v951 = vpack.c.b16 %v895, %v891
    %v952 = vpack.c.b16 %v896, %v892
    %v953 = vpack.c.b16 %v901, %v897
    %v954 = vpack.c.b16 %v902, %v898
    %v955 = vpack.c.b16 %v903, %v899
    %v956 = vpack.c.b16 %v904, %v900
    %v957 = vpack.c.b16 %v909, %v905
    %v958 = vpack.c.b16 %v910, %v906
    %v959 = vpack.c.b16 %v911, %v907
    %v960 = vpack.c.b16 %v912, %v908
    %v961 = vpack.c.b16 %v917, %v913
    %v962 = vpack.c.b16 %v918, %v914
    %v963 = vpack.c.b16 %v919, %v915
    %v964 = vpack.c.b16 %v920, %v916
    %v965 = vpack.c.b16 %v925, %v921
    %v966 = vpack.c.b16 %v926, %v922
    %v967 = vpack.c.b16 %v927, %v923
    %v968 = vpack.c.b16 %v928, %v924
    %v969 = vpack.c.b16 %v933, %v929
    %v970 = vpack.c.b16 %v934, %v930
    %v971 = vpack.c.b16 %v935, %v931
    %v972 = vpack.c.b16 %v936, %v932
    %v973 = vpack.c.b16 %v941, %v937
    %v974 = vpack.c.b16 %v942, %v938
    %v975 = vpack.c.b16 %v943, %v939
    %v976 = vpack.c.b16 %v944, %v940
    %1009 = vmatprep.subr.bf16.mxu0 %v974
    %1010 = vmatpush1.bf16.msra.mxu0 %v973
    %1011 = vmatprep.subr.bf16.mxu0 %v970
    %1012 = vmatpush1.bf16.msra.mxu0 %v969
    %1013 = vmatprep.subr.bf16.mxu0 %v966
    %1014 = vmatpush1.bf16.msra.mxu0 %v965
    %1015 = vmatprep.subr.bf16.mxu0 %v962
    %1016 = vmatpush1.bf16.msra.mxu0 %v961
    %1017 = vmatprep.subr.bf16.mxu0 %v958
    %1018 = vmatpush1.bf16.msra.mxu0 %v957
    %1019 = vmatprep.subr.bf16.mxu0 %v954
    %1020 = vmatpush1.bf16.msra.mxu0 %v953
    %1021 = vmatprep.subr.bf16.mxu0 %v950
    %1022 = vmatpush1.bf16.msra.mxu0 %v949
    %1023 = vmatprep.subr.bf16.mxu0 %v946
    %1024 = vmatpush1.bf16.msra.mxu0 %v945
    %1025 = vmatprep.subr.bf16.mxu0 0
    %1026 = vmatpush2.bf16.msra.mxu0 0
    %1027 = vmatprep.subr.bf16.mxu0 0
    %1028 = vmatpush2.bf16.msra.mxu0 0
    %1029 = vmatprep.subr.bf16.mxu0 0
    %1030 = vmatpush2.bf16.msra.mxu0 0
    %1031 = vmatprep.subr.bf16.mxu0 0
    %1032 = vmatpush2.bf16.msra.mxu0 0
    %1033 = vmatprep.subr.bf16.mxu0 0
    %1034 = vmatpush2.bf16.msra.mxu0 0
    %1035 = vmatprep.subr.bf16.mxu0 0
    %1036 = vmatpush2.bf16.msra.mxu0 0
    %1037 = vmatprep.subr.bf16.mxu0 0
    %1038 = vmatpush2.bf16.msra.mxu0 0
    %1039 = vmatprep.subr.bf16.mxu0 0
    %1040 = vmatpush2.bf16.msra.mxu0 0
    %1041 = vmatprep.mubr.bf16.mxu0 0
    %1042 = vmatmul.mubr.bf16.gmra.mxu0 %v848
    %v1043 = vpop.f32.mrf.mxu0
    %v1044 = vadd.f32 0.0, %v1043
    %v1045 = vpop.f32.mrf.mxu0
    %v1046 = vadd.f32 0.0, %v1045
    %v1047 = vpop.f32.mrf.mxu0
    %v1048 = vpop.f32.mrf.mxu0
    %1049 = vdwg.mxu0
    %1050 = vmatprep.subr.bf16.mxu0 %v976
    %1051 = vmatpush1.bf16.msra.mxu0 %v975
    %1052 = vmatprep.subr.bf16.mxu0 %v972
    %1053 = vmatpush1.bf16.msra.mxu0 %v971
    %1054 = vmatprep.subr.bf16.mxu0 %v968
    %1055 = vmatpush1.bf16.msra.mxu0 %v967
    %1056 = vmatprep.subr.bf16.mxu0 %v964
    %1057 = vmatpush1.bf16.msra.mxu0 %v963
    %1058 = vmatprep.subr.bf16.mxu0 %v960
    %1059 = vmatpush1.bf16.msra.mxu0 %v959
    %1060 = vmatprep.subr.bf16.mxu0 %v956
    %1061 = vmatpush1.bf16.msra.mxu0 %v955
    %1062 = vmatprep.subr.bf16.mxu0 %v952
    %1063 = vmatpush1.bf16.msra.mxu0 %v951
    %1064 = vmatprep.subr.bf16.mxu0 %v948
    %1065 = vmatpush1.bf16.msra.mxu0 %v947
    %1066 = vmatprep.subr.bf16.mxu0 0
    %1067 = vmatpush2.bf16.msra.mxu0 0
    %1068 = vmatprep.subr.bf16.mxu0 0
    %1069 = vmatpush2.bf16.msra.mxu0 0
    %1070 = vmatprep.subr.bf16.mxu0 0
    %1071 = vmatpush2.bf16.msra.mxu0 0
    %1072 = vmatprep.subr.bf16.mxu0 0
    %1073 = vmatpush2.bf16.msra.mxu0 0
    %1074 = vmatprep.subr.bf16.mxu0 0
    %1075 = vmatpush2.bf16.msra.mxu0 0
    %1076 = vmatprep.subr.bf16.mxu0 0
    %1077 = vmatpush2.bf16.msra.mxu0 0
    %1078 = vmatprep.subr.bf16.mxu0 0
    %1079 = vmatpush2.bf16.msra.mxu0 0
    %1080 = vmatprep.subr.bf16.mxu0 0
    %1081 = vmatpush2.bf16.msra.mxu0 0
    %1082 = vmatprep.mubr.bf16.mxu0 0
    %1083 = vmatmul.mubr.bf16.gmra.mxu0 %v848
    %v1084 = vpop.f32.mrf.mxu0
    %v1085 = vadd.f32 0.0, %v1084
    %v1086 = vpop.f32.mrf.mxu0
    %v1087 = vadd.f32 0.0, %v1086
    %v1088 = vpop.f32.mrf.mxu0
    %v1089 = vpop.f32.mrf.mxu0
    %1090 = vdwg.mxu0
    %v1091 = vadd.f32 %v531, %v1044
    %v1092 = vadd.f32 %v533, %v1046
    %v1093 = vadd.f32 %v572, %v1085
    %v1094 = vadd.f32 %v574, %v1087
    %v1095 = vxor.u32 %v1091, 2147483648
    %v1096 = vxor.u32 %v1092, 2147483648
    %v1097 = vxor.u32 %v1093, 2147483648
    %v1098 = vmul.f32 %v1095, 1.442695
    %v1099 = vpow.pop %v1098
    %v1100 = vmul.f32 %v1096, 1.442695
    %v1101 = vpow.pop %v1100
    %v1102 = vmul.f32 %v1097, 1.442695
    %v1103 = vpow.pop %v1102
    %v1104 = vadd.f32 %v1099, 1.0
    %v1105 = vadd.f32 %v1101, 1.0
    %v1106 = vadd.f32 %v1103, 1.0
    %v1107 = vrcp.pop %v1104
    %v1108 = vmul.f32 1.0, %v1107
    %v1109 = vrcp.pop %v1105
    %v1110 = vmul.f32 1.0, %v1109
    %v1111 = vrcp.pop %v1106
    %v1112 = vmul.f32 1.0, %v1111
    %v1113 = vtanh.pop %v1094
    %v1114 = vmul.f32 %v1110, 0.0
    %v1115 = vmul.f32 %v1108, %v1113
    %v1116 = vadd.f32 %v1114, %v1115
    %v1117 = vtanh.pop %v1116
    %v1118 = vmul.f32 %v1112, %v1117
    %v1119 = vpack.c.bf16 %v1118, %v1118
    %1120 = vmatprep.subr.bf16.mxu0 %v461
    %1121 = vmatpush1.bf16.msra.mxu0 %v460
    %1122 = vmatprep.subr.bf16.mxu0 %v457
    %1123 = vmatpush1.bf16.msra.mxu0 %v456
    %1124 = vmatprep.subr.bf16.mxu0 %v453
    %1125 = vmatpush1.bf16.msra.mxu0 %v452
    %1126 = vmatprep.subr.bf16.mxu0 %v449
    %1127 = vmatpush1.bf16.msra.mxu0 %v448
    %1128 = vmatprep.subr.bf16.mxu0 %v445
    %1129 = vmatpush1.bf16.msra.mxu0 %v444
    %1130 = vmatprep.subr.bf16.mxu0 %v441
    %1131 = vmatpush1.bf16.msra.mxu0 %v440
    %1132 = vmatprep.subr.bf16.mxu0 %v437
    %1133 = vmatpush1.bf16.msra.mxu0 %v436
    %1134 = vmatprep.subr.bf16.mxu0 %v433
    %1135 = vmatpush1.bf16.msra.mxu0 %v432
    %1136 = vmatprep.subr.bf16.mxu0 0
    %1137 = vmatpush2.bf16.msra.mxu0 0
    %1138 = vmatprep.subr.bf16.mxu0 0
    %1139 = vmatpush2.bf16.msra.mxu0 0
    %1140 = vmatprep.subr.bf16.mxu0 0
    %1141 = vmatpush2.bf16.msra.mxu0 0
    %1142 = vmatprep.subr.bf16.mxu0 0
    %1143 = vmatpush2.bf16.msra.mxu0 0
    %1144 = vmatprep.subr.bf16.mxu0 0
    %1145 = vmatpush2.bf16.msra.mxu0 0
    %1146 = vmatprep.subr.bf16.mxu0 0
    %1147 = vmatpush2.bf16.msra.mxu0 0
    %1148 = vmatprep.subr.bf16.mxu0 0
    %1149 = vmatpush2.bf16.msra.mxu0 0
    %1150 = vmatprep.subr.bf16.mxu0 0
    %1151 = vmatpush2.bf16.msra.mxu0 0
    %1152 = vmatprep.mubr.bf16.mxu0 0
    %1153 = vmatmul.mubr.bf16.gmra.mxu0 %v1119
    %v1154 = vpop.f32.mrf.mxu0
    %v1155 = vadd.f32 %v319, %v1154
    %v1156 = vpop.f32.mrf.mxu0
    %v1157 = vadd.f32 %v323, %v1156
    %v1158 = vpop.f32.mrf.mxu0
    %v1159 = vpop.f32.mrf.mxu0
    %1160 = vdwg.mxu0
    %1161 = vmatprep.subr.bf16.mxu0 %v463
    %1162 = vmatpush1.bf16.msra.mxu0 %v462
    %1163 = vmatprep.subr.bf16.mxu0 %v459
    %1164 = vmatpush1.bf16.msra.mxu0 %v458
    %1165 = vmatprep.subr.bf16.mxu0 %v455
    %1166 = vmatpush1.bf16.msra.mxu0 %v454
    %1167 = vmatprep.subr.bf16.mxu0 %v451
    %1168 = vmatpush1.bf16.msra.mxu0 %v450
    %1169 = vmatprep.subr.bf16.mxu0 %v447
    %1170 = vmatpush1.bf16.msra.mxu0 %v446
    %1171 = vmatprep.subr.bf16.mxu0 %v443
    %1172 = vmatpush1.bf16.msra.mxu0 %v442
    %1173 = vmatprep.subr.bf16.mxu0 %v439
    %1174 = vmatpush1.bf16.msra.mxu0 %v438
    %1175 = vmatprep.subr.bf16.mxu0 %v435
    %1176 = vmatpush1.bf16.msra.mxu0 %v434
    %1177 = vmatprep.subr.bf16.mxu0 0
    %1178 = vmatpush2.bf16.msra.mxu0 0
    %1179 = vmatprep.subr.bf16.mxu0 0
    %1180 = vmatpush2.bf16.msra.mxu0 0
    %1181 = vmatprep.subr.bf16.mxu0 0
    %1182 = vmatpush2.bf16.msra.mxu0 0
    %1183 = vmatprep.subr.bf16.mxu0 0
    %1184 = vmatpush2.bf16.msra.mxu0 0
    %1185 = vmatprep.subr.bf16.mxu0 0
    %1186 = vmatpush2.bf16.msra.mxu0 0
    %1187 = vmatprep.subr.bf16.mxu0 0
    %1188 = vmatpush2.bf16.msra.mxu0 0
    %1189 = vmatprep.subr.bf16.mxu0 0
    %1190 = vmatpush2.bf16.msra.mxu0 0
    %1191 = vmatprep.subr.bf16.mxu0 0
    %1192 = vmatpush2.bf16.msra.mxu0 0
    %1193 = vmatprep.mubr.bf16.mxu0 0
    %1194 = vmatmul.mubr.bf16.gmra.mxu0 %v1119
    %v1195 = vpop.f32.mrf.mxu0
    %v1196 = vadd.f32 %v327, %v1195
    %v1197 = vpop.f32.mrf.mxu0
    %v1198 = vadd.f32 %v331, %v1197
    %v1199 = vpop.f32.mrf.mxu0
    %v1200 = vpop.f32.mrf.mxu0
    %1201 = vdwg.mxu0
    %1202 = vmatprep.subr.bf16.mxu0 %v703
    %1203 = vmatpush1.bf16.msra.mxu0 %v702
    %1204 = vmatprep.subr.bf16.mxu0 %v699
    %1205 = vmatpush1.bf16.msra.mxu0 %v698
    %1206 = vmatprep.subr.bf16.mxu0 %v695
    %1207 = vmatpush1.bf16.msra.mxu0 %v694
    %1208 = vmatprep.subr.bf16.mxu0 %v691
    %1209 = vmatpush1.bf16.msra.mxu0 %v690
    %1210 = vmatprep.subr.bf16.mxu0 %v687
    %1211 = vmatpush1.bf16.msra.mxu0 %v686
    %1212 = vmatprep.subr.bf16.mxu0 %v683
    %1213 = vmatpush1.bf16.msra.mxu0 %v682
    %1214 = vmatprep.subr.bf16.mxu0 %v679
    %1215 = vmatpush1.bf16.msra.mxu0 %v678
    %1216 = vmatprep.subr.bf16.mxu0 %v675
    %1217 = vmatpush1.bf16.msra.mxu0 %v674
    %1218 = vmatprep.subr.bf16.mxu0 0
    %1219 = vmatpush2.bf16.msra.mxu0 0
    %1220 = vmatprep.subr.bf16.mxu0 0
    %1221 = vmatpush2.bf16.msra.mxu0 0
    %1222 = vmatprep.subr.bf16.mxu0 0
    %1223 = vmatpush2.bf16.msra.mxu0 0
    %1224 = vmatprep.subr.bf16.mxu0 0
    %1225 = vmatpush2.bf16.msra.mxu0 0
    %1226 = vmatprep.subr.bf16.mxu0 0
    %1227 = vmatpush2.bf16.msra.mxu0 0
    %1228 = vmatprep.subr.bf16.mxu0 0
    %1229 = vmatpush2.bf16.msra.mxu0 0
    %1230 = vmatprep.subr.bf16.mxu0 0
    %1231 = vmatpush2.bf16.msra.mxu0 0
    %1232 = vmatprep.subr.bf16.mxu0 0
    %1233 = vmatpush2.bf16.msra.mxu0 0
    %1234 = vmatprep.mubr.bf16.mxu0 0
    %1235 = vmatmul.mubr.bf16.gmra.mxu0 %v848
    %v1236 = vpop.f32.mrf.mxu0
    %v1237 = vadd.f32 0.0, %v1236
    %v1238 = vpop.f32.mrf.mxu0
    %v1239 = vadd.f32 0.0, %v1238
    %v1240 = vpop.f32.mrf.mxu0
    %v1241 = vpop.f32.mrf.mxu0
    %1242 = vdwg.mxu0
    %1243 = vmatprep.subr.bf16.mxu0 %v705
    %1244 = vmatpush1.bf16.msra.mxu0 %v704
    %1245 = vmatprep.subr.bf16.mxu0 %v701
    %1246 = vmatpush1.bf16.msra.mxu0 %v700
    %1247 = vmatprep.subr.bf16.mxu0 %v697
    %1248 = vmatpush1.bf16.msra.mxu0 %v696
    %1249 = vmatprep.subr.bf16.mxu0 %v693
    %1250 = vmatpush1.bf16.msra.mxu0 %v692
    %1251 = vmatprep.subr.bf16.mxu0 %v689
    %1252 = vmatpush1.bf16.msra.mxu0 %v688
    %1253 = vmatprep.subr.bf16.mxu0 %v685
    %1254 = vmatpush1.bf16.msra.mxu0 %v684
    %1255 = vmatprep.subr.bf16.mxu0 %v681
    %1256 = vmatpush1.bf16.msra.mxu0 %v680
    %1257 = vmatprep.subr.bf16.mxu0 %v677
    %1258 = vmatpush1.bf16.msra.mxu0 %v676
    %1259 = vmatprep.subr.bf16.mxu0 0
    %1260 = vmatpush2.bf16.msra.mxu0 0
    %1261 = vmatprep.subr.bf16.mxu0 0
    %1262 = vmatpush2.bf16.msra.mxu0 0
    %1263 = vmatprep.subr.bf16.mxu0 0
    %1264 = vmatpush2.bf16.msra.mxu0 0
    %1265 = vmatprep.subr.bf16.mxu0 0
    %1266 = vmatpush2.bf16.msra.mxu0 0
    %1267 = vmatprep.subr.bf16.mxu0 0
    %1268 = vmatpush2.bf16.msra.mxu0 0
    %1269 = vmatprep.subr.bf16.mxu0 0
    %1270 = vmatpush2.bf16.msra.mxu0 0
    %1271 = vmatprep.subr.bf16.mxu0 0
    %1272 = vmatpush2.bf16.msra.mxu0 0
    %1273 = vmatprep.subr.bf16.mxu0 0
    %1274 = vmatpush2.bf16.msra.mxu0 0
    %1275 = vmatprep.mubr.bf16.mxu0 0
    %1276 = vmatmul.mubr.bf16.gmra.mxu0 %v848
    %v1277 = vpop.f32.mrf.mxu0
    %v1278 = vadd.f32 0.0, %v1277
    %v1279 = vpop.f32.mrf.mxu0
    %v1280 = vadd.f32 0.0, %v1279
    %v1281 = vpop.f32.mrf.mxu0
    %v1282 = vpop.f32.mrf.mxu0
    %1283 = vdwg.mxu0
    %v1288 = vrot.slane %v1237, 6
    %v1289 = vrot.slane %v1239, 6
    %v1290 = vrot.slane %v1278, 6
    %v1291 = vrot.slane %v1280, 6
    %v1296 = vadd.f32 %v264, %v1288
    %v1297 = vadd.f32 %v266, %v1289
    %v1298 = vadd.f32 %v307, %v1290
    %v1299 = vadd.f32 %v309, %v1291
    %v1300 = vxor.u32 %v1296, 2147483648
    %v1301 = vxor.u32 %v1297, 2147483648
    %v1302 = vxor.u32 %v1298, 2147483648
    %v1303 = vmul.f32 %v1300, 1.442695
    %v1304 = vpow.pop %v1303
    %v1305 = vmul.f32 %v1301, 1.442695
    %v1306 = vpow.pop %v1305
    %v1307 = vmul.f32 %v1302, 1.442695
    %v1308 = vpow.pop %v1307
    %v1309 = vadd.f32 %v1304, 1.0
    %v1310 = vadd.f32 %v1306, 1.0
    %v1311 = vadd.f32 %v1308, 1.0
    %v1312 = vrcp.pop %v1309
    %v1313 = vmul.f32 1.0, %v1312
    %v1314 = vrcp.pop %v1310
    %v1315 = vmul.f32 1.0, %v1314
    %v1316 = vrcp.pop %v1311
    %v1317 = vmul.f32 1.0, %v1316
    %v1318 = vtanh.pop %v1299
    %v1320 = vrot.slane %v845, 6
    %v1322 = vmul.f32 %v1315, %v1320
    %v1323 = vmul.f32 %v1313, %v1318
    %v1324 = vadd.f32 %v1322, %v1323
    %v1325 = vtanh.pop %v1324
    %v1326 = vmul.f32 %v1317, %v1325
    %v1327 = vpack.c.bf16 %v1326, %v1326
    %v1329 = vrot.slane %v1327, 1
    %1331 = vmatprep.subr.bf16.mxu0 %v974
    %1332 = vmatpush1.bf16.msra.mxu0 %v973
    %1333 = vmatprep.subr.bf16.mxu0 %v970
    %1334 = vmatpush1.bf16.msra.mxu0 %v969
    %1335 = vmatprep.subr.bf16.mxu0 %v966
    %1336 = vmatpush1.bf16.msra.mxu0 %v965
    %1337 = vmatprep.subr.bf16.mxu0 %v962
    %1338 = vmatpush1.bf16.msra.mxu0 %v961
    %1339 = vmatprep.subr.bf16.mxu0 %v958
    %1340 = vmatpush1.bf16.msra.mxu0 %v957
    %1341 = vmatprep.subr.bf16.mxu0 %v954
    %1342 = vmatpush1.bf16.msra.mxu0 %v953
    %1343 = vmatprep.subr.bf16.mxu0 %v950
    %1344 = vmatpush1.bf16.msra.mxu0 %v949
    %1345 = vmatprep.subr.bf16.mxu0 %v946
    %1346 = vmatpush1.bf16.msra.mxu0 %v945
    %1347 = vmatprep.subr.bf16.mxu0 0
    %1348 = vmatpush2.bf16.msra.mxu0 0
    %1349 = vmatprep.subr.bf16.mxu0 0
    %1350 = vmatpush2.bf16.msra.mxu0 0
    %1351 = vmatprep.subr.bf16.mxu0 0
    %1352 = vmatpush2.bf16.msra.mxu0 0
    %1353 = vmatprep.subr.bf16.mxu0 0
    %1354 = vmatpush2.bf16.msra.mxu0 0
    %1355 = vmatprep.subr.bf16.mxu0 0
    %1356 = vmatpush2.bf16.msra.mxu0 0
    %1357 = vmatprep.subr.bf16.mxu0 0
    %1358 = vmatpush2.bf16.msra.mxu0 0
    %1359 = vmatprep.subr.bf16.mxu0 0
    %1360 = vmatpush2.bf16.msra.mxu0 0
    %1361 = vmatprep.subr.bf16.mxu0 0
    %1362 = vmatpush2.bf16.msra.mxu0 0
    %1363 = vmatprep.mubr.bf16.mxu0 0
    %1364 = vmatmul.mubr.bf16.gmra.mxu0 %v1329
    %v1365 = vpop.f32.mrf.mxu0
    %v1366 = vadd.f32 0.0, %v1365
    %v1367 = vpop.f32.mrf.mxu0
    %v1368 = vadd.f32 0.0, %v1367
    %v1369 = vpop.f32.mrf.mxu0
    %v1370 = vpop.f32.mrf.mxu0
    %1371 = vdwg.mxu0
    %1372 = vmatprep.subr.bf16.mxu0 %v976
    %1373 = vmatpush1.bf16.msra.mxu0 %v975
    %1374 = vmatprep.subr.bf16.mxu0 %v972
    %1375 = vmatpush1.bf16.msra.mxu0 %v971
    %1376 = vmatprep.subr.bf16.mxu0 %v968
    %1377 = vmatpush1.bf16.msra.mxu0 %v967
    %1378 = vmatprep.subr.bf16.mxu0 %v964
    %1379 = vmatpush1.bf16.msra.mxu0 %v963
    %1380 = vmatprep.subr.bf16.mxu0 %v960
    %1381 = vmatpush1.bf16.msra.mxu0 %v959
    %1382 = vmatprep.subr.bf16.mxu0 %v956
    %1383 = vmatpush1.bf16.msra.mxu0 %v955
    %1384 = vmatprep.subr.bf16.mxu0 %v952
    %1385 = vmatpush1.bf16.msra.mxu0 %v951
    %1386 = vmatprep.subr.bf16.mxu0 %v948
    %1387 = vmatpush1.bf16.msra.mxu0 %v947
    %1388 = vmatprep.subr.bf16.mxu0 0
    %1389 = vmatpush2.bf16.msra.mxu0 0
    %1390 = vmatprep.subr.bf16.mxu0 0
    %1391 = vmatpush2.bf16.msra.mxu0 0
    %1392 = vmatprep.subr.bf16.mxu0 0
    %1393 = vmatpush2.bf16.msra.mxu0 0
    %1394 = vmatprep.subr.bf16.mxu0 0
    %1395 = vmatpush2.bf16.msra.mxu0 0
    %1396 = vmatprep.subr.bf16.mxu0 0
    %1397 = vmatpush2.bf16.msra.mxu0 0
    %1398 = vmatprep.subr.bf16.mxu0 0
    %1399 = vmatpush2.bf16.msra.mxu0 0
    %1400 = vmatprep.subr.bf16.mxu0 0
    %1401 = vmatpush2.bf16.msra.mxu0 0
    %1402 = vmatprep.subr.bf16.mxu0 0
    %1403 = vmatpush2.bf16.msra.mxu0 0
    %1404 = vmatprep.mubr.bf16.mxu0 0
    %1405 = vmatmul.mubr.bf16.gmra.mxu0 %v1329
    %v1406 = vpop.f32.mrf.mxu0
    %v1407 = vadd.f32 0.0, %v1406
    %v1408 = vpop.f32.mrf.mxu0
    %v1409 = vadd.f32 0.0, %v1408
    %v1410 = vpop.f32.mrf.mxu0
    %v1411 = vpop.f32.mrf.mxu0
    %1412 = vdwg.mxu0
    %v1413 = vadd.f32 %v1155, %v1366
    %v1414 = vadd.f32 %v1157, %v1368
    %v1415 = vadd.f32 %v1196, %v1407
    %v1416 = vadd.f32 %v1198, %v1409
    %v1417 = vxor.u32 %v1413, 2147483648
    %v1418 = vxor.u32 %v1414, 2147483648
    %v1419 = vxor.u32 %v1415, 2147483648
    %v1420 = vmul.f32 %v1417, 1.442695
    %v1421 = vpow.pop %v1420
    %v1422 = vmul.f32 %v1418, 1.442695
    %v1423 = vpow.pop %v1422
    %v1424 = vmul.f32 %v1419, 1.442695
    %v1425 = vpow.pop %v1424
    %v1426 = vadd.f32 %v1421, 1.0
    %v1427 = vadd.f32 %v1423, 1.0
    %v1428 = vadd.f32 %v1425, 1.0
    %v1429 = vrcp.pop %v1426
    %v1430 = vmul.f32 1.0, %v1429
    %v1431 = vrcp.pop %v1427
    %v1432 = vmul.f32 1.0, %v1431
    %v1433 = vrcp.pop %v1428
    %v1434 = vmul.f32 1.0, %v1433
    %v1435 = vtanh.pop %v1416
    %v1436 = vmul.f32 %v1432, %v1116
    %v1437 = vmul.f32 %v1430, %v1435
    %v1438 = vadd.f32 %v1436, %v1437
    %v1439 = vtanh.pop %v1438
    %v1440 = vmul.f32 %v1434, %v1439
    %v1441 = vpack.c.bf16 %v1440, %v1440
    %1442 = vmatprep.subr.bf16.mxu0 %v461
    %1443 = vmatpush1.bf16.msra.mxu0 %v460
    %1444 = vmatprep.subr.bf16.mxu0 %v457
    %1445 = vmatpush1.bf16.msra.mxu0 %v456
    %1446 = vmatprep.subr.bf16.mxu0 %v453
    %1447 = vmatpush1.bf16.msra.mxu0 %v452
    %1448 = vmatprep.subr.bf16.mxu0 %v449
    %1449 = vmatpush1.bf16.msra.mxu0 %v448
    %1450 = vmatprep.subr.bf16.mxu0 %v445
    %1451 = vmatpush1.bf16.msra.mxu0 %v444
    %1452 = vmatprep.subr.bf16.mxu0 %v441
    %1453 = vmatpush1.bf16.msra.mxu0 %v440
    %1454 = vmatprep.subr.bf16.mxu0 %v437
    %1455 = vmatpush1.bf16.msra.mxu0 %v436
    %1456 = vmatprep.subr.bf16.mxu0 %v433
    %1457 = vmatpush1.bf16.msra.mxu0 %v432
    %1458 = vmatprep.subr.bf16.mxu0 0
    %1459 = vmatpush2.bf16.msra.mxu0 0
    %1460 = vmatprep.subr.bf16.mxu0 0
    %1461 = vmatpush2.bf16.msra.mxu0 0
    %1462 = vmatprep.subr.bf16.mxu0 0
    %1463 = vmatpush2.bf16.msra.mxu0 0
    %1464 = vmatprep.subr.bf16.mxu0 0
    %1465 = vmatpush2.bf16.msra.mxu0 0
    %1466 = vmatprep.subr.bf16.mxu0 0
    %1467 = vmatpush2.bf16.msra.mxu0 0
    %1468 = vmatprep.subr.bf16.mxu0 0
    %1469 = vmatpush2.bf16.msra.mxu0 0
    %1470 = vmatprep.subr.bf16.mxu0 0
    %1471 = vmatpush2.bf16.msra.mxu0 0
    %1472 = vmatprep.subr.bf16.mxu0 0
    %1473 = vmatpush2.bf16.msra.mxu0 0
    %1474 = vmatprep.mubr.bf16.mxu0 0
    %1475 = vmatmul.mubr.bf16.gmra.mxu0 %v1441
    %v1476 = vpop.f32.mrf.mxu0
    %v1477 = vadd.f32 %v319, %v1476
    %v1478 = vpop.f32.mrf.mxu0
    %v1479 = vadd.f32 %v323, %v1478
    %v1480 = vpop.f32.mrf.mxu0
    %v1481 = vpop.f32.mrf.mxu0
    %1482 = vdwg.mxu0
    %1483 = vmatprep.subr.bf16.mxu0 %v463
    %1484 = vmatpush1.bf16.msra.mxu0 %v462
    %1485 = vmatprep.subr.bf16.mxu0 %v459
    %1486 = vmatpush1.bf16.msra.mxu0 %v458
    %1487 = vmatprep.subr.bf16.mxu0 %v455
    %1488 = vmatpush1.bf16.msra.mxu0 %v454
    %1489 = vmatprep.subr.bf16.mxu0 %v451
    %1490 = vmatpush1.bf16.msra.mxu0 %v450
    %1491 = vmatprep.subr.bf16.mxu0 %v447
    %1492 = vmatpush1.bf16.msra.mxu0 %v446
    %1493 = vmatprep.subr.bf16.mxu0 %v443
    %1494 = vmatpush1.bf16.msra.mxu0 %v442
    %1495 = vmatprep.subr.bf16.mxu0 %v439
    %1496 = vmatpush1.bf16.msra.mxu0 %v438
    %1497 = vmatprep.subr.bf16.mxu0 %v435
    %1498 = vmatpush1.bf16.msra.mxu0 %v434
    %1499 = vmatprep.subr.bf16.mxu0 0
    %1500 = vmatpush2.bf16.msra.mxu0 0
    %1501 = vmatprep.subr.bf16.mxu0 0
    %1502 = vmatpush2.bf16.msra.mxu0 0
    %1503 = vmatprep.subr.bf16.mxu0 0
    %1504 = vmatpush2.bf16.msra.mxu0 0
    %1505 = vmatprep.subr.bf16.mxu0 0
    %1506 = vmatpush2.bf16.msra.mxu0 0
    %1507 = vmatprep.subr.bf16.mxu0 0
    %1508 = vmatpush2.bf16.msra.mxu0 0
    %1509 = vmatprep.subr.bf16.mxu0 0
    %1510 = vmatpush2.bf16.msra.mxu0 0
    %1511 = vmatprep.subr.bf16.mxu0 0
    %1512 = vmatpush2.bf16.msra.mxu0 0
    %1513 = vmatprep.subr.bf16.mxu0 0
    %1514 = vmatpush2.bf16.msra.mxu0 0
    %1515 = vmatprep.mubr.bf16.mxu0 0
    %1516 = vmatmul.mubr.bf16.gmra.mxu0 %v1441
    %v1517 = vpop.f32.mrf.mxu0
    %v1518 = vadd.f32 %v327, %v1517
    %v1519 = vpop.f32.mrf.mxu0
    %v1520 = vadd.f32 %v331, %v1519
    %v1521 = vpop.f32.mrf.mxu0
    %v1522 = vpop.f32.mrf.mxu0
    %1523 = vdwg.mxu0
    %1524 = vmatprep.subr.bf16.mxu0 %v703
    %1525 = vmatpush1.bf16.msra.mxu0 %v702
    %1526 = vmatprep.subr.bf16.mxu0 %v699
    %1527 = vmatpush1.bf16.msra.mxu0 %v698
    %1528 = vmatprep.subr.bf16.mxu0 %v695
    %1529 = vmatpush1.bf16.msra.mxu0 %v694
    %1530 = vmatprep.subr.bf16.mxu0 %v691
    %1531 = vmatpush1.bf16.msra.mxu0 %v690
    %1532 = vmatprep.subr.bf16.mxu0 %v687
    %1533 = vmatpush1.bf16.msra.mxu0 %v686
    %1534 = vmatprep.subr.bf16.mxu0 %v683
    %1535 = vmatpush1.bf16.msra.mxu0 %v682
    %1536 = vmatprep.subr.bf16.mxu0 %v679
    %1537 = vmatpush1.bf16.msra.mxu0 %v678
    %1538 = vmatprep.subr.bf16.mxu0 %v675
    %1539 = vmatpush1.bf16.msra.mxu0 %v674
    %1540 = vmatprep.subr.bf16.mxu0 0
    %1541 = vmatpush2.bf16.msra.mxu0 0
    %1542 = vmatprep.subr.bf16.mxu0 0
    %1543 = vmatpush2.bf16.msra.mxu0 0
    %1544 = vmatprep.subr.bf16.mxu0 0
    %1545 = vmatpush2.bf16.msra.mxu0 0
    %1546 = vmatprep.subr.bf16.mxu0 0
    %1547 = vmatpush2.bf16.msra.mxu0 0
    %1548 = vmatprep.subr.bf16.mxu0 0
    %1549 = vmatpush2.bf16.msra.mxu0 0
    %1550 = vmatprep.subr.bf16.mxu0 0
    %1551 = vmatpush2.bf16.msra.mxu0 0
    %1552 = vmatprep.subr.bf16.mxu0 0
    %1553 = vmatpush2.bf16.msra.mxu0 0
    %1554 = vmatprep.subr.bf16.mxu0 0
    %1555 = vmatpush2.bf16.msra.mxu0 0
    %1556 = vmatprep.mubr.bf16.mxu0 0
    %1557 = vmatmul.mubr.bf16.gmra.mxu0 %v1329
    %v1558 = vpop.f32.mrf.mxu0
    %v1559 = vadd.f32 0.0, %v1558
    %v1560 = vpop.f32.mrf.mxu0
    %v1561 = vadd.f32 0.0, %v1560
    %v1562 = vpop.f32.mrf.mxu0
    %v1563 = vpop.f32.mrf.mxu0
    %1564 = vdwg.mxu0
    %1565 = vmatprep.subr.bf16.mxu0 %v705
    %1566 = vmatpush1.bf16.msra.mxu0 %v704
    %1567 = vmatprep.subr.bf16.mxu0 %v701
    %1568 = vmatpush1.bf16.msra.mxu0 %v700
    %1569 = vmatprep.subr.bf16.mxu0 %v697
    %1570 = vmatpush1.bf16.msra.mxu0 %v696
    %1571 = vmatprep.subr.bf16.mxu0 %v693
    %1572 = vmatpush1.bf16.msra.mxu0 %v692
    %1573 = vmatprep.subr.bf16.mxu0 %v689
    %1574 = vmatpush1.bf16.msra.mxu0 %v688
    %1575 = vmatprep.subr.bf16.mxu0 %v685
    %1576 = vmatpush1.bf16.msra.mxu0 %v684
    %1577 = vmatprep.subr.bf16.mxu0 %v681
    %1578 = vmatpush1.bf16.msra.mxu0 %v680
    %1579 = vmatprep.subr.bf16.mxu0 %v677
    %1580 = vmatpush1.bf16.msra.mxu0 %v676
    %1581 = vmatprep.subr.bf16.mxu0 0
    %1582 = vmatpush2.bf16.msra.mxu0 0
    %1583 = vmatprep.subr.bf16.mxu0 0
    %1584 = vmatpush2.bf16.msra.mxu0 0
    %1585 = vmatprep.subr.bf16.mxu0 0
    %1586 = vmatpush2.bf16.msra.mxu0 0
    %1587 = vmatprep.subr.bf16.mxu0 0
    %1588 = vmatpush2.bf16.msra.mxu0 0
    %1589 = vmatprep.subr.bf16.mxu0 0
    %1590 = vmatpush2.bf16.msra.mxu0 0
    %1591 = vmatprep.subr.bf16.mxu0 0
    %1592 = vmatpush2.bf16.msra.mxu0 0
    %1593 = vmatprep.subr.bf16.mxu0 0
    %1594 = vmatpush2.bf16.msra.mxu0 0
    %1595 = vmatprep.subr.bf16.mxu0 0
    %1596 = vmatpush2.bf16.msra.mxu0 0
    %1597 = vmatprep.mubr.bf16.mxu0 0
    %1598 = vmatmul.mubr.bf16.gmra.mxu0 %v1329
    %v1599 = vpop.f32.mrf.mxu0
    %v1600 = vadd.f32 0.0, %v1599
    %v1601 = vpop.f32.mrf.mxu0
    %v1602 = vadd.f32 0.0, %v1601
    %v1603 = vpop.f32.mrf.mxu0
    %v1604 = vpop.f32.mrf.mxu0
    %1605 = vdwg.mxu0
    %v1610 = vrot.slane %v1559, 4
    %v1611 = vrot.slane %v1561, 4
    %v1612 = vrot.slane %v1600, 4
    %v1613 = vrot.slane %v1602, 4
    %v1618 = vadd.f32 %v264, %v1610
    %v1619 = vadd.f32 %v266, %v1611
    %v1620 = vadd.f32 %v307, %v1612
    %v1621 = vadd.f32 %v309, %v1613
    %v1622 = vxor.u32 %v1618, 2147483648
    %v1623 = vxor.u32 %v1619, 2147483648
    %v1624 = vxor.u32 %v1620, 2147483648
    %v1625 = vmul.f32 %v1622, 1.442695
    %v1626 = vpow.pop %v1625
    %v1627 = vmul.f32 %v1623, 1.442695
    %v1628 = vpow.pop %v1627
    %v1629 = vmul.f32 %v1624, 1.442695
    %v1630 = vpow.pop %v1629
    %v1631 = vadd.f32 %v1626, 1.0
    %v1632 = vadd.f32 %v1628, 1.0
    %v1633 = vadd.f32 %v1630, 1.0
    %v1634 = vrcp.pop %v1631
    %v1635 = vmul.f32 1.0, %v1634
    %v1636 = vrcp.pop %v1632
    %v1637 = vmul.f32 1.0, %v1636
    %v1638 = vrcp.pop %v1633
    %v1639 = vmul.f32 1.0, %v1638
    %v1640 = vtanh.pop %v1621
    %v1642 = vrot.slane %v1324, 6
    %v1644 = vmul.f32 %v1637, %v1642
    %v1645 = vmul.f32 %v1635, %v1640
    %v1646 = vadd.f32 %v1644, %v1645
    %v1647 = vtanh.pop %v1646
    %v1648 = vmul.f32 %v1639, %v1647
    %v1649 = vpack.c.bf16 %v1648, %v1648
    %v1651 = vrot.slane %v1649, 2
    %1653 = vmatprep.subr.bf16.mxu0 %v974
    %1654 = vmatpush1.bf16.msra.mxu0 %v973
    %1655 = vmatprep.subr.bf16.mxu0 %v970
    %1656 = vmatpush1.bf16.msra.mxu0 %v969
    %1657 = vmatprep.subr.bf16.mxu0 %v966
    %1658 = vmatpush1.bf16.msra.mxu0 %v965
    %1659 = vmatprep.subr.bf16.mxu0 %v962
    %1660 = vmatpush1.bf16.msra.mxu0 %v961
    %1661 = vmatprep.subr.bf16.mxu0 %v958
    %1662 = vmatpush1.bf16.msra.mxu0 %v957
    %1663 = vmatprep.subr.bf16.mxu0 %v954
    %1664 = vmatpush1.bf16.msra.mxu0 %v953
    %1665 = vmatprep.subr.bf16.mxu0 %v950
    %1666 = vmatpush1.bf16.msra.mxu0 %v949
    %1667 = vmatprep.subr.bf16.mxu0 %v946
    %1668 = vmatpush1.bf16.msra.mxu0 %v945
    %1669 = vmatprep.subr.bf16.mxu0 0
    %1670 = vmatpush2.bf16.msra.mxu0 0
    %1671 = vmatprep.subr.bf16.mxu0 0
    %1672 = vmatpush2.bf16.msra.mxu0 0
    %1673 = vmatprep.subr.bf16.mxu0 0
    %1674 = vmatpush2.bf16.msra.mxu0 0
    %1675 = vmatprep.subr.bf16.mxu0 0
    %1676 = vmatpush2.bf16.msra.mxu0 0
    %1677 = vmatprep.subr.bf16.mxu0 0
    %1678 = vmatpush2.bf16.msra.mxu0 0
    %1679 = vmatprep.subr.bf16.mxu0 0
    %1680 = vmatpush2.bf16.msra.mxu0 0
    %1681 = vmatprep.subr.bf16.mxu0 0
    %1682 = vmatpush2.bf16.msra.mxu0 0
    %1683 = vmatprep.subr.bf16.mxu0 0
    %1684 = vmatpush2.bf16.msra.mxu0 0
    %1685 = vmatprep.mubr.bf16.mxu0 0
    %1686 = vmatmul.mubr.bf16.gmra.mxu0 %v1651
    %v1687 = vpop.f32.mrf.mxu0
    %v1688 = vadd.f32 0.0, %v1687
    %v1689 = vpop.f32.mrf.mxu0
    %v1690 = vadd.f32 0.0, %v1689
    %v1691 = vpop.f32.mrf.mxu0
    %v1692 = vpop.f32.mrf.mxu0
    %1693 = vdwg.mxu0
    %1694 = vmatprep.subr.bf16.mxu0 %v976
    %1695 = vmatpush1.bf16.msra.mxu0 %v975
    %1696 = vmatprep.subr.bf16.mxu0 %v972
    %1697 = vmatpush1.bf16.msra.mxu0 %v971
    %1698 = vmatprep.subr.bf16.mxu0 %v968
    %1699 = vmatpush1.bf16.msra.mxu0 %v967
    %1700 = vmatprep.subr.bf16.mxu0 %v964
    %1701 = vmatpush1.bf16.msra.mxu0 %v963
    %1702 = vmatprep.subr.bf16.mxu0 %v960
    %1703 = vmatpush1.bf16.msra.mxu0 %v959
    %1704 = vmatprep.subr.bf16.mxu0 %v956
    %1705 = vmatpush1.bf16.msra.mxu0 %v955
    %1706 = vmatprep.subr.bf16.mxu0 %v952
    %1707 = vmatpush1.bf16.msra.mxu0 %v951
    %1708 = vmatprep.subr.bf16.mxu0 %v948
    %1709 = vmatpush1.bf16.msra.mxu0 %v947
    %1710 = vmatprep.subr.bf16.mxu0 0
    %1711 = vmatpush2.bf16.msra.mxu0 0
    %1712 = vmatprep.subr.bf16.mxu0 0
    %1713 = vmatpush2.bf16.msra.mxu0 0
    %1714 = vmatprep.subr.bf16.mxu0 0
    %1715 = vmatpush2.bf16.msra.mxu0 0
    %1716 = vmatprep.subr.bf16.mxu0 0
    %1717 = vmatpush2.bf16.msra.mxu0 0
    %1718 = vmatprep.subr.bf16.mxu0 0
    %1719 = vmatpush2.bf16.msra.mxu0 0
    %1720 = vmatprep.subr.bf16.mxu0 0
    %1721 = vmatpush2.bf16.msra.mxu0 0
    %1722 = vmatprep.subr.bf16.mxu0 0
    %1723 = vmatpush2.bf16.msra.mxu0 0
    %1724 = vmatprep.subr.bf16.mxu0 0
    %1725 = vmatpush2.bf16.msra.mxu0 0
    %1726 = vmatprep.mubr.bf16.mxu0 0
    %1727 = vmatmul.mubr.bf16.gmra.mxu0 %v1651
    %v1728 = vpop.f32.mrf.mxu0
    %v1729 = vadd.f32 0.0, %v1728
    %v1730 = vpop.f32.mrf.mxu0
    %v1731 = vadd.f32 0.0, %v1730
    %v1732 = vpop.f32.mrf.mxu0
    %v1733 = vpop.f32.mrf.mxu0
    %1734 = vdwg.mxu0
    %v1735 = vadd.f32 %v1477, %v1688
    %v1736 = vadd.f32 %v1479, %v1690
    %v1737 = vadd.f32 %v1518, %v1729
    %v1738 = vadd.f32 %v1520, %v1731
    %v1739 = vxor.u32 %v1735, 2147483648
    %v1740 = vxor.u32 %v1736, 2147483648
    %v1741 = vxor.u32 %v1737, 2147483648
    %v1742 = vmul.f32 %v1739, 1.442695
    %v1743 = vpow.pop %v1742
    %v1744 = vmul.f32 %v1740, 1.442695
    %v1745 = vpow.pop %v1744
    %v1746 = vmul.f32 %v1741, 1.442695
    %v1747 = vpow.pop %v1746
    %v1748 = vadd.f32 %v1743, 1.0
    %v1749 = vadd.f32 %v1745, 1.0
    %v1750 = vadd.f32 %v1747, 1.0
    %v1751 = vrcp.pop %v1748
    %v1752 = vmul.f32 1.0, %v1751
    %v1753 = vrcp.pop %v1749
    %v1754 = vmul.f32 1.0, %v1753
    %v1755 = vrcp.pop %v1750
    %v1756 = vmul.f32 1.0, %v1755
    %v1757 = vtanh.pop %v1738
    %v1758 = vmul.f32 %v1754, %v1438
    %v1759 = vmul.f32 %v1752, %v1757
    %v1760 = vadd.f32 %v1758, %v1759
    %v1761 = vtanh.pop %v1760
    %v1762 = vmul.f32 %v1756, %v1761
    %v1763 = vpack.c.bf16 %v1762, %v1762
    %1764 = vmatprep.subr.bf16.mxu0 %v461
    %1765 = vmatpush1.bf16.msra.mxu0 %v460
    %1766 = vmatprep.subr.bf16.mxu0 %v457
    %1767 = vmatpush1.bf16.msra.mxu0 %v456
    %1768 = vmatprep.subr.bf16.mxu0 %v453
    %1769 = vmatpush1.bf16.msra.mxu0 %v452
    %1770 = vmatprep.subr.bf16.mxu0 %v449
    %1771 = vmatpush1.bf16.msra.mxu0 %v448
    %1772 = vmatprep.subr.bf16.mxu0 %v445
    %1773 = vmatpush1.bf16.msra.mxu0 %v444
    %1774 = vmatprep.subr.bf16.mxu0 %v441
    %1775 = vmatpush1.bf16.msra.mxu0 %v440
    %1776 = vmatprep.subr.bf16.mxu0 %v437
    %1777 = vmatpush1.bf16.msra.mxu0 %v436
    %1778 = vmatprep.subr.bf16.mxu0 %v433
    %1779 = vmatpush1.bf16.msra.mxu0 %v432
    %1780 = vmatprep.subr.bf16.mxu0 0
    %1781 = vmatpush2.bf16.msra.mxu0 0
    %1782 = vmatprep.subr.bf16.mxu0 0
    %1783 = vmatpush2.bf16.msra.mxu0 0
    %1784 = vmatprep.subr.bf16.mxu0 0
    %1785 = vmatpush2.bf16.msra.mxu0 0
    %1786 = vmatprep.subr.bf16.mxu0 0
    %1787 = vmatpush2.bf16.msra.mxu0 0
    %1788 = vmatprep.subr.bf16.mxu0 0
    %1789 = vmatpush2.bf16.msra.mxu0 0
    %1790 = vmatprep.subr.bf16.mxu0 0
    %1791 = vmatpush2.bf16.msra.mxu0 0
    %1792 = vmatprep.subr.bf16.mxu0 0
    %1793 = vmatpush2.bf16.msra.mxu0 0
    %1794 = vmatprep.subr.bf16.mxu0 0
    %1795 = vmatpush2.bf16.msra.mxu0 0
    %1796 = vmatprep.mubr.bf16.mxu0 0
    %1797 = vmatmul.mubr.bf16.gmra.mxu0 %v1763
    %v1798 = vpop.f32.mrf.mxu0
    %v1799 = vadd.f32 %v319, %v1798
    %v1800 = vpop.f32.mrf.mxu0
    %v1801 = vadd.f32 %v323, %v1800
    %v1802 = vpop.f32.mrf.mxu0
    %v1803 = vpop.f32.mrf.mxu0
    %1804 = vdwg.mxu0
    %1805 = vmatprep.subr.bf16.mxu0 %v463
    %1806 = vmatpush1.bf16.msra.mxu0 %v462
    %1807 = vmatprep.subr.bf16.mxu0 %v459
    %1808 = vmatpush1.bf16.msra.mxu0 %v458
    %1809 = vmatprep.subr.bf16.mxu0 %v455
    %1810 = vmatpush1.bf16.msra.mxu0 %v454
    %1811 = vmatprep.subr.bf16.mxu0 %v451
    %1812 = vmatpush1.bf16.msra.mxu0 %v450
    %1813 = vmatprep.subr.bf16.mxu0 %v447
    %1814 = vmatpush1.bf16.msra.mxu0 %v446
    %1815 = vmatprep.subr.bf16.mxu0 %v443
    %1816 = vmatpush1.bf16.msra.mxu0 %v442
    %1817 = vmatprep.subr.bf16.mxu0 %v439
    %1818 = vmatpush1.bf16.msra.mxu0 %v438
    %1819 = vmatprep.subr.bf16.mxu0 %v435
    %1820 = vmatpush1.bf16.msra.mxu0 %v434
    %1821 = vmatprep.subr.bf16.mxu0 0
    %1822 = vmatpush2.bf16.msra.mxu0 0
    %1823 = vmatprep.subr.bf16.mxu0 0
    %1824 = vmatpush2.bf16.msra.mxu0 0
    %1825 = vmatprep.subr.bf16.mxu0 0
    %1826 = vmatpush2.bf16.msra.mxu0 0
    %1827 = vmatprep.subr.bf16.mxu0 0
    %1828 = vmatpush2.bf16.msra.mxu0 0
    %1829 = vmatprep.subr.bf16.mxu0 0
    %1830 = vmatpush2.bf16.msra.mxu0 0
    %1831 = vmatprep.subr.bf16.mxu0 0
    %1832 = vmatpush2.bf16.msra.mxu0 0
    %1833 = vmatprep.subr.bf16.mxu0 0
    %1834 = vmatpush2.bf16.msra.mxu0 0
    %1835 = vmatprep.subr.bf16.mxu0 0
    %1836 = vmatpush2.bf16.msra.mxu0 0
    %1837 = vmatprep.mubr.bf16.mxu0 0
    %1838 = vmatmul.mubr.bf16.gmra.mxu0 %v1763
    %v1839 = vpop.f32.mrf.mxu0
    %v1840 = vadd.f32 %v327, %v1839
    %v1841 = vpop.f32.mrf.mxu0
    %v1842 = vadd.f32 %v331, %v1841
    %v1843 = vpop.f32.mrf.mxu0
    %v1844 = vpop.f32.mrf.mxu0
    %1845 = vdwg.mxu0
    %1846 = vmatprep.subr.bf16.mxu0 %v703
    %1847 = vmatpush1.bf16.msra.mxu0 %v702
    %1848 = vmatprep.subr.bf16.mxu0 %v699
    %1849 = vmatpush1.bf16.msra.mxu0 %v698
    %1850 = vmatprep.subr.bf16.mxu0 %v695
    %1851 = vmatpush1.bf16.msra.mxu0 %v694
    %1852 = vmatprep.subr.bf16.mxu0 %v691
    %1853 = vmatpush1.bf16.msra.mxu0 %v690
    %1854 = vmatprep.subr.bf16.mxu0 %v687
    %1855 = vmatpush1.bf16.msra.mxu0 %v686
    %1856 = vmatprep.subr.bf16.mxu0 %v683
    %1857 = vmatpush1.bf16.msra.mxu0 %v682
    %1858 = vmatprep.subr.bf16.mxu0 %v679
    %1859 = vmatpush1.bf16.msra.mxu0 %v678
    %1860 = vmatprep.subr.bf16.mxu0 %v675
    %1861 = vmatpush1.bf16.msra.mxu0 %v674
    %1862 = vmatprep.subr.bf16.mxu0 0
    %1863 = vmatpush2.bf16.msra.mxu0 0
    %1864 = vmatprep.subr.bf16.mxu0 0
    %1865 = vmatpush2.bf16.msra.mxu0 0
    %1866 = vmatprep.subr.bf16.mxu0 0
    %1867 = vmatpush2.bf16.msra.mxu0 0
    %1868 = vmatprep.subr.bf16.mxu0 0
    %1869 = vmatpush2.bf16.msra.mxu0 0
    %1870 = vmatprep.subr.bf16.mxu0 0
    %1871 = vmatpush2.bf16.msra.mxu0 0
    %1872 = vmatprep.subr.bf16.mxu0 0
    %1873 = vmatpush2.bf16.msra.mxu0 0
    %1874 = vmatprep.subr.bf16.mxu0 0
    %1875 = vmatpush2.bf16.msra.mxu0 0
    %1876 = vmatprep.subr.bf16.mxu0 0
    %1877 = vmatpush2.bf16.msra.mxu0 0
    %1878 = vmatprep.mubr.bf16.mxu0 0
    %1879 = vmatmul.mubr.bf16.gmra.mxu0 %v1651
    %v1880 = vpop.f32.mrf.mxu0
    %v1881 = vadd.f32 0.0, %v1880
    %v1882 = vpop.f32.mrf.mxu0
    %v1883 = vadd.f32 0.0, %v1882
    %v1884 = vpop.f32.mrf.mxu0
    %v1885 = vpop.f32.mrf.mxu0
    %1886 = vdwg.mxu0
    %1887 = vmatprep.subr.bf16.mxu0 %v705
    %1888 = vmatpush1.bf16.msra.mxu0 %v704
    %1889 = vmatprep.subr.bf16.mxu0 %v701
    %1890 = vmatpush1.bf16.msra.mxu0 %v700
    %1891 = vmatprep.subr.bf16.mxu0 %v697
    %1892 = vmatpush1.bf16.msra.mxu0 %v696
    %1893 = vmatprep.subr.bf16.mxu0 %v693
    %1894 = vmatpush1.bf16.msra.mxu0 %v692
    %1895 = vmatprep.subr.bf16.mxu0 %v689
    %1896 = vmatpush1.bf16.msra.mxu0 %v688
    %1897 = vmatprep.subr.bf16.mxu0 %v685
    %1898 = vmatpush1.bf16.msra.mxu0 %v684
    %1899 = vmatprep.subr.bf16.mxu0 %v681
    %1900 = vmatpush1.bf16.msra.mxu0 %v680
    %1901 = vmatprep.subr.bf16.mxu0 %v677
    %1902 = vmatpush1.bf16.msra.mxu0 %v676
    %1903 = vmatprep.subr.bf16.mxu0 0
    %1904 = vmatpush2.bf16.msra.mxu0 0
    %1905 = vmatprep.subr.bf16.mxu0 0
    %1906 = vmatpush2.bf16.msra.mxu0 0
    %1907 = vmatprep.subr.bf16.mxu0 0
    %1908 = vmatpush2.bf16.msra.mxu0 0
    %1909 = vmatprep.subr.bf16.mxu0 0
    %1910 = vmatpush2.bf16.msra.mxu0 0
    %1911 = vmatprep.subr.bf16.mxu0 0
    %1912 = vmatpush2.bf16.msra.mxu0 0
    %1913 = vmatprep.subr.bf16.mxu0 0
    %1914 = vmatpush2.bf16.msra.mxu0 0
    %1915 = vmatprep.subr.bf16.mxu0 0
    %1916 = vmatpush2.bf16.msra.mxu0 0
    %1917 = vmatprep.subr.bf16.mxu0 0
    %1918 = vmatpush2.bf16.msra.mxu0 0
    %1919 = vmatprep.mubr.bf16.mxu0 0
    %1920 = vmatmul.mubr.bf16.gmra.mxu0 %v1651
    %v1921 = vpop.f32.mrf.mxu0
    %v1922 = vadd.f32 0.0, %v1921
    %v1923 = vpop.f32.mrf.mxu0
    %v1924 = vadd.f32 0.0, %v1923
    %v1925 = vpop.f32.mrf.mxu0
    %v1926 = vpop.f32.mrf.mxu0
    %1927 = vdwg.mxu0
    %v1932 = vrot.slane %v1881, 2
    %v1933 = vrot.slane %v1883, 2
    %v1934 = vrot.slane %v1922, 2
    %v1935 = vrot.slane %v1924, 2
    %v1940 = vadd.f32 %v264, %v1932
    %v1941 = vadd.f32 %v266, %v1933
    %v1942 = vadd.f32 %v307, %v1934
    %v1943 = vadd.f32 %v309, %v1935
    %v1944 = vxor.u32 %v1940, 2147483648
    %v1945 = vxor.u32 %v1941, 2147483648
    %v1946 = vxor.u32 %v1942, 2147483648
    %v1947 = vmul.f32 %v1944, 1.442695
    %v1948 = vpow.pop %v1947
    %v1949 = vmul.f32 %v1945, 1.442695
    %v1950 = vpow.pop %v1949
    %v1951 = vmul.f32 %v1946, 1.442695
    %v1952 = vpow.pop %v1951
    %v1953 = vadd.f32 %v1948, 1.0
    %v1954 = vadd.f32 %v1950, 1.0
    %v1955 = vadd.f32 %v1952, 1.0
    %v1956 = vrcp.pop %v1953
    %v1957 = vmul.f32 1.0, %v1956
    %v1958 = vrcp.pop %v1954
    %v1959 = vmul.f32 1.0, %v1958
    %v1960 = vrcp.pop %v1955
    %v1961 = vmul.f32 1.0, %v1960
    %v1962 = vtanh.pop %v1943
    %v1964 = vrot.slane %v1646, 6
    %v1966 = vmul.f32 %v1959, %v1964
    %v1967 = vmul.f32 %v1957, %v1962
    %v1968 = vadd.f32 %v1966, %v1967
    %v1969 = vtanh.pop %v1968
    %v1970 = vmul.f32 %v1961, %v1969
    %v1971 = vpack.c.bf16 %v1970, %v1970
    %v1973 = vrot.slane %v1971, 3
    %1975 = vmatprep.subr.bf16.mxu0 %v974
    %1976 = vmatpush1.bf16.msra.mxu0 %v973
    %1977 = vmatprep.subr.bf16.mxu0 %v970
    %1978 = vmatpush1.bf16.msra.mxu0 %v969
    %1979 = vmatprep.subr.bf16.mxu0 %v966
    %1980 = vmatpush1.bf16.msra.mxu0 %v965
    %1981 = vmatprep.subr.bf16.mxu0 %v962
    %1982 = vmatpush1.bf16.msra.mxu0 %v961
    %1983 = vmatprep.subr.bf16.mxu0 %v958
    %1984 = vmatpush1.bf16.msra.mxu0 %v957
    %1985 = vmatprep.subr.bf16.mxu0 %v954
    %1986 = vmatpush1.bf16.msra.mxu0 %v953
    %1987 = vmatprep.subr.bf16.mxu0 %v950
    %1988 = vmatpush1.bf16.msra.mxu0 %v949
    %1989 = vmatprep.subr.bf16.mxu0 %v946
    %1990 = vmatpush1.bf16.msra.mxu0 %v945
    %1991 = vmatprep.subr.bf16.mxu0 0
    %1992 = vmatpush2.bf16.msra.mxu0 0
    %1993 = vmatprep.subr.bf16.mxu0 0
    %1994 = vmatpush2.bf16.msra.mxu0 0
    %1995 = vmatprep.subr.bf16.mxu0 0
    %1996 = vmatpush2.bf16.msra.mxu0 0
    %1997 = vmatprep.subr.bf16.mxu0 0
    %1998 = vmatpush2.bf16.msra.mxu0 0
    %1999 = vmatprep.subr.bf16.mxu0 0
    %2000 = vmatpush2.bf16.msra.mxu0 0
    %2001 = vmatprep.subr.bf16.mxu0 0
    %2002 = vmatpush2.bf16.msra.mxu0 0
    %2003 = vmatprep.subr.bf16.mxu0 0
    %2004 = vmatpush2.bf16.msra.mxu0 0
    %2005 = vmatprep.subr.bf16.mxu0 0
    %2006 = vmatpush2.bf16.msra.mxu0 0
    %2007 = vmatprep.mubr.bf16.mxu0 0
    %2008 = vmatmul.mubr.bf16.gmra.mxu0 %v1973
    %v2009 = vpop.f32.mrf.mxu0
    %v2010 = vadd.f32 0.0, %v2009
    %v2011 = vpop.f32.mrf.mxu0
    %v2012 = vadd.f32 0.0, %v2011
    %v2013 = vpop.f32.mrf.mxu0
    %v2014 = vpop.f32.mrf.mxu0
    %2015 = vdwg.mxu0
    %2016 = vmatprep.subr.bf16.mxu0 %v976
    %2017 = vmatpush1.bf16.msra.mxu0 %v975
    %2018 = vmatprep.subr.bf16.mxu0 %v972
    %2019 = vmatpush1.bf16.msra.mxu0 %v971
    %2020 = vmatprep.subr.bf16.mxu0 %v968
    %2021 = vmatpush1.bf16.msra.mxu0 %v967
    %2022 = vmatprep.subr.bf16.mxu0 %v964
    %2023 = vmatpush1.bf16.msra.mxu0 %v963
    %2024 = vmatprep.subr.bf16.mxu0 %v960
    %2025 = vmatpush1.bf16.msra.mxu0 %v959
    %2026 = vmatprep.subr.bf16.mxu0 %v956
    %2027 = vmatpush1.bf16.msra.mxu0 %v955
    %2028 = vmatprep.subr.bf16.mxu0 %v952
    %2029 = vmatpush1.bf16.msra.mxu0 %v951
    %2030 = vmatprep.subr.bf16.mxu0 %v948
    %2031 = vmatpush1.bf16.msra.mxu0 %v947
    %2032 = vmatprep.subr.bf16.mxu0 0
    %2033 = vmatpush2.bf16.msra.mxu0 0
    %2034 = vmatprep.subr.bf16.mxu0 0
    %2035 = vmatpush2.bf16.msra.mxu0 0
    %2036 = vmatprep.subr.bf16.mxu0 0
    %2037 = vmatpush2.bf16.msra.mxu0 0
    %2038 = vmatprep.subr.bf16.mxu0 0
    %2039 = vmatpush2.bf16.msra.mxu0 0
    %2040 = vmatprep.subr.bf16.mxu0 0
    %2041 = vmatpush2.bf16.msra.mxu0 0
    %2042 = vmatprep.subr.bf16.mxu0 0
    %2043 = vmatpush2.bf16.msra.mxu0 0
    %2044 = vmatprep.subr.bf16.mxu0 0
    %2045 = vmatpush2.bf16.msra.mxu0 0
    %2046 = vmatprep.subr.bf16.mxu0 0
    %2047 = vmatpush2.bf16.msra.mxu0 0
    %2048 = vmatprep.mubr.bf16.mxu0 0
    %2049 = vmatmul.mubr.bf16.gmra.mxu0 %v1973
    %v2050 = vpop.f32.mrf.mxu0
    %v2051 = vadd.f32 0.0, %v2050
    %v2052 = vpop.f32.mrf.mxu0
    %v2053 = vadd.f32 0.0, %v2052
    %v2054 = vpop.f32.mrf.mxu0
    %v2055 = vpop.f32.mrf.mxu0
    %2056 = vdwg.mxu0
    %v2057 = vadd.f32 %v1799, %v2010
    %v2058 = vadd.f32 %v1801, %v2012
    %v2059 = vadd.f32 %v1840, %v2051
    %v2060 = vadd.f32 %v1842, %v2053
    %v2061 = vxor.u32 %v2057, 2147483648
    %v2062 = vxor.u32 %v2058, 2147483648
    %v2063 = vxor.u32 %v2059, 2147483648
    %v2064 = vmul.f32 %v2061, 1.442695
    %v2065 = vpow.pop %v2064
    %v2066 = vmul.f32 %v2062, 1.442695
    %v2067 = vpow.pop %v2066
    %v2068 = vmul.f32 %v2063, 1.442695
    %v2069 = vpow.pop %v2068
    %v2070 = vadd.f32 %v2065, 1.0
    %v2071 = vadd.f32 %v2067, 1.0
    %v2072 = vadd.f32 %v2069, 1.0
    %v2073 = vrcp.pop %v2070
    %v2074 = vmul.f32 1.0, %v2073
    %v2075 = vrcp.pop %v2071
    %v2076 = vmul.f32 1.0, %v2075
    %v2077 = vrcp.pop %v2072
    %v2078 = vmul.f32 1.0, %v2077
    %v2079 = vtanh.pop %v2060
    %v2080 = vmul.f32 %v2076, %v1760
    %v2081 = vmul.f32 %v2074, %v2079
    %v2082 = vadd.f32 %v2080, %v2081
    %v2083 = vtanh.pop %v2082
    %v2084 = vmul.f32 %v2078, %v2083
    %v2085 = vpack.c.bf16 %v2084, %v2084
    %2086 = vmatprep.subr.bf16.mxu0 %v461
    %2087 = vmatpush1.bf16.msra.mxu0 %v460
    %2088 = vmatprep.subr.bf16.mxu0 %v457
    %2089 = vmatpush1.bf16.msra.mxu0 %v456
    %2090 = vmatprep.subr.bf16.mxu0 %v453
    %2091 = vmatpush1.bf16.msra.mxu0 %v452
    %2092 = vmatprep.subr.bf16.mxu0 %v449
    %2093 = vmatpush1.bf16.msra.mxu0 %v448
    %2094 = vmatprep.subr.bf16.mxu0 %v445
    %2095 = vmatpush1.bf16.msra.mxu0 %v444
    %2096 = vmatprep.subr.bf16.mxu0 %v441
    %2097 = vmatpush1.bf16.msra.mxu0 %v440
    %2098 = vmatprep.subr.bf16.mxu0 %v437
    %2099 = vmatpush1.bf16.msra.mxu0 %v436
    %2100 = vmatprep.subr.bf16.mxu0 %v433
    %2101 = vmatpush1.bf16.msra.mxu0 %v432
    %2102 = vmatprep.subr.bf16.mxu0 0
    %2103 = vmatpush2.bf16.msra.mxu0 0
    %2104 = vmatprep.subr.bf16.mxu0 0
    %2105 = vmatpush2.bf16.msra.mxu0 0
    %2106 = vmatprep.subr.bf16.mxu0 0
    %2107 = vmatpush2.bf16.msra.mxu0 0
    %2108 = vmatprep.subr.bf16.mxu0 0
    %2109 = vmatpush2.bf16.msra.mxu0 0
    %2110 = vmatprep.subr.bf16.mxu0 0
    %2111 = vmatpush2.bf16.msra.mxu0 0
    %2112 = vmatprep.subr.bf16.mxu0 0
    %2113 = vmatpush2.bf16.msra.mxu0 0
    %2114 = vmatprep.subr.bf16.mxu0 0
    %2115 = vmatpush2.bf16.msra.mxu0 0
    %2116 = vmatprep.subr.bf16.mxu0 0
    %2117 = vmatpush2.bf16.msra.mxu0 0
    %2118 = vmatprep.mubr.bf16.mxu0 0
    %2119 = vmatmul.mubr.bf16.gmra.mxu0 %v2085
    %v2120 = vpop.f32.mrf.mxu0
    %v2121 = vadd.f32 %v319, %v2120
    %v2122 = vpop.f32.mrf.mxu0
    %v2123 = vadd.f32 %v323, %v2122
    %v2124 = vpop.f32.mrf.mxu0
    %v2125 = vpop.f32.mrf.mxu0
    %2126 = vdwg.mxu0
    %2127 = vmatprep.subr.bf16.mxu0 %v463
    %2128 = vmatpush1.bf16.msra.mxu0 %v462
    %2129 = vmatprep.subr.bf16.mxu0 %v459
    %2130 = vmatpush1.bf16.msra.mxu0 %v458
    %2131 = vmatprep.subr.bf16.mxu0 %v455
    %2132 = vmatpush1.bf16.msra.mxu0 %v454
    %2133 = vmatprep.subr.bf16.mxu0 %v451
    %2134 = vmatpush1.bf16.msra.mxu0 %v450
    %2135 = vmatprep.subr.bf16.mxu0 %v447
    %2136 = vmatpush1.bf16.msra.mxu0 %v446
    %2137 = vmatprep.subr.bf16.mxu0 %v443
    %2138 = vmatpush1.bf16.msra.mxu0 %v442
    %2139 = vmatprep.subr.bf16.mxu0 %v439
    %2140 = vmatpush1.bf16.msra.mxu0 %v438
    %2141 = vmatprep.subr.bf16.mxu0 %v435
    %2142 = vmatpush1.bf16.msra.mxu0 %v434
    %2143 = vmatprep.subr.bf16.mxu0 0
    %2144 = vmatpush2.bf16.msra.mxu0 0
    %2145 = vmatprep.subr.bf16.mxu0 0
    %2146 = vmatpush2.bf16.msra.mxu0 0
    %2147 = vmatprep.subr.bf16.mxu0 0
    %2148 = vmatpush2.bf16.msra.mxu0 0
    %2149 = vmatprep.subr.bf16.mxu0 0
    %2150 = vmatpush2.bf16.msra.mxu0 0
    %2151 = vmatprep.subr.bf16.mxu0 0
    %2152 = vmatpush2.bf16.msra.mxu0 0
    %2153 = vmatprep.subr.bf16.mxu0 0
    %2154 = vmatpush2.bf16.msra.mxu0 0
    %2155 = vmatprep.subr.bf16.mxu0 0
    %2156 = vmatpush2.bf16.msra.mxu0 0
    %2157 = vmatprep.subr.bf16.mxu0 0
    %2158 = vmatpush2.bf16.msra.mxu0 0
    %2159 = vmatprep.mubr.bf16.mxu0 0
    %2160 = vmatmul.mubr.bf16.gmra.mxu0 %v2085
    %v2161 = vpop.f32.mrf.mxu0
    %v2162 = vadd.f32 %v327, %v2161
    %v2163 = vpop.f32.mrf.mxu0
    %v2164 = vadd.f32 %v331, %v2163
    %v2165 = vpop.f32.mrf.mxu0
    %v2166 = vpop.f32.mrf.mxu0
    %2167 = vdwg.mxu0
    %2168 = vmatprep.subr.bf16.mxu0 %v703
    %2169 = vmatpush1.bf16.msra.mxu0 %v702
    %2170 = vmatprep.subr.bf16.mxu0 %v699
    %2171 = vmatpush1.bf16.msra.mxu0 %v698
    %2172 = vmatprep.subr.bf16.mxu0 %v695
    %2173 = vmatpush1.bf16.msra.mxu0 %v694
    %2174 = vmatprep.subr.bf16.mxu0 %v691
    %2175 = vmatpush1.bf16.msra.mxu0 %v690
    %2176 = vmatprep.subr.bf16.mxu0 %v687
    %2177 = vmatpush1.bf16.msra.mxu0 %v686
    %2178 = vmatprep.subr.bf16.mxu0 %v683
    %2179 = vmatpush1.bf16.msra.mxu0 %v682
    %2180 = vmatprep.subr.bf16.mxu0 %v679
    %2181 = vmatpush1.bf16.msra.mxu0 %v678
    %2182 = vmatprep.subr.bf16.mxu0 %v675
    %2183 = vmatpush1.bf16.msra.mxu0 %v674
    %2184 = vmatprep.subr.bf16.mxu0 0
    %2185 = vmatpush2.bf16.msra.mxu0 0
    %2186 = vmatprep.subr.bf16.mxu0 0
    %2187 = vmatpush2.bf16.msra.mxu0 0
    %2188 = vmatprep.subr.bf16.mxu0 0
    %2189 = vmatpush2.bf16.msra.mxu0 0
    %2190 = vmatprep.subr.bf16.mxu0 0
    %2191 = vmatpush2.bf16.msra.mxu0 0
    %2192 = vmatprep.subr.bf16.mxu0 0
    %2193 = vmatpush2.bf16.msra.mxu0 0
    %2194 = vmatprep.subr.bf16.mxu0 0
    %2195 = vmatpush2.bf16.msra.mxu0 0
    %2196 = vmatprep.subr.bf16.mxu0 0
    %2197 = vmatpush2.bf16.msra.mxu0 0
    %2198 = vmatprep.subr.bf16.mxu0 0
    %2199 = vmatpush2.bf16.msra.mxu0 0
    %2200 = vmatprep.mubr.bf16.mxu0 0
    %2201 = vmatmul.mubr.bf16.gmra.mxu0 %v1973
    %v2202 = vpop.f32.mrf.mxu0
    %v2203 = vadd.f32 0.0, %v2202
    %v2204 = vpop.f32.mrf.mxu0
    %v2205 = vadd.f32 0.0, %v2204
    %v2206 = vpop.f32.mrf.mxu0
    %v2207 = vpop.f32.mrf.mxu0
    %2208 = vdwg.mxu0
    %2209 = vmatprep.subr.bf16.mxu0 %v705
    %2210 = vmatpush1.bf16.msra.mxu0 %v704
    %2211 = vmatprep.subr.bf16.mxu0 %v701
    %2212 = vmatpush1.bf16.msra.mxu0 %v700
    %2213 = vmatprep.subr.bf16.mxu0 %v697
    %2214 = vmatpush1.bf16.msra.mxu0 %v696
    %2215 = vmatprep.subr.bf16.mxu0 %v693
    %2216 = vmatpush1.bf16.msra.mxu0 %v692
    %2217 = vmatprep.subr.bf16.mxu0 %v689
    %2218 = vmatpush1.bf16.msra.mxu0 %v688
    %2219 = vmatprep.subr.bf16.mxu0 %v685
    %2220 = vmatpush1.bf16.msra.mxu0 %v684
    %2221 = vmatprep.subr.bf16.mxu0 %v681
    %2222 = vmatpush1.bf16.msra.mxu0 %v680
    %2223 = vmatprep.subr.bf16.mxu0 %v677
    %2224 = vmatpush1.bf16.msra.mxu0 %v676
    %2225 = vmatprep.subr.bf16.mxu0 0
    %2226 = vmatpush2.bf16.msra.mxu0 0
    %2227 = vmatprep.subr.bf16.mxu0 0
    %2228 = vmatpush2.bf16.msra.mxu0 0
    %2229 = vmatprep.subr.bf16.mxu0 0
    %2230 = vmatpush2.bf16.msra.mxu0 0
    %2231 = vmatprep.subr.bf16.mxu0 0
    %2232 = vmatpush2.bf16.msra.mxu0 0
    %2233 = vmatprep.subr.bf16.mxu0 0
    %2234 = vmatpush2.bf16.msra.mxu0 0
    %2235 = vmatprep.subr.bf16.mxu0 0
    %2236 = vmatpush2.bf16.msra.mxu0 0
    %2237 = vmatprep.subr.bf16.mxu0 0
    %2238 = vmatpush2.bf16.msra.mxu0 0
    %2239 = vmatprep.subr.bf16.mxu0 0
    %2240 = vmatpush2.bf16.msra.mxu0 0
    %2241 = vmatprep.mubr.bf16.mxu0 0
    %2242 = vmatmul.mubr.bf16.gmra.mxu0 %v1973
    %v2243 = vpop.f32.mrf.mxu0
    %v2244 = vadd.f32 0.0, %v2243
    %v2245 = vpop.f32.mrf.mxu0
    %v2246 = vadd.f32 0.0, %v2245
    %v2247 = vpop.f32.mrf.mxu0
    %v2248 = vpop.f32.mrf.mxu0
    %2249 = vdwg.mxu0
    %v2250 = vadd.f32 %v268, %v2203
    %v2251 = vadd.f32 %v270, %v2205
    %v2252 = vadd.f32 %v311, %v2244
    %v2253 = vadd.f32 %v313, %v2246
    %v2254 = vxor.u32 %v2250, 2147483648
    %v2255 = vxor.u32 %v2251, 2147483648
    %v2256 = vxor.u32 %v2252, 2147483648
    %v2257 = vmul.f32 %v2254, 1.442695
    %v2258 = vpow.pop %v2257
    %v2259 = vmul.f32 %v2255, 1.442695
    %v2260 = vpow.pop %v2259
    %v2261 = vmul.f32 %v2256, 1.442695
    %v2262 = vpow.pop %v2261
    %v2263 = vadd.f32 %v2258, 1.0
    %v2264 = vadd.f32 %v2260, 1.0
    %v2265 = vadd.f32 %v2262, 1.0
    %v2266 = vrcp.pop %v2263
    %v2267 = vmul.f32 1.0, %v2266
    %v2268 = vrcp.pop %v2264
    %v2269 = vmul.f32 1.0, %v2268
    %v2270 = vrcp.pop %v2265
    %v2271 = vmul.f32 1.0, %v2270
    %v2272 = vtanh.pop %v2253
    %v2274 = vrot.slane %v1968, 6
    %v2276 = vmul.f32 %v2269, %v2274
    %v2277 = vmul.f32 %v2267, %v2272
    %v2278 = vadd.f32 %v2276, %v2277
    %v2279 = vtanh.pop %v2278
    %v2280 = vmul.f32 %v2271, %v2279
    %v2281 = vpack.c.bf16 %v2280, %v2280
    %2282 = vmatprep.subr.bf16.mxu0 %v974
    %2283 = vmatpush1.bf16.msra.mxu0 %v973
    %2284 = vmatprep.subr.bf16.mxu0 %v970
    %2285 = vmatpush1.bf16.msra.mxu0 %v969
    %2286 = vmatprep.subr.bf16.mxu0 %v966
    %2287 = vmatpush1.bf16.msra.mxu0 %v965
    %2288 = vmatprep.subr.bf16.mxu0 %v962
    %2289 = vmatpush1.bf16.msra.mxu0 %v961
    %2290 = vmatprep.subr.bf16.mxu0 %v958
    %2291 = vmatpush1.bf16.msra.mxu0 %v957
    %2292 = vmatprep.subr.bf16.mxu0 %v954
    %2293 = vmatpush1.bf16.msra.mxu0 %v953
    %2294 = vmatprep.subr.bf16.mxu0 %v950
    %2295 = vmatpush1.bf16.msra.mxu0 %v949
    %2296 = vmatprep.subr.bf16.mxu0 %v946
    %2297 = vmatpush1.bf16.msra.mxu0 %v945
    %2298 = vmatprep.subr.bf16.mxu0 0
    %2299 = vmatpush2.bf16.msra.mxu0 0
    %2300 = vmatprep.subr.bf16.mxu0 0
    %2301 = vmatpush2.bf16.msra.mxu0 0
    %2302 = vmatprep.subr.bf16.mxu0 0
    %2303 = vmatpush2.bf16.msra.mxu0 0
    %2304 = vmatprep.subr.bf16.mxu0 0
    %2305 = vmatpush2.bf16.msra.mxu0 0
    %2306 = vmatprep.subr.bf16.mxu0 0
    %2307 = vmatpush2.bf16.msra.mxu0 0
    %2308 = vmatprep.subr.bf16.mxu0 0
    %2309 = vmatpush2.bf16.msra.mxu0 0
    %2310 = vmatprep.subr.bf16.mxu0 0
    %2311 = vmatpush2.bf16.msra.mxu0 0
    %2312 = vmatprep.subr.bf16.mxu0 0
    %2313 = vmatpush2.bf16.msra.mxu0 0
    %2314 = vmatprep.mubr.bf16.mxu0 0
    %2315 = vmatmul.mubr.bf16.gmra.mxu0 %v2281
    %v2316 = vpop.f32.mrf.mxu0
    %v2317 = vadd.f32 0.0, %v2316
    %v2318 = vpop.f32.mrf.mxu0
    %v2319 = vadd.f32 0.0, %v2318
    %v2320 = vpop.f32.mrf.mxu0
    %v2321 = vpop.f32.mrf.mxu0
    %2322 = vdwg.mxu0
    %2323 = vmatprep.subr.bf16.mxu0 %v976
    %2324 = vmatpush1.bf16.msra.mxu0 %v975
    %2325 = vmatprep.subr.bf16.mxu0 %v972
    %2326 = vmatpush1.bf16.msra.mxu0 %v971
    %2327 = vmatprep.subr.bf16.mxu0 %v968
    %2328 = vmatpush1.bf16.msra.mxu0 %v967
    %2329 = vmatprep.subr.bf16.mxu0 %v964
    %2330 = vmatpush1.bf16.msra.mxu0 %v963
    %2331 = vmatprep.subr.bf16.mxu0 %v960
    %2332 = vmatpush1.bf16.msra.mxu0 %v959
    %2333 = vmatprep.subr.bf16.mxu0 %v956
    %2334 = vmatpush1.bf16.msra.mxu0 %v955
    %2335 = vmatprep.subr.bf16.mxu0 %v952
    %2336 = vmatpush1.bf16.msra.mxu0 %v951
    %2337 = vmatprep.subr.bf16.mxu0 %v948
    %2338 = vmatpush1.bf16.msra.mxu0 %v947
    %2339 = vmatprep.subr.bf16.mxu0 0
    %2340 = vmatpush2.bf16.msra.mxu0 0
    %2341 = vmatprep.subr.bf16.mxu0 0
    %2342 = vmatpush2.bf16.msra.mxu0 0
    %2343 = vmatprep.subr.bf16.mxu0 0
    %2344 = vmatpush2.bf16.msra.mxu0 0
    %2345 = vmatprep.subr.bf16.mxu0 0
    %2346 = vmatpush2.bf16.msra.mxu0 0
    %2347 = vmatprep.subr.bf16.mxu0 0
    %2348 = vmatpush2.bf16.msra.mxu0 0
    %2349 = vmatprep.subr.bf16.mxu0 0
    %2350 = vmatpush2.bf16.msra.mxu0 0
    %2351 = vmatprep.subr.bf16.mxu0 0
    %2352 = vmatpush2.bf16.msra.mxu0 0
    %2353 = vmatprep.subr.bf16.mxu0 0
    %2354 = vmatpush2.bf16.msra.mxu0 0
    %2355 = vmatprep.mubr.bf16.mxu0 0
    %2356 = vmatmul.mubr.bf16.gmra.mxu0 %v2281
    %v2357 = vpop.f32.mrf.mxu0
    %v2358 = vadd.f32 0.0, %v2357
    %v2359 = vpop.f32.mrf.mxu0
    %v2360 = vadd.f32 0.0, %v2359
    %v2361 = vpop.f32.mrf.mxu0
    %v2362 = vpop.f32.mrf.mxu0
    %2363 = vdwg.mxu0
    %v2364 = vadd.f32 %v2121, %v2317
    %v2365 = vadd.f32 %v2123, %v2319
    %v2366 = vadd.f32 %v2162, %v2358
    %v2367 = vadd.f32 %v2164, %v2360
    %v2368 = vxor.u32 %v2364, 2147483648
    %v2369 = vxor.u32 %v2365, 2147483648
    %v2370 = vxor.u32 %v2366, 2147483648
    %v2371 = vmul.f32 %v2368, 1.442695
    %v2372 = vpow.pop %v2371
    %v2373 = vmul.f32 %v2369, 1.442695
    %v2374 = vpow.pop %v2373
    %v2375 = vmul.f32 %v2370, 1.442695
    %v2376 = vpow.pop %v2375
    %v2377 = vadd.f32 %v2372, 1.0
    %v2378 = vadd.f32 %v2374, 1.0
    %v2379 = vadd.f32 %v2376, 1.0
    %v2380 = vrcp.pop %v2377
    %v2381 = vmul.f32 1.0, %v2380
    %v2382 = vrcp.pop %v2378
    %v2383 = vmul.f32 1.0, %v2382
    %v2384 = vrcp.pop %v2379
    %v2385 = vmul.f32 1.0, %v2384
    %v2386 = vtanh.pop %v2367
    %v2387 = vmul.f32 %v2383, %v2082
    %v2388 = vmul.f32 %v2381, %v2386
    %v2389 = vadd.f32 %v2387, %v2388
    %v2390 = vtanh.pop %v2389
    %v2391 = vmul.f32 %v2385, %v2390
    %v2392 = vpack.c.bf16 %v2391, %v2391
    %2393 = vmatprep.subr.bf16.mxu0 %v461
    %2394 = vmatpush1.bf16.msra.mxu0 %v460
    %2395 = vmatprep.subr.bf16.mxu0 %v457
    %2396 = vmatpush1.bf16.msra.mxu0 %v456
    %2397 = vmatprep.subr.bf16.mxu0 %v453
    %2398 = vmatpush1.bf16.msra.mxu0 %v452
    %2399 = vmatprep.subr.bf16.mxu0 %v449
    %2400 = vmatpush1.bf16.msra.mxu0 %v448
    %2401 = vmatprep.subr.bf16.mxu0 %v445
    %2402 = vmatpush1.bf16.msra.mxu0 %v444
    %2403 = vmatprep.subr.bf16.mxu0 %v441
    %2404 = vmatpush1.bf16.msra.mxu0 %v440
    %2405 = vmatprep.subr.bf16.mxu0 %v437
    %2406 = vmatpush1.bf16.msra.mxu0 %v436
    %2407 = vmatprep.subr.bf16.mxu0 %v433
    %2408 = vmatpush1.bf16.msra.mxu0 %v432
    %2409 = vmatprep.subr.bf16.mxu0 0
    %2410 = vmatpush2.bf16.msra.mxu0 0
    %2411 = vmatprep.subr.bf16.mxu0 0
    %2412 = vmatpush2.bf16.msra.mxu0 0
    %2413 = vmatprep.subr.bf16.mxu0 0
    %2414 = vmatpush2.bf16.msra.mxu0 0
    %2415 = vmatprep.subr.bf16.mxu0 0
    %2416 = vmatpush2.bf16.msra.mxu0 0
    %2417 = vmatprep.subr.bf16.mxu0 0
    %2418 = vmatpush2.bf16.msra.mxu0 0
    %2419 = vmatprep.subr.bf16.mxu0 0
    %2420 = vmatpush2.bf16.msra.mxu0 0
    %2421 = vmatprep.subr.bf16.mxu0 0
    %2422 = vmatpush2.bf16.msra.mxu0 0
    %2423 = vmatprep.subr.bf16.mxu0 0
    %2424 = vmatpush2.bf16.msra.mxu0 0
    %2425 = vmatprep.mubr.bf16.mxu0 0
    %2426 = vmatmul.mubr.bf16.gmra.mxu0 %v2392
    %v2427 = vpop.f32.mrf.mxu0
    %v2428 = vadd.f32 %v319, %v2427
    %v2429 = vpop.f32.mrf.mxu0
    %v2430 = vadd.f32 %v323, %v2429
    %v2431 = vpop.f32.mrf.mxu0
    %v2432 = vpop.f32.mrf.mxu0
    %2433 = vdwg.mxu0
    %2434 = vmatprep.subr.bf16.mxu0 %v463
    %2435 = vmatpush1.bf16.msra.mxu0 %v462
    %2436 = vmatprep.subr.bf16.mxu0 %v459
    %2437 = vmatpush1.bf16.msra.mxu0 %v458
    %2438 = vmatprep.subr.bf16.mxu0 %v455
    %2439 = vmatpush1.bf16.msra.mxu0 %v454
    %2440 = vmatprep.subr.bf16.mxu0 %v451
    %2441 = vmatpush1.bf16.msra.mxu0 %v450
    %2442 = vmatprep.subr.bf16.mxu0 %v447
    %2443 = vmatpush1.bf16.msra.mxu0 %v446
    %2444 = vmatprep.subr.bf16.mxu0 %v443
    %2445 = vmatpush1.bf16.msra.mxu0 %v442
    %2446 = vmatprep.subr.bf16.mxu0 %v439
    %2447 = vmatpush1.bf16.msra.mxu0 %v438
    %2448 = vmatprep.subr.bf16.mxu0 %v435
    %2449 = vmatpush1.bf16.msra.mxu0 %v434
    %2450 = vmatprep.subr.bf16.mxu0 0
    %2451 = vmatpush2.bf16.msra.mxu0 0
    %2452 = vmatprep.subr.bf16.mxu0 0
    %2453 = vmatpush2.bf16.msra.mxu0 0
    %2454 = vmatprep.subr.bf16.mxu0 0
    %2455 = vmatpush2.bf16.msra.mxu0 0
    %2456 = vmatprep.subr.bf16.mxu0 0
    %2457 = vmatpush2.bf16.msra.mxu0 0
    %2458 = vmatprep.subr.bf16.mxu0 0
    %2459 = vmatpush2.bf16.msra.mxu0 0
    %2460 = vmatprep.subr.bf16.mxu0 0
    %2461 = vmatpush2.bf16.msra.mxu0 0
    %2462 = vmatprep.subr.bf16.mxu0 0
    %2463 = vmatpush2.bf16.msra.mxu0 0
    %2464 = vmatprep.subr.bf16.mxu0 0
    %2465 = vmatpush2.bf16.msra.mxu0 0
    %2466 = vmatprep.mubr.bf16.mxu0 0
    %2467 = vmatmul.mubr.bf16.gmra.mxu0 %v2392
    %v2468 = vpop.f32.mrf.mxu0
    %v2469 = vadd.f32 %v327, %v2468
    %v2470 = vpop.f32.mrf.mxu0
    %v2471 = vadd.f32 %v331, %v2470
    %v2472 = vpop.f32.mrf.mxu0
    %v2473 = vpop.f32.mrf.mxu0
    %2474 = vdwg.mxu0
    %2475 = vmatprep.subr.bf16.mxu0 %v703
    %2476 = vmatpush1.bf16.msra.mxu0 %v702
    %2477 = vmatprep.subr.bf16.mxu0 %v699
    %2478 = vmatpush1.bf16.msra.mxu0 %v698
    %2479 = vmatprep.subr.bf16.mxu0 %v695
    %2480 = vmatpush1.bf16.msra.mxu0 %v694
    %2481 = vmatprep.subr.bf16.mxu0 %v691
    %2482 = vmatpush1.bf16.msra.mxu0 %v690
    %2483 = vmatprep.subr.bf16.mxu0 %v687
    %2484 = vmatpush1.bf16.msra.mxu0 %v686
    %2485 = vmatprep.subr.bf16.mxu0 %v683
    %2486 = vmatpush1.bf16.msra.mxu0 %v682
    %2487 = vmatprep.subr.bf16.mxu0 %v679
    %2488 = vmatpush1.bf16.msra.mxu0 %v678
    %2489 = vmatprep.subr.bf16.mxu0 %v675
    %2490 = vmatpush1.bf16.msra.mxu0 %v674
    %2491 = vmatprep.subr.bf16.mxu0 0
    %2492 = vmatpush2.bf16.msra.mxu0 0
    %2493 = vmatprep.subr.bf16.mxu0 0
    %2494 = vmatpush2.bf16.msra.mxu0 0
    %2495 = vmatprep.subr.bf16.mxu0 0
    %2496 = vmatpush2.bf16.msra.mxu0 0
    %2497 = vmatprep.subr.bf16.mxu0 0
    %2498 = vmatpush2.bf16.msra.mxu0 0
    %2499 = vmatprep.subr.bf16.mxu0 0
    %2500 = vmatpush2.bf16.msra.mxu0 0
    %2501 = vmatprep.subr.bf16.mxu0 0
    %2502 = vmatpush2.bf16.msra.mxu0 0
    %2503 = vmatprep.subr.bf16.mxu0 0
    %2504 = vmatpush2.bf16.msra.mxu0 0
    %2505 = vmatprep.subr.bf16.mxu0 0
    %2506 = vmatpush2.bf16.msra.mxu0 0
    %2507 = vmatprep.mubr.bf16.mxu0 0
    %2508 = vmatmul.mubr.bf16.gmra.mxu0 %v2281
    %v2509 = vpop.f32.mrf.mxu0
    %v2510 = vadd.f32 0.0, %v2509
    %v2511 = vpop.f32.mrf.mxu0
    %v2512 = vadd.f32 0.0, %v2511
    %v2513 = vpop.f32.mrf.mxu0
    %v2514 = vpop.f32.mrf.mxu0
    %2515 = vdwg.mxu0
    %2516 = vmatprep.subr.bf16.mxu0 %v705
    %2517 = vmatpush1.bf16.msra.mxu0 %v704
    %2518 = vmatprep.subr.bf16.mxu0 %v701
    %2519 = vmatpush1.bf16.msra.mxu0 %v700
    %2520 = vmatprep.subr.bf16.mxu0 %v697
    %2521 = vmatpush1.bf16.msra.mxu0 %v696
    %2522 = vmatprep.subr.bf16.mxu0 %v693
    %2523 = vmatpush1.bf16.msra.mxu0 %v692
    %2524 = vmatprep.subr.bf16.mxu0 %v689
    %2525 = vmatpush1.bf16.msra.mxu0 %v688
    %2526 = vmatprep.subr.bf16.mxu0 %v685
    %2527 = vmatpush1.bf16.msra.mxu0 %v684
    %2528 = vmatprep.subr.bf16.mxu0 %v681
    %2529 = vmatpush1.bf16.msra.mxu0 %v680
    %2530 = vmatprep.subr.bf16.mxu0 %v677
    %2531 = vmatpush1.bf16.msra.mxu0 %v676
    %2532 = vmatprep.subr.bf16.mxu0 0
    %2533 = vmatpush2.bf16.msra.mxu0 0
    %2534 = vmatprep.subr.bf16.mxu0 0
    %2535 = vmatpush2.bf16.msra.mxu0 0
    %2536 = vmatprep.subr.bf16.mxu0 0
    %2537 = vmatpush2.bf16.msra.mxu0 0
    %2538 = vmatprep.subr.bf16.mxu0 0
    %2539 = vmatpush2.bf16.msra.mxu0 0
    %2540 = vmatprep.subr.bf16.mxu0 0
    %2541 = vmatpush2.bf16.msra.mxu0 0
    %2542 = vmatprep.subr.bf16.mxu0 0
    %2543 = vmatpush2.bf16.msra.mxu0 0
    %2544 = vmatprep.subr.bf16.mxu0 0
    %2545 = vmatpush2.bf16.msra.mxu0 0
    %2546 = vmatprep.subr.bf16.mxu0 0
    %2547 = vmatpush2.bf16.msra.mxu0 0
    %2548 = vmatprep.mubr.bf16.mxu0 0
    %2549 = vmatmul.mubr.bf16.gmra.mxu0 %v2281
    %v2550 = vpop.f32.mrf.mxu0
    %v2551 = vadd.f32 0.0, %v2550
    %v2552 = vpop.f32.mrf.mxu0
    %v2553 = vadd.f32 0.0, %v2552
    %v2554 = vpop.f32.mrf.mxu0
    %v2555 = vpop.f32.mrf.mxu0
    %2556 = vdwg.mxu0
    %v2561 = vrot.slane %v2510, 6
    %v2562 = vrot.slane %v2512, 6
    %v2563 = vrot.slane %v2551, 6
    %v2564 = vrot.slane %v2553, 6
    %v2569 = vadd.f32 %v268, %v2561
    %v2570 = vadd.f32 %v270, %v2562
    %v2571 = vadd.f32 %v311, %v2563
    %v2572 = vadd.f32 %v313, %v2564
    %v2573 = vxor.u32 %v2569, 2147483648
    %v2574 = vxor.u32 %v2570, 2147483648
    %v2575 = vxor.u32 %v2571, 2147483648
    %v2576 = vmul.f32 %v2573, 1.442695
    %v2577 = vpow.pop %v2576
    %v2578 = vmul.f32 %v2574, 1.442695
    %v2579 = vpow.pop %v2578
    %v2580 = vmul.f32 %v2575, 1.442695
    %v2581 = vpow.pop %v2580
    %v2582 = vadd.f32 %v2577, 1.0
    %v2583 = vadd.f32 %v2579, 1.0
    %v2584 = vadd.f32 %v2581, 1.0
    %v2585 = vrcp.pop %v2582
    %v2586 = vmul.f32 1.0, %v2585
    %v2587 = vrcp.pop %v2583
    %v2588 = vmul.f32 1.0, %v2587
    %v2589 = vrcp.pop %v2584
    %v2590 = vmul.f32 1.0, %v2589
    %v2591 = vtanh.pop %v2572
    %v2593 = vrot.slane %v2278, 6
    %v2595 = vmul.f32 %v2588, %v2593
    %v2596 = vmul.f32 %v2586, %v2591
    %v2597 = vadd.f32 %v2595, %v2596
    %v2598 = vtanh.pop %v2597
    %v2599 = vmul.f32 %v2590, %v2598
    %v2600 = vpack.c.bf16 %v2599, %v2599
    %v2602 = vrot.slane %v2600, 1
    %2604 = vmatprep.subr.bf16.mxu0 %v974
    %2605 = vmatpush1.bf16.msra.mxu0 %v973
    %2606 = vmatprep.subr.bf16.mxu0 %v970
    %2607 = vmatpush1.bf16.msra.mxu0 %v969
    %2608 = vmatprep.subr.bf16.mxu0 %v966
    %2609 = vmatpush1.bf16.msra.mxu0 %v965
    %2610 = vmatprep.subr.bf16.mxu0 %v962
    %2611 = vmatpush1.bf16.msra.mxu0 %v961
    %2612 = vmatprep.subr.bf16.mxu0 %v958
    %2613 = vmatpush1.bf16.msra.mxu0 %v957
    %2614 = vmatprep.subr.bf16.mxu0 %v954
    %2615 = vmatpush1.bf16.msra.mxu0 %v953
    %2616 = vmatprep.subr.bf16.mxu0 %v950
    %2617 = vmatpush1.bf16.msra.mxu0 %v949
    %2618 = vmatprep.subr.bf16.mxu0 %v946
    %2619 = vmatpush1.bf16.msra.mxu0 %v945
    %2620 = vmatprep.subr.bf16.mxu0 0
    %2621 = vmatpush2.bf16.msra.mxu0 0
    %2622 = vmatprep.subr.bf16.mxu0 0
    %2623 = vmatpush2.bf16.msra.mxu0 0
    %2624 = vmatprep.subr.bf16.mxu0 0
    %2625 = vmatpush2.bf16.msra.mxu0 0
    %2626 = vmatprep.subr.bf16.mxu0 0
    %2627 = vmatpush2.bf16.msra.mxu0 0
    %2628 = vmatprep.subr.bf16.mxu0 0
    %2629 = vmatpush2.bf16.msra.mxu0 0
    %2630 = vmatprep.subr.bf16.mxu0 0
    %2631 = vmatpush2.bf16.msra.mxu0 0
    %2632 = vmatprep.subr.bf16.mxu0 0
    %2633 = vmatpush2.bf16.msra.mxu0 0
    %2634 = vmatprep.subr.bf16.mxu0 0
    %2635 = vmatpush2.bf16.msra.mxu0 0
    %2636 = vmatprep.mubr.bf16.mxu0 0
    %2637 = vmatmul.mubr.bf16.gmra.mxu0 %v2602
    %v2638 = vpop.f32.mrf.mxu0
    %v2639 = vadd.f32 0.0, %v2638
    %v2640 = vpop.f32.mrf.mxu0
    %v2641 = vadd.f32 0.0, %v2640
    %v2642 = vpop.f32.mrf.mxu0
    %v2643 = vpop.f32.mrf.mxu0
    %2644 = vdwg.mxu0
    %2645 = vmatprep.subr.bf16.mxu0 %v976
    %2646 = vmatpush1.bf16.msra.mxu0 %v975
    %2647 = vmatprep.subr.bf16.mxu0 %v972
    %2648 = vmatpush1.bf16.msra.mxu0 %v971
    %2649 = vmatprep.subr.bf16.mxu0 %v968
    %2650 = vmatpush1.bf16.msra.mxu0 %v967
    %2651 = vmatprep.subr.bf16.mxu0 %v964
    %2652 = vmatpush1.bf16.msra.mxu0 %v963
    %2653 = vmatprep.subr.bf16.mxu0 %v960
    %2654 = vmatpush1.bf16.msra.mxu0 %v959
    %2655 = vmatprep.subr.bf16.mxu0 %v956
    %2656 = vmatpush1.bf16.msra.mxu0 %v955
    %2657 = vmatprep.subr.bf16.mxu0 %v952
    %2658 = vmatpush1.bf16.msra.mxu0 %v951
    %2659 = vmatprep.subr.bf16.mxu0 %v948
    %2660 = vmatpush1.bf16.msra.mxu0 %v947
    %2661 = vmatprep.subr.bf16.mxu0 0
    %2662 = vmatpush2.bf16.msra.mxu0 0
    %2663 = vmatprep.subr.bf16.mxu0 0
    %2664 = vmatpush2.bf16.msra.mxu0 0
    %2665 = vmatprep.subr.bf16.mxu0 0
    %2666 = vmatpush2.bf16.msra.mxu0 0
    %2667 = vmatprep.subr.bf16.mxu0 0
    %2668 = vmatpush2.bf16.msra.mxu0 0
    %2669 = vmatprep.subr.bf16.mxu0 0
    %2670 = vmatpush2.bf16.msra.mxu0 0
    %2671 = vmatprep.subr.bf16.mxu0 0
    %2672 = vmatpush2.bf16.msra.mxu0 0
    %2673 = vmatprep.subr.bf16.mxu0 0
    %2674 = vmatpush2.bf16.msra.mxu0 0
    %2675 = vmatprep.subr.bf16.mxu0 0
    %2676 = vmatpush2.bf16.msra.mxu0 0
    %2677 = vmatprep.mubr.bf16.mxu0 0
    %2678 = vmatmul.mubr.bf16.gmra.mxu0 %v2602
    %v2679 = vpop.f32.mrf.mxu0
    %v2680 = vadd.f32 0.0, %v2679
    %v2681 = vpop.f32.mrf.mxu0
    %v2682 = vadd.f32 0.0, %v2681
    %v2683 = vpop.f32.mrf.mxu0
    %v2684 = vpop.f32.mrf.mxu0
    %2685 = vdwg.mxu0
    %v2686 = vadd.f32 %v2428, %v2639
    %v2687 = vadd.f32 %v2430, %v2641
    %v2688 = vadd.f32 %v2469, %v2680
    %v2689 = vadd.f32 %v2471, %v2682
    %v2690 = vxor.u32 %v2686, 2147483648
    %v2691 = vxor.u32 %v2687, 2147483648
    %v2692 = vxor.u32 %v2688, 2147483648
    %v2693 = vmul.f32 %v2690, 1.442695
    %v2694 = vpow.pop %v2693
    %v2695 = vmul.f32 %v2691, 1.442695
    %v2696 = vpow.pop %v2695
    %v2697 = vmul.f32 %v2692, 1.442695
    %v2698 = vpow.pop %v2697
    %v2699 = vadd.f32 %v2694, 1.0
    %v2700 = vadd.f32 %v2696, 1.0
    %v2701 = vadd.f32 %v2698, 1.0
    %v2702 = vrcp.pop %v2699
    %v2703 = vmul.f32 1.0, %v2702
    %v2704 = vrcp.pop %v2700
    %v2705 = vmul.f32 1.0, %v2704
    %v2706 = vrcp.pop %v2701
    %v2707 = vmul.f32 1.0, %v2706
    %v2708 = vtanh.pop %v2689
    %v2709 = vmul.f32 %v2705, %v2389
    %v2710 = vmul.f32 %v2703, %v2708
    %v2711 = vadd.f32 %v2709, %v2710
    %v2712 = vtanh.pop %v2711
    %v2713 = vmul.f32 %v2707, %v2712
    %v2714 = vpack.c.bf16 %v2713, %v2713
    %2715 = vmatprep.subr.bf16.mxu0 %v461
    %2716 = vmatpush1.bf16.msra.mxu0 %v460
    %2717 = vmatprep.subr.bf16.mxu0 %v457
    %2718 = vmatpush1.bf16.msra.mxu0 %v456
    %2719 = vmatprep.subr.bf16.mxu0 %v453
    %2720 = vmatpush1.bf16.msra.mxu0 %v452
    %2721 = vmatprep.subr.bf16.mxu0 %v449
    %2722 = vmatpush1.bf16.msra.mxu0 %v448
    %2723 = vmatprep.subr.bf16.mxu0 %v445
    %2724 = vmatpush1.bf16.msra.mxu0 %v444
    %2725 = vmatprep.subr.bf16.mxu0 %v441
    %2726 = vmatpush1.bf16.msra.mxu0 %v440
    %2727 = vmatprep.subr.bf16.mxu0 %v437
    %2728 = vmatpush1.bf16.msra.mxu0 %v436
    %2729 = vmatprep.subr.bf16.mxu0 %v433
    %2730 = vmatpush1.bf16.msra.mxu0 %v432
    %2731 = vmatprep.subr.bf16.mxu0 0
    %2732 = vmatpush2.bf16.msra.mxu0 0
    %2733 = vmatprep.subr.bf16.mxu0 0
    %2734 = vmatpush2.bf16.msra.mxu0 0
    %2735 = vmatprep.subr.bf16.mxu0 0
    %2736 = vmatpush2.bf16.msra.mxu0 0
    %2737 = vmatprep.subr.bf16.mxu0 0
    %2738 = vmatpush2.bf16.msra.mxu0 0
    %2739 = vmatprep.subr.bf16.mxu0 0
    %2740 = vmatpush2.bf16.msra.mxu0 0
    %2741 = vmatprep.subr.bf16.mxu0 0
    %2742 = vmatpush2.bf16.msra.mxu0 0
    %2743 = vmatprep.subr.bf16.mxu0 0
    %2744 = vmatpush2.bf16.msra.mxu0 0
    %2745 = vmatprep.subr.bf16.mxu0 0
    %2746 = vmatpush2.bf16.msra.mxu0 0
    %2747 = vmatprep.mubr.bf16.mxu0 0
    %2748 = vmatmul.mubr.bf16.gmra.mxu0 %v2714
    %v2749 = vpop.f32.mrf.mxu0
    %v2750 = vadd.f32 %v319, %v2749
    %v2751 = vpop.f32.mrf.mxu0
    %v2752 = vadd.f32 %v323, %v2751
    %v2753 = vpop.f32.mrf.mxu0
    %v2754 = vpop.f32.mrf.mxu0
    %2755 = vdwg.mxu0
    %2756 = vmatprep.subr.bf16.mxu0 %v463
    %2757 = vmatpush1.bf16.msra.mxu0 %v462
    %2758 = vmatprep.subr.bf16.mxu0 %v459
    %2759 = vmatpush1.bf16.msra.mxu0 %v458
    %2760 = vmatprep.subr.bf16.mxu0 %v455
    %2761 = vmatpush1.bf16.msra.mxu0 %v454
    %2762 = vmatprep.subr.bf16.mxu0 %v451
    %2763 = vmatpush1.bf16.msra.mxu0 %v450
    %2764 = vmatprep.subr.bf16.mxu0 %v447
    %2765 = vmatpush1.bf16.msra.mxu0 %v446
    %2766 = vmatprep.subr.bf16.mxu0 %v443
    %2767 = vmatpush1.bf16.msra.mxu0 %v442
    %2768 = vmatprep.subr.bf16.mxu0 %v439
    %2769 = vmatpush1.bf16.msra.mxu0 %v438
    %2770 = vmatprep.subr.bf16.mxu0 %v435
    %2771 = vmatpush1.bf16.msra.mxu0 %v434
    %2772 = vmatprep.subr.bf16.mxu0 0
    %2773 = vmatpush2.bf16.msra.mxu0 0
    %2774 = vmatprep.subr.bf16.mxu0 0
    %2775 = vmatpush2.bf16.msra.mxu0 0
    %2776 = vmatprep.subr.bf16.mxu0 0
    %2777 = vmatpush2.bf16.msra.mxu0 0
    %2778 = vmatprep.subr.bf16.mxu0 0
    %2779 = vmatpush2.bf16.msra.mxu0 0
    %2780 = vmatprep.subr.bf16.mxu0 0
    %2781 = vmatpush2.bf16.msra.mxu0 0
    %2782 = vmatprep.subr.bf16.mxu0 0
    %2783 = vmatpush2.bf16.msra.mxu0 0
    %2784 = vmatprep.subr.bf16.mxu0 0
    %2785 = vmatpush2.bf16.msra.mxu0 0
    %2786 = vmatprep.subr.bf16.mxu0 0
    %2787 = vmatpush2.bf16.msra.mxu0 0
    %2788 = vmatprep.mubr.bf16.mxu0 0
    %2789 = vmatmul.mubr.bf16.gmra.mxu0 %v2714
    %v2790 = vpop.f32.mrf.mxu0
    %v2791 = vadd.f32 %v327, %v2790
    %v2792 = vpop.f32.mrf.mxu0
    %v2793 = vadd.f32 %v331, %v2792
    %v2794 = vpop.f32.mrf.mxu0
    %v2795 = vpop.f32.mrf.mxu0
    %2796 = vdwg.mxu0
    %2797 = vmatprep.subr.bf16.mxu0 %v703
    %2798 = vmatpush1.bf16.msra.mxu0 %v702
    %2799 = vmatprep.subr.bf16.mxu0 %v699
    %2800 = vmatpush1.bf16.msra.mxu0 %v698
    %2801 = vmatprep.subr.bf16.mxu0 %v695
    %2802 = vmatpush1.bf16.msra.mxu0 %v694
    %2803 = vmatprep.subr.bf16.mxu0 %v691
    %2804 = vmatpush1.bf16.msra.mxu0 %v690
    %2805 = vmatprep.subr.bf16.mxu0 %v687
    %2806 = vmatpush1.bf16.msra.mxu0 %v686
    %2807 = vmatprep.subr.bf16.mxu0 %v683
    %2808 = vmatpush1.bf16.msra.mxu0 %v682
    %2809 = vmatprep.subr.bf16.mxu0 %v679
    %2810 = vmatpush1.bf16.msra.mxu0 %v678
    %2811 = vmatprep.subr.bf16.mxu0 %v675
    %2812 = vmatpush1.bf16.msra.mxu0 %v674
    %2813 = vmatprep.subr.bf16.mxu0 0
    %2814 = vmatpush2.bf16.msra.mxu0 0
    %2815 = vmatprep.subr.bf16.mxu0 0
    %2816 = vmatpush2.bf16.msra.mxu0 0
    %2817 = vmatprep.subr.bf16.mxu0 0
    %2818 = vmatpush2.bf16.msra.mxu0 0
    %2819 = vmatprep.subr.bf16.mxu0 0
    %2820 = vmatpush2.bf16.msra.mxu0 0
    %2821 = vmatprep.subr.bf16.mxu0 0
    %2822 = vmatpush2.bf16.msra.mxu0 0
    %2823 = vmatprep.subr.bf16.mxu0 0
    %2824 = vmatpush2.bf16.msra.mxu0 0
    %2825 = vmatprep.subr.bf16.mxu0 0
    %2826 = vmatpush2.bf16.msra.mxu0 0
    %2827 = vmatprep.subr.bf16.mxu0 0
    %2828 = vmatpush2.bf16.msra.mxu0 0
    %2829 = vmatprep.mubr.bf16.mxu0 0
    %2830 = vmatmul.mubr.bf16.gmra.mxu0 %v2602
    %v2831 = vpop.f32.mrf.mxu0
    %v2832 = vadd.f32 0.0, %v2831
    %v2833 = vpop.f32.mrf.mxu0
    %v2834 = vadd.f32 0.0, %v2833
    %v2835 = vpop.f32.mrf.mxu0
    %v2836 = vpop.f32.mrf.mxu0
    %2837 = vdwg.mxu0
    %2838 = vmatprep.subr.bf16.mxu0 %v705
    %2839 = vmatpush1.bf16.msra.mxu0 %v704
    %2840 = vmatprep.subr.bf16.mxu0 %v701
    %2841 = vmatpush1.bf16.msra.mxu0 %v700
    %2842 = vmatprep.subr.bf16.mxu0 %v697
    %2843 = vmatpush1.bf16.msra.mxu0 %v696
    %2844 = vmatprep.subr.bf16.mxu0 %v693
    %2845 = vmatpush1.bf16.msra.mxu0 %v692
    %2846 = vmatprep.subr.bf16.mxu0 %v689
    %2847 = vmatpush1.bf16.msra.mxu0 %v688
    %2848 = vmatprep.subr.bf16.mxu0 %v685
    %2849 = vmatpush1.bf16.msra.mxu0 %v684
    %2850 = vmatprep.subr.bf16.mxu0 %v681
    %2851 = vmatpush1.bf16.msra.mxu0 %v680
    %2852 = vmatprep.subr.bf16.mxu0 %v677
    %2853 = vmatpush1.bf16.msra.mxu0 %v676
    %2854 = vmatprep.subr.bf16.mxu0 0
    %2855 = vmatpush2.bf16.msra.mxu0 0
    %2856 = vmatprep.subr.bf16.mxu0 0
    %2857 = vmatpush2.bf16.msra.mxu0 0
    %2858 = vmatprep.subr.bf16.mxu0 0
    %2859 = vmatpush2.bf16.msra.mxu0 0
    %2860 = vmatprep.subr.bf16.mxu0 0
    %2861 = vmatpush2.bf16.msra.mxu0 0
    %2862 = vmatprep.subr.bf16.mxu0 0
    %2863 = vmatpush2.bf16.msra.mxu0 0
    %2864 = vmatprep.subr.bf16.mxu0 0
    %2865 = vmatpush2.bf16.msra.mxu0 0
    %2866 = vmatprep.subr.bf16.mxu0 0
    %2867 = vmatpush2.bf16.msra.mxu0 0
    %2868 = vmatprep.subr.bf16.mxu0 0
    %2869 = vmatpush2.bf16.msra.mxu0 0
    %2870 = vmatprep.mubr.bf16.mxu0 0
    %2871 = vmatmul.mubr.bf16.gmra.mxu0 %v2602
    %v2872 = vpop.f32.mrf.mxu0
    %v2873 = vadd.f32 0.0, %v2872
    %v2874 = vpop.f32.mrf.mxu0
    %v2875 = vadd.f32 0.0, %v2874
    %v2876 = vpop.f32.mrf.mxu0
    %v2877 = vpop.f32.mrf.mxu0
    %2878 = vdwg.mxu0
    %v2883 = vrot.slane %v2832, 4
    %v2884 = vrot.slane %v2834, 4
    %v2885 = vrot.slane %v2873, 4
    %v2886 = vrot.slane %v2875, 4
    %v2891 = vadd.f32 %v268, %v2883
    %v2892 = vadd.f32 %v270, %v2884
    %v2893 = vadd.f32 %v311, %v2885
    %v2894 = vadd.f32 %v313, %v2886
    %v2895 = vxor.u32 %v2891, 2147483648
    %v2896 = vxor.u32 %v2892, 2147483648
    %v2897 = vxor.u32 %v2893, 2147483648
    %v2898 = vmul.f32 %v2895, 1.442695
    %v2899 = vpow.pop %v2898
    %v2900 = vmul.f32 %v2896, 1.442695
    %v2901 = vpow.pop %v2900
    %v2902 = vmul.f32 %v2897, 1.442695
    %v2903 = vpow.pop %v2902
    %v2904 = vadd.f32 %v2899, 1.0
    %v2905 = vadd.f32 %v2901, 1.0
    %v2906 = vadd.f32 %v2903, 1.0
    %v2907 = vrcp.pop %v2904
    %v2908 = vmul.f32 1.0, %v2907
    %v2909 = vrcp.pop %v2905
    %v2910 = vmul.f32 1.0, %v2909
    %v2911 = vrcp.pop %v2906
    %v2912 = vmul.f32 1.0, %v2911
    %v2913 = vtanh.pop %v2894
    %v2915 = vrot.slane %v2597, 6
    %v2917 = vmul.f32 %v2910, %v2915
    %v2918 = vmul.f32 %v2908, %v2913
    %v2919 = vadd.f32 %v2917, %v2918
    %v2920 = vtanh.pop %v2919
    %v2921 = vmul.f32 %v2912, %v2920
    %v2922 = vpack.c.bf16 %v2921, %v2921
    %v2924 = vrot.slane %v2922, 2
    %2926 = vmatprep.subr.bf16.mxu0 %v974
    %2927 = vmatpush1.bf16.msra.mxu0 %v973
    %2928 = vmatprep.subr.bf16.mxu0 %v970
    %2929 = vmatpush1.bf16.msra.mxu0 %v969
    %2930 = vmatprep.subr.bf16.mxu0 %v966
    %2931 = vmatpush1.bf16.msra.mxu0 %v965
    %2932 = vmatprep.subr.bf16.mxu0 %v962
    %2933 = vmatpush1.bf16.msra.mxu0 %v961
    %2934 = vmatprep.subr.bf16.mxu0 %v958
    %2935 = vmatpush1.bf16.msra.mxu0 %v957
    %2936 = vmatprep.subr.bf16.mxu0 %v954
    %2937 = vmatpush1.bf16.msra.mxu0 %v953
    %2938 = vmatprep.subr.bf16.mxu0 %v950
    %2939 = vmatpush1.bf16.msra.mxu0 %v949
    %2940 = vmatprep.subr.bf16.mxu0 %v946
    %2941 = vmatpush1.bf16.msra.mxu0 %v945
    %2942 = vmatprep.subr.bf16.mxu0 0
    %2943 = vmatpush2.bf16.msra.mxu0 0
    %2944 = vmatprep.subr.bf16.mxu0 0
    %2945 = vmatpush2.bf16.msra.mxu0 0
    %2946 = vmatprep.subr.bf16.mxu0 0
    %2947 = vmatpush2.bf16.msra.mxu0 0
    %2948 = vmatprep.subr.bf16.mxu0 0
    %2949 = vmatpush2.bf16.msra.mxu0 0
    %2950 = vmatprep.subr.bf16.mxu0 0
    %2951 = vmatpush2.bf16.msra.mxu0 0
    %2952 = vmatprep.subr.bf16.mxu0 0
    %2953 = vmatpush2.bf16.msra.mxu0 0
    %2954 = vmatprep.subr.bf16.mxu0 0
    %2955 = vmatpush2.bf16.msra.mxu0 0
    %2956 = vmatprep.subr.bf16.mxu0 0
    %2957 = vmatpush2.bf16.msra.mxu0 0
    %2958 = vmatprep.mubr.bf16.mxu0 0
    %2959 = vmatmul.mubr.bf16.gmra.mxu0 %v2924
    %v2960 = vpop.f32.mrf.mxu0
    %v2961 = vadd.f32 0.0, %v2960
    %v2962 = vpop.f32.mrf.mxu0
    %v2963 = vadd.f32 0.0, %v2962
    %v2964 = vpop.f32.mrf.mxu0
    %v2965 = vpop.f32.mrf.mxu0
    %2966 = vdwg.mxu0
    %2967 = vmatprep.subr.bf16.mxu0 %v976
    %2968 = vmatpush1.bf16.msra.mxu0 %v975
    %2969 = vmatprep.subr.bf16.mxu0 %v972
    %2970 = vmatpush1.bf16.msra.mxu0 %v971
    %2971 = vmatprep.subr.bf16.mxu0 %v968
    %2972 = vmatpush1.bf16.msra.mxu0 %v967
    %2973 = vmatprep.subr.bf16.mxu0 %v964
    %2974 = vmatpush1.bf16.msra.mxu0 %v963
    %2975 = vmatprep.subr.bf16.mxu0 %v960
    %2976 = vmatpush1.bf16.msra.mxu0 %v959
    %2977 = vmatprep.subr.bf16.mxu0 %v956
    %2978 = vmatpush1.bf16.msra.mxu0 %v955
    %2979 = vmatprep.subr.bf16.mxu0 %v952
    %2980 = vmatpush1.bf16.msra.mxu0 %v951
    %2981 = vmatprep.subr.bf16.mxu0 %v948
    %2982 = vmatpush1.bf16.msra.mxu0 %v947
    %2983 = vmatprep.subr.bf16.mxu0 0
    %2984 = vmatpush2.bf16.msra.mxu0 0
    %2985 = vmatprep.subr.bf16.mxu0 0
    %2986 = vmatpush2.bf16.msra.mxu0 0
    %2987 = vmatprep.subr.bf16.mxu0 0
    %2988 = vmatpush2.bf16.msra.mxu0 0
    %2989 = vmatprep.subr.bf16.mxu0 0
    %2990 = vmatpush2.bf16.msra.mxu0 0
    %2991 = vmatprep.subr.bf16.mxu0 0
    %2992 = vmatpush2.bf16.msra.mxu0 0
    %2993 = vmatprep.subr.bf16.mxu0 0
    %2994 = vmatpush2.bf16.msra.mxu0 0
    %2995 = vmatprep.subr.bf16.mxu0 0
    %2996 = vmatpush2.bf16.msra.mxu0 0
    %2997 = vmatprep.subr.bf16.mxu0 0
    %2998 = vmatpush2.bf16.msra.mxu0 0
    %2999 = vmatprep.mubr.bf16.mxu0 0
    %3000 = vmatmul.mubr.bf16.gmra.mxu0 %v2924
    %v3001 = vpop.f32.mrf.mxu0
    %v3002 = vadd.f32 0.0, %v3001
    %v3003 = vpop.f32.mrf.mxu0
    %v3004 = vadd.f32 0.0, %v3003
    %v3005 = vpop.f32.mrf.mxu0
    %v3006 = vpop.f32.mrf.mxu0
    %3007 = vdwg.mxu0
    %v3008 = vadd.f32 %v2750, %v2961
    %v3009 = vadd.f32 %v2752, %v2963
    %v3010 = vadd.f32 %v2791, %v3002
    %v3011 = vadd.f32 %v2793, %v3004
    %v3012 = vxor.u32 %v3008, 2147483648
    %v3013 = vxor.u32 %v3009, 2147483648
    %v3014 = vxor.u32 %v3010, 2147483648
    %v3015 = vmul.f32 %v3012, 1.442695
    %v3016 = vpow.pop %v3015
    %v3017 = vmul.f32 %v3013, 1.442695
    %v3018 = vpow.pop %v3017
    %v3019 = vmul.f32 %v3014, 1.442695
    %v3020 = vpow.pop %v3019
    %v3021 = vadd.f32 %v3016, 1.0
    %v3022 = vadd.f32 %v3018, 1.0
    %v3023 = vadd.f32 %v3020, 1.0
    %v3024 = vrcp.pop %v3021
    %v3025 = vmul.f32 1.0, %v3024
    %v3026 = vrcp.pop %v3022
    %v3027 = vmul.f32 1.0, %v3026
    %v3028 = vrcp.pop %v3023
    %v3029 = vmul.f32 1.0, %v3028
    %v3030 = vtanh.pop %v3011
    %v3031 = vmul.f32 %v3027, %v2711
    %v3032 = vmul.f32 %v3025, %v3030
    %v3033 = vadd.f32 %v3031, %v3032
    %v3034 = vtanh.pop %v3033
    %v3035 = vmul.f32 %v3029, %v3034
    %v3036 = vpack.c.bf16 %v3035, %v3035
    %3037 = vmatprep.subr.bf16.mxu0 %v461
    %3038 = vmatpush1.bf16.msra.mxu0 %v460
    %3039 = vmatprep.subr.bf16.mxu0 %v457
    %3040 = vmatpush1.bf16.msra.mxu0 %v456
    %3041 = vmatprep.subr.bf16.mxu0 %v453
    %3042 = vmatpush1.bf16.msra.mxu0 %v452
    %3043 = vmatprep.subr.bf16.mxu0 %v449
    %3044 = vmatpush1.bf16.msra.mxu0 %v448
    %3045 = vmatprep.subr.bf16.mxu0 %v445
    %3046 = vmatpush1.bf16.msra.mxu0 %v444
    %3047 = vmatprep.subr.bf16.mxu0 %v441
    %3048 = vmatpush1.bf16.msra.mxu0 %v440
    %3049 = vmatprep.subr.bf16.mxu0 %v437
    %3050 = vmatpush1.bf16.msra.mxu0 %v436
    %3051 = vmatprep.subr.bf16.mxu0 %v433
    %3052 = vmatpush1.bf16.msra.mxu0 %v432
    %3053 = vmatprep.subr.bf16.mxu0 0
    %3054 = vmatpush2.bf16.msra.mxu0 0
    %3055 = vmatprep.subr.bf16.mxu0 0
    %3056 = vmatpush2.bf16.msra.mxu0 0
    %3057 = vmatprep.subr.bf16.mxu0 0
    %3058 = vmatpush2.bf16.msra.mxu0 0
    %3059 = vmatprep.subr.bf16.mxu0 0
    %3060 = vmatpush2.bf16.msra.mxu0 0
    %3061 = vmatprep.subr.bf16.mxu0 0
    %3062 = vmatpush2.bf16.msra.mxu0 0
    %3063 = vmatprep.subr.bf16.mxu0 0
    %3064 = vmatpush2.bf16.msra.mxu0 0
    %3065 = vmatprep.subr.bf16.mxu0 0
    %3066 = vmatpush2.bf16.msra.mxu0 0
    %3067 = vmatprep.subr.bf16.mxu0 0
    %3068 = vmatpush2.bf16.msra.mxu0 0
    %3069 = vmatprep.mubr.bf16.mxu0 0
    %3070 = vmatmul.mubr.bf16.gmra.mxu0 %v3036
    %v3071 = vpop.f32.mrf.mxu0
    %v3072 = vadd.f32 %v319, %v3071
    %v3073 = vpop.f32.mrf.mxu0
    %v3074 = vadd.f32 %v323, %v3073
    %v3075 = vpop.f32.mrf.mxu0
    %v3076 = vpop.f32.mrf.mxu0
    %3077 = vdwg.mxu0
    %3078 = vmatprep.subr.bf16.mxu0 %v463
    %3079 = vmatpush1.bf16.msra.mxu0 %v462
    %3080 = vmatprep.subr.bf16.mxu0 %v459
    %3081 = vmatpush1.bf16.msra.mxu0 %v458
    %3082 = vmatprep.subr.bf16.mxu0 %v455
    %3083 = vmatpush1.bf16.msra.mxu0 %v454
    %3084 = vmatprep.subr.bf16.mxu0 %v451
    %3085 = vmatpush1.bf16.msra.mxu0 %v450
    %3086 = vmatprep.subr.bf16.mxu0 %v447
    %3087 = vmatpush1.bf16.msra.mxu0 %v446
    %3088 = vmatprep.subr.bf16.mxu0 %v443
    %3089 = vmatpush1.bf16.msra.mxu0 %v442
    %3090 = vmatprep.subr.bf16.mxu0 %v439
    %3091 = vmatpush1.bf16.msra.mxu0 %v438
    %3092 = vmatprep.subr.bf16.mxu0 %v435
    %3093 = vmatpush1.bf16.msra.mxu0 %v434
    %3094 = vmatprep.subr.bf16.mxu0 0
    %3095 = vmatpush2.bf16.msra.mxu0 0
    %3096 = vmatprep.subr.bf16.mxu0 0
    %3097 = vmatpush2.bf16.msra.mxu0 0
    %3098 = vmatprep.subr.bf16.mxu0 0
    %3099 = vmatpush2.bf16.msra.mxu0 0
    %3100 = vmatprep.subr.bf16.mxu0 0
    %3101 = vmatpush2.bf16.msra.mxu0 0
    %3102 = vmatprep.subr.bf16.mxu0 0
    %3103 = vmatpush2.bf16.msra.mxu0 0
    %3104 = vmatprep.subr.bf16.mxu0 0
    %3105 = vmatpush2.bf16.msra.mxu0 0
    %3106 = vmatprep.subr.bf16.mxu0 0
    %3107 = vmatpush2.bf16.msra.mxu0 0
    %3108 = vmatprep.subr.bf16.mxu0 0
    %3109 = vmatpush2.bf16.msra.mxu0 0
    %3110 = vmatprep.mubr.bf16.mxu0 0
    %3111 = vmatmul.mubr.bf16.gmra.mxu0 %v3036
    %v3112 = vpop.f32.mrf.mxu0
    %v3113 = vadd.f32 %v327, %v3112
    %v3114 = vpop.f32.mrf.mxu0
    %v3115 = vadd.f32 %v331, %v3114
    %v3116 = vpop.f32.mrf.mxu0
    %v3117 = vpop.f32.mrf.mxu0
    %3118 = vdwg.mxu0
    %3119 = vmatprep.subr.bf16.mxu0 %v703
    %3120 = vmatpush1.bf16.msra.mxu0 %v702
    %3121 = vmatprep.subr.bf16.mxu0 %v699
    %3122 = vmatpush1.bf16.msra.mxu0 %v698
    %3123 = vmatprep.subr.bf16.mxu0 %v695
    %3124 = vmatpush1.bf16.msra.mxu0 %v694
    %3125 = vmatprep.subr.bf16.mxu0 %v691
    %3126 = vmatpush1.bf16.msra.mxu0 %v690
    %3127 = vmatprep.subr.bf16.mxu0 %v687
    %3128 = vmatpush1.bf16.msra.mxu0 %v686
    %3129 = vmatprep.subr.bf16.mxu0 %v683
    %3130 = vmatpush1.bf16.msra.mxu0 %v682
    %3131 = vmatprep.subr.bf16.mxu0 %v679
    %3132 = vmatpush1.bf16.msra.mxu0 %v678
    %3133 = vmatprep.subr.bf16.mxu0 %v675
    %3134 = vmatpush1.bf16.msra.mxu0 %v674
    %3135 = vmatprep.subr.bf16.mxu0 0
    %3136 = vmatpush2.bf16.msra.mxu0 0
    %3137 = vmatprep.subr.bf16.mxu0 0
    %3138 = vmatpush2.bf16.msra.mxu0 0
    %3139 = vmatprep.subr.bf16.mxu0 0
    %3140 = vmatpush2.bf16.msra.mxu0 0
    %3141 = vmatprep.subr.bf16.mxu0 0
    %3142 = vmatpush2.bf16.msra.mxu0 0
    %3143 = vmatprep.subr.bf16.mxu0 0
    %3144 = vmatpush2.bf16.msra.mxu0 0
    %3145 = vmatprep.subr.bf16.mxu0 0
    %3146 = vmatpush2.bf16.msra.mxu0 0
    %3147 = vmatprep.subr.bf16.mxu0 0
    %3148 = vmatpush2.bf16.msra.mxu0 0
    %3149 = vmatprep.subr.bf16.mxu0 0
    %3150 = vmatpush2.bf16.msra.mxu0 0
    %3151 = vmatprep.mubr.bf16.mxu0 0
    %3152 = vmatmul.mubr.bf16.gmra.mxu0 %v2924
    %v3153 = vpop.f32.mrf.mxu0
    %v3154 = vadd.f32 0.0, %v3153
    %v3155 = vpop.f32.mrf.mxu0
    %v3156 = vadd.f32 0.0, %v3155
    %v3157 = vpop.f32.mrf.mxu0
    %v3158 = vpop.f32.mrf.mxu0
    %3159 = vdwg.mxu0
    %3160 = vmatprep.subr.bf16.mxu0 %v705
    %3161 = vmatpush1.bf16.msra.mxu0 %v704
    %3162 = vmatprep.subr.bf16.mxu0 %v701
    %3163 = vmatpush1.bf16.msra.mxu0 %v700
    %3164 = vmatprep.subr.bf16.mxu0 %v697
    %3165 = vmatpush1.bf16.msra.mxu0 %v696
    %3166 = vmatprep.subr.bf16.mxu0 %v693
    %3167 = vmatpush1.bf16.msra.mxu0 %v692
    %3168 = vmatprep.subr.bf16.mxu0 %v689
    %3169 = vmatpush1.bf16.msra.mxu0 %v688
    %3170 = vmatprep.subr.bf16.mxu0 %v685
    %3171 = vmatpush1.bf16.msra.mxu0 %v684
    %3172 = vmatprep.subr.bf16.mxu0 %v681
    %3173 = vmatpush1.bf16.msra.mxu0 %v680
    %3174 = vmatprep.subr.bf16.mxu0 %v677
    %3175 = vmatpush1.bf16.msra.mxu0 %v676
    %3176 = vmatprep.subr.bf16.mxu0 0
    %3177 = vmatpush2.bf16.msra.mxu0 0
    %3178 = vmatprep.subr.bf16.mxu0 0
    %3179 = vmatpush2.bf16.msra.mxu0 0
    %3180 = vmatprep.subr.bf16.mxu0 0
    %3181 = vmatpush2.bf16.msra.mxu0 0
    %3182 = vmatprep.subr.bf16.mxu0 0
    %3183 = vmatpush2.bf16.msra.mxu0 0
    %3184 = vmatprep.subr.bf16.mxu0 0
    %3185 = vmatpush2.bf16.msra.mxu0 0
    %3186 = vmatprep.subr.bf16.mxu0 0
    %3187 = vmatpush2.bf16.msra.mxu0 0
    %3188 = vmatprep.subr.bf16.mxu0 0
    %3189 = vmatpush2.bf16.msra.mxu0 0
    %3190 = vmatprep.subr.bf16.mxu0 0
    %3191 = vmatpush2.bf16.msra.mxu0 0
    %3192 = vmatprep.mubr.bf16.mxu0 0
    %3193 = vmatmul.mubr.bf16.gmra.mxu0 %v2924
    %v3194 = vpop.f32.mrf.mxu0
    %v3195 = vadd.f32 0.0, %v3194
    %v3196 = vpop.f32.mrf.mxu0
    %v3197 = vadd.f32 0.0, %v3196
    %v3198 = vpop.f32.mrf.mxu0
    %v3199 = vpop.f32.mrf.mxu0
    %3200 = vdwg.mxu0
    %v3205 = vrot.slane %v3154, 2
    %v3206 = vrot.slane %v3156, 2
    %v3207 = vrot.slane %v3195, 2
    %v3208 = vrot.slane %v3197, 2
    %v3213 = vadd.f32 %v268, %v3205
    %v3214 = vadd.f32 %v270, %v3206
    %v3215 = vadd.f32 %v311, %v3207
    %v3216 = vadd.f32 %v313, %v3208
    %v3217 = vxor.u32 %v3213, 2147483648
    %v3218 = vxor.u32 %v3214, 2147483648
    %v3219 = vxor.u32 %v3215, 2147483648
    %v3220 = vmul.f32 %v3217, 1.442695
    %v3221 = vpow.pop %v3220
    %v3222 = vmul.f32 %v3218, 1.442695
    %v3223 = vpow.pop %v3222
    %v3224 = vmul.f32 %v3219, 1.442695
    %v3225 = vpow.pop %v3224
    %v3226 = vadd.f32 %v3221, 1.0
    %v3227 = vadd.f32 %v3223, 1.0
    %v3228 = vadd.f32 %v3225, 1.0
    %v3229 = vrcp.pop %v3226
    %v3230 = vmul.f32 1.0, %v3229
    %v3231 = vrcp.pop %v3227
    %v3232 = vmul.f32 1.0, %v3231
    %v3233 = vrcp.pop %v3228
    %v3234 = vmul.f32 1.0, %v3233
    %v3235 = vtanh.pop %v3216
    %v3237 = vrot.slane %v2919, 6
    %v3239 = vmul.f32 %v3232, %v3237
    %v3240 = vmul.f32 %v3230, %v3235
    %v3241 = vadd.f32 %v3239, %v3240
    %v3242 = vtanh.pop %v3241
    %v3243 = vmul.f32 %v3234, %v3242
    %v3244 = vpack.c.bf16 %v3243, %v3243
    %v3246 = vrot.slane %v3244, 3
    %3248 = vmatprep.subr.bf16.mxu0 %v974
    %3249 = vmatpush1.bf16.msra.mxu0 %v973
    %3250 = vmatprep.subr.bf16.mxu0 %v970
    %3251 = vmatpush1.bf16.msra.mxu0 %v969
    %3252 = vmatprep.subr.bf16.mxu0 %v966
    %3253 = vmatpush1.bf16.msra.mxu0 %v965
    %3254 = vmatprep.subr.bf16.mxu0 %v962
    %3255 = vmatpush1.bf16.msra.mxu0 %v961
    %3256 = vmatprep.subr.bf16.mxu0 %v958
    %3257 = vmatpush1.bf16.msra.mxu0 %v957
    %3258 = vmatprep.subr.bf16.mxu0 %v954
    %3259 = vmatpush1.bf16.msra.mxu0 %v953
    %3260 = vmatprep.subr.bf16.mxu0 %v950
    %3261 = vmatpush1.bf16.msra.mxu0 %v949
    %3262 = vmatprep.subr.bf16.mxu0 %v946
    %3263 = vmatpush1.bf16.msra.mxu0 %v945
    %3264 = vmatprep.subr.bf16.mxu0 0
    %3265 = vmatpush2.bf16.msra.mxu0 0
    %3266 = vmatprep.subr.bf16.mxu0 0
    %3267 = vmatpush2.bf16.msra.mxu0 0
    %3268 = vmatprep.subr.bf16.mxu0 0
    %3269 = vmatpush2.bf16.msra.mxu0 0
    %3270 = vmatprep.subr.bf16.mxu0 0
    %3271 = vmatpush2.bf16.msra.mxu0 0
    %3272 = vmatprep.subr.bf16.mxu0 0
    %3273 = vmatpush2.bf16.msra.mxu0 0
    %3274 = vmatprep.subr.bf16.mxu0 0
    %3275 = vmatpush2.bf16.msra.mxu0 0
    %3276 = vmatprep.subr.bf16.mxu0 0
    %3277 = vmatpush2.bf16.msra.mxu0 0
    %3278 = vmatprep.subr.bf16.mxu0 0
    %3279 = vmatpush2.bf16.msra.mxu0 0
    %3280 = vmatprep.mubr.bf16.mxu0 0
    %3281 = vmatmul.mubr.bf16.gmra.mxu0 %v3246
    %v3282 = vpop.f32.mrf.mxu0
    %v3283 = vadd.f32 0.0, %v3282
    %v3284 = vpop.f32.mrf.mxu0
    %v3285 = vadd.f32 0.0, %v3284
    %v3286 = vpop.f32.mrf.mxu0
    %v3287 = vpop.f32.mrf.mxu0
    %3288 = vdwg.mxu0
    %3289 = vmatprep.subr.bf16.mxu0 %v976
    %3290 = vmatpush1.bf16.msra.mxu0 %v975
    %3291 = vmatprep.subr.bf16.mxu0 %v972
    %3292 = vmatpush1.bf16.msra.mxu0 %v971
    %3293 = vmatprep.subr.bf16.mxu0 %v968
    %3294 = vmatpush1.bf16.msra.mxu0 %v967
    %3295 = vmatprep.subr.bf16.mxu0 %v964
    %3296 = vmatpush1.bf16.msra.mxu0 %v963
    %3297 = vmatprep.subr.bf16.mxu0 %v960
    %3298 = vmatpush1.bf16.msra.mxu0 %v959
    %3299 = vmatprep.subr.bf16.mxu0 %v956
    %3300 = vmatpush1.bf16.msra.mxu0 %v955
    %3301 = vmatprep.subr.bf16.mxu0 %v952
    %3302 = vmatpush1.bf16.msra.mxu0 %v951
    %3303 = vmatprep.subr.bf16.mxu0 %v948
    %3304 = vmatpush1.bf16.msra.mxu0 %v947
    %3305 = vmatprep.subr.bf16.mxu0 0
    %3306 = vmatpush2.bf16.msra.mxu0 0
    %3307 = vmatprep.subr.bf16.mxu0 0
    %3308 = vmatpush2.bf16.msra.mxu0 0
    %3309 = vmatprep.subr.bf16.mxu0 0
    %3310 = vmatpush2.bf16.msra.mxu0 0
    %3311 = vmatprep.subr.bf16.mxu0 0
    %3312 = vmatpush2.bf16.msra.mxu0 0
    %3313 = vmatprep.subr.bf16.mxu0 0
    %3314 = vmatpush2.bf16.msra.mxu0 0
    %3315 = vmatprep.subr.bf16.mxu0 0
    %3316 = vmatpush2.bf16.msra.mxu0 0
    %3317 = vmatprep.subr.bf16.mxu0 0
    %3318 = vmatpush2.bf16.msra.mxu0 0
    %3319 = vmatprep.subr.bf16.mxu0 0
    %3320 = vmatpush2.bf16.msra.mxu0 0
    %3321 = vmatprep.mubr.bf16.mxu0 0
    %3322 = vmatmul.mubr.bf16.gmra.mxu0 %v3246
    %v3323 = vpop.f32.mrf.mxu0
    %v3324 = vadd.f32 0.0, %v3323
    %v3325 = vpop.f32.mrf.mxu0
    %v3326 = vadd.f32 0.0, %v3325
    %v3327 = vpop.f32.mrf.mxu0
    %v3328 = vpop.f32.mrf.mxu0
    %3329 = vdwg.mxu0
    %v3330 = vadd.f32 %v3072, %v3283
    %v3331 = vadd.f32 %v3074, %v3285
    %v3332 = vadd.f32 %v3113, %v3324
    %v3333 = vadd.f32 %v3115, %v3326
    %v3334 = vxor.u32 %v3330, 2147483648
    %v3335 = vxor.u32 %v3331, 2147483648
    %v3336 = vxor.u32 %v3332, 2147483648
    %v3337 = vmul.f32 %v3334, 1.442695
    %v3338 = vpow.pop %v3337
    %v3339 = vmul.f32 %v3335, 1.442695
    %v3340 = vpow.pop %v3339
    %v3341 = vmul.f32 %v3336, 1.442695
    %v3342 = vpow.pop %v3341
    %v3343 = vadd.f32 %v3338, 1.0
    %v3344 = vadd.f32 %v3340, 1.0
    %v3345 = vadd.f32 %v3342, 1.0
    %v3346 = vrcp.pop %v3343
    %v3347 = vmul.f32 1.0, %v3346
    %v3348 = vrcp.pop %v3344
    %v3349 = vmul.f32 1.0, %v3348
    %v3350 = vrcp.pop %v3345
    %v3351 = vmul.f32 1.0, %v3350
    %v3352 = vtanh.pop %v3333
    %v3353 = vmul.f32 %v3349, %v3033
    %v3354 = vmul.f32 %v3347, %v3352
    %v3355 = vadd.f32 %v3353, %v3354
    %v3356 = vtanh.pop %v3355
    %v3357 = vmul.f32 %v3351, %v3356
    %v3358 = vpack.c.bf16 %v3357, %v3357
    %v3359 = vld [vmem:[%s7] sm:$0xf]
    %v3360 = vld [vmem:[%s7 + $0x4] sm:$0xf]
    %v3361 = vld [vmem:[%s7 + $0x8] sm:$0xf]
    %v3362 = vld [vmem:[%s7 + $0xc] sm:$0xf]
    %v3363 = vld [vmem:[%s7 + $0x10] sm:$0xf]
    %v3364 = vld [vmem:[%s7 + $0x14] sm:$0xf]
    %v3365 = vld [vmem:[%s7 + $0x18] sm:$0xf]
    %v3366 = vld [vmem:[%s7 + $0x1c] sm:$0xf]
    %v3367 = vld [vmem:[%s7 + $0x20] sm:$0xf]
    %v3368 = vld [vmem:[%s7 + $0x24] sm:$0xf]
    %v3369 = vld [vmem:[%s7 + $0x28] sm:$0xf]
    %v3370 = vld [vmem:[%s7 + $0x2c] sm:$0xf]
    %v3371 = vld [vmem:[%s7 + $0x30] sm:$0xf]
    %v3372 = vld [vmem:[%s7 + $0x34] sm:$0xf]
    %v3373 = vld [vmem:[%s7 + $0x38] sm:$0xf]
    %v3374 = vld [vmem:[%s7 + $0x3c] sm:$0xf]
    %v3375 = vld [vmem:[%s8] sm:$0x1]
    %v3377 = vlaneseq
    %v3378 = vshrl.u32 %v3377, 7
    %v3379 = vsub.s32 0, %v3378
    %v3380 = vrot.slane %v3375, %v3379
    %v3398 = vunpack.c.l.b16 %v3359
    %v3399 = vunpack.c.l.b16 %v3360
    %v3400 = vunpack.c.l.b16 %v3361
    %v3401 = vunpack.c.l.b16 %v3362
    %v3402 = vunpack.c.l.b16 %v3363
    %v3403 = vunpack.c.l.b16 %v3364
    %v3404 = vunpack.c.l.b16 %v3365
    %v3405 = vunpack.c.l.b16 %v3366
    %v3406 = vunpack.c.l.b16 %v3367
    %v3407 = vunpack.c.l.b16 %v3368
    %v3408 = vunpack.c.l.b16 %v3369
    %v3409 = vunpack.c.l.b16 %v3370
    %v3410 = vunpack.c.l.b16 %v3371
    %v3411 = vunpack.c.l.b16 %v3372
    %v3412 = vunpack.c.l.b16 %v3373
    %v3413 = vunpack.c.l.b16 %v3374
    %v3414 = vpack.c.b16 %v3399, %v3398
    %v3415 = vpack.c.b16 %v3401, %v3400
    %v3416 = vpack.c.b16 %v3403, %v3402
    %v3417 = vpack.c.b16 %v3405, %v3404
    %v3418 = vpack.c.b16 %v3407, %v3406
    %v3419 = vpack.c.b16 %v3409, %v3408
    %v3420 = vpack.c.b16 %v3411, %v3410
    %v3421 = vpack.c.b16 %v3413, %v3412
    %3430 = vmatprep.subr.bf16.mxu0 0
    %3431 = vmatpush1.bf16.msra.mxu0 %v3421
    %3432 = vmatprep.subr.bf16.mxu0 0
    %3433 = vmatpush1.bf16.msra.mxu0 %v3420
    %3434 = vmatprep.subr.bf16.mxu0 0
    %3435 = vmatpush1.bf16.msra.mxu0 %v3419
    %3436 = vmatprep.subr.bf16.mxu0 0
    %3437 = vmatpush1.bf16.msra.mxu0 %v3418
    %3438 = vmatprep.subr.bf16.mxu0 0
    %3439 = vmatpush1.bf16.msra.mxu0 %v3417
    %3440 = vmatprep.subr.bf16.mxu0 0
    %3441 = vmatpush1.bf16.msra.mxu0 %v3416
    %3442 = vmatprep.subr.bf16.mxu0 0
    %3443 = vmatpush1.bf16.msra.mxu0 %v3415
    %3444 = vmatprep.subr.bf16.mxu0 0
    %3445 = vmatpush1.bf16.msra.mxu0 %v3414
    %3446 = vmatprep.subr.bf16.mxu0 0
    %3447 = vmatpush2.bf16.msra.mxu0 0
    %3448 = vmatprep.subr.bf16.mxu0 0
    %3449 = vmatpush2.bf16.msra.mxu0 0
    %3450 = vmatprep.subr.bf16.mxu0 0
    %3451 = vmatpush2.bf16.msra.mxu0 0
    %3452 = vmatprep.subr.bf16.mxu0 0
    %3453 = vmatpush2.bf16.msra.mxu0 0
    %3454 = vmatprep.subr.bf16.mxu0 0
    %3455 = vmatpush2.bf16.msra.mxu0 0
    %3456 = vmatprep.subr.bf16.mxu0 0
    %3457 = vmatpush2.bf16.msra.mxu0 0
    %3458 = vmatprep.subr.bf16.mxu0 0
    %3459 = vmatpush2.bf16.msra.mxu0 0
    %3460 = vmatprep.subr.bf16.mxu0 0
    %3461 = vmatpush2.bf16.msra.mxu0 0
    %3462 = vmatprep.mubr.bf16.mxu0 0
    %3463 = vmatmul.mubr.bf16.gmra.mxu0 %v3358
    %v3464 = vpop.f32.mrf.mxu0
    %v3465 = vadd.f32 %v3380, %v3464
    %v3466 = vpop.f32.mrf.mxu0
    %v3467 = vpop.f32.mrf.mxu0
    %v3468 = vpop.f32.mrf.mxu0
    %3469 = vdwg.mxu0
    %vm3470 = vcmask 33792
    %3471 = vst.msk [vmem:[#allocation8] sm:$0x3] %vm3470, %v3465
    // Predicated region
    $region50: #{apt_lstm_forward.1} parent=1 // pred_check
      _
    $region51: #{apt_lstm_forward.1} parent=1 // pred_check_branch
      %3473 = sbr.rel (0) target = $region53
    $region52: #{apt_lstm_forward.1} parent=1 // pred_region
      %s3475 = ssub.s32 32, 32
      %3476 = vsyncadd [#allocation4], %s3475
      %s3478 = sshll.u32 [#allocation8], 4
      %s3479 = int_to_ptr.vmem [resolvable:$true] %s3478
      %3481 = dma.vmem_to_hbm [thread:$0]  %s3479, 32, %s9, [#allocation4]
    $region53: #{apt_lstm_forward.1} parent=1 // pred_fallthru
      _
    // Predicated region
    $region54: #{apt_lstm_forward.1} parent=1 // pred_check
      _
    $region55: #{apt_lstm_forward.1} parent=1 // pred_check_branch
      %3483 = sbr.rel (0) target = $region57
    $region56: #{apt_lstm_forward.1} parent=1 // pred_region
      %3484 = dma.done [#allocation4], 32
    $region57: #{apt_lstm_forward.1} parent=1 // pred_fallthru
      _
    %3485 = vsyncpa [#allocation3], 1
    %3486 = vsyncpa [#allocation6], 1
    %3487 = vsyncpa [#allocation4], 1

</llo_original>
